<compile_context>
chip_gen: v7x
topology: tpu7x:2x2x1
jax: 0.10.0
libtpu: 0.0.40
codegen_flags: <defaults>
</compile_context>

<pallas_src>
import jax
import jax.numpy as jnp
from jax.experimental import pallas as pl
from jax.experimental.pallas import tpu as pltpu

VOCAB = 2000
EMB = 32
SEQ = 50            # required so Flatten yields 448 features (BatchNorm1d(448))
K = 3
C1 = 256
L1 = SEQ - (K - 1)  # 48   after first conv
LP = L1 // 3        # 16   after maxpool(3,3)
C2 = 32
L2 = LP - (K - 1)   # 14   after second conv
FLAT = C2 * L2      # 448
H1 = 256
NCLS = 10
NPAD = 128          # lane-padded logits width
KIN = 128           # im2col contraction, zero-padded from K*EMB=96
TB = 8              # samples per grid step (multiple of 8 -> sublane aligned)


def zhaopin_kernel(e_ref, w1_ref, b1_ref, w2_ref, b2_ref,
                   w3_ref, b3_ref, w4_ref, b4_ref, out_ref):
    """One batch tile (TB samples) per grid step. e_ref rows are ordered
    (pool_offset r, pool_window j, batch b) so all slices below are static and
    sublane-contiguous; all matmuls are 2-D bf16 with f32 accumulation."""
    tb = out_ref.shape[0]

    # ---- Conv1d(32->256, k=3) as ONE im2col matmul (K padded to 128) --------
    p = jnp.dot(e_ref[...], w1_ref[...],
                preferred_element_type=jnp.float32)            # (48*TB, 256)

    # ---- MaxPool1d(3,3) + bias + ReLU (per-channel bias & ReLU commute) -----
    pool = jnp.maximum(jnp.maximum(p[0:LP * tb],
                                   p[LP * tb:2 * LP * tb]),
                       p[2 * LP * tb:3 * LP * tb])             # (16*TB, 256)
    pool = jnp.maximum(pool + b1_ref[...], 0.0)
    pool_bf = pool.astype(jnp.bfloat16)                        # one hoisted cast

    # ---- Conv1d(256->32, k=3) + ReLU: 3 accumulated (14*TB,256)@(256,32) ----
    acc2 = jnp.dot(pool_bf[0:L2 * tb], w2_ref[0],
                   preferred_element_type=jnp.float32)
    for k in range(1, K):
        acc2 = acc2 + jnp.dot(pool_bf[k * tb:(k + L2) * tb], w2_ref[k],
                              preferred_element_type=jnp.float32)
    z = jnp.maximum(acc2 + b2_ref[...], 0.0)                   # (14*TB, 32)
    z_bf = z.astype(jnp.bfloat16)

    # TODO(synk): eval-mode semantics only — Dropout(0.3)/Dropout(0.2) are
    # identity and BatchNorm1d uses running stats (folded into w3/b3 in glue).

    # ---- Linear(448->256) with folded BatchNorm: 14 accumulated matmuls -----
    acc3 = jnp.dot(z_bf[0:tb], w3_ref[0], preferred_element_type=jnp.float32)
    for l in range(1, L2):
        acc3 = acc3 + jnp.dot(z_bf[l * tb:(l + 1) * tb], w3_ref[l],
                              preferred_element_type=jnp.float32)
    h = acc3 + b3_ref[...]                                     # (TB, 256)

    # ---- Linear(256->10) padded to 128 lanes + Softmax(dim=1) ---------------
    logits = jnp.dot(h.astype(jnp.bfloat16), w4_ref[...],
                     preferred_element_type=jnp.float32) + b4_ref[...]  # (TB,128)
    m = jnp.max(logits, axis=-1, keepdims=True)
    e = jnp.exp(logits - m)                 # pad lanes have bias -1e30 -> exp==0
    out_ref[...] = e / jnp.sum(e, axis=-1, keepdims=True)


def zhaopin_forward(x_ids, params, tb=TB):
    (emb_table, w1c, b1, w2, b2, w3, b3, w4, b4) = params
    B, S = x_ids.shape
    assert S == SEQ
    assert tb % 8 == 0

    b_pad = ((B + tb - 1) // tb) * tb
    x = x_ids if b_pad == B else jnp.pad(x_ids, ((0, b_pad - B), (0, 0)))

    # Embedding gather + im2col stays in plain-JAX glue (data-dependent gather).
    # Row layout already does conv1's im2col AND groups rows by maxpool offset;
    # batch is placed innermost so every kernel slice is sublane-contiguous.
    r = jnp.arange(3)[:, None, None]                  # pool offset      (3,1,1)
    j = jnp.arange(LP)[None, :, None]                 # pool window      (1,16,1)
    k = jnp.arange(K)[None, None, :]                  # conv tap         (1,1,3)
    pos = (3 * j + r + k).reshape(3 * LP, K)          # (48, 3) token positions
    tok = x[:, pos]                                   # (b_pad, 48, 3)
    e = jnp.take(emb_table, tok, axis=0).reshape(b_pad, 3 * LP, K * EMB)
    e = jnp.pad(e, ((0, 0), (0, 0), (0, KIN - K * EMB)))      # (b_pad, 48, 128)
    g = b_pad // tb
    e_all = (e.reshape(g, tb, 3 * LP, KIN)
              .transpose(0, 2, 1, 3)
              .reshape(g, 3 * LP * tb, KIN))          # rows ordered (r, j, b)

    out_pad = pl.pallas_call(
        zhaopin_kernel,
        out_shape=jax.ShapeDtypeStruct((b_pad, NPAD), jnp.float32),
        grid=(g,),
        in_specs=[
            pl.BlockSpec((None, 3 * LP * tb, KIN), lambda i: (i, 0, 0)),
            pl.BlockSpec((KIN, C1), lambda i: (0, 0)),
            pl.BlockSpec((1, C1), lambda i: (0, 0)),
            pl.BlockSpec((K, C1, C2), lambda i: (0, 0, 0)),
            pl.BlockSpec((1, C2), lambda i: (0, 0)),
            pl.BlockSpec((L2, C2, H1), lambda i: (0, 0, 0)),
            pl.BlockSpec((1, H1), lambda i: (0, 0)),
            pl.BlockSpec((H1, NPAD), lambda i: (0, 0)),
            pl.BlockSpec((1, NPAD), lambda i: (0, 0)),
        ],
        out_specs=pl.BlockSpec((tb, NPAD), lambda i: (i, 0)),
        compiler_params=pltpu.CompilerParams(
            dimension_semantics=("parallel",)),
    )(e_all, w1c, b1, w2, b2, w3, b3, w4, b4)
    return out_pad[:B, :NCLS]


def init_params(key):
    """Returns (kernel_params, torch_format_params)."""
    ks = jax.random.split(key, 8)
    bf16 = jnp.bfloat16

    emb_table = jax.random.normal(ks[0], (VOCAB, EMB), jnp.float32) * 0.1

    # Conv1d(32, 256, 3): torch weight (C1, EMB, K)
    w1_t = jax.random.normal(ks[1], (C1, EMB, K), jnp.float32) / jnp.sqrt(EMB * K)
    b1_t = jax.random.normal(ks[2], (C1,), jnp.float32) * 0.01
    # im2col layout: row = k*EMB + c_in  -> (96,256), zero-padded to (128,256)
    w1c = jnp.transpose(w1_t, (2, 1, 0)).reshape(K * EMB, C1)
    w1c = jnp.pad(w1c, ((0, KIN - K * EMB), (0, 0)))
    b1 = b1_t.reshape(1, C1)

    # Conv1d(256, 32, 3): torch weight (C2, C1, K) -> (K, C1, C2)
    w2_t = jax.random.normal(ks[3], (C2, C1, K), jnp.float32) / jnp.sqrt(C1 * K)
    b2_t = jax.random.normal(ks[4], (C2,), jnp.float32) * 0.01
    w2 = jnp.transpose(w2_t, (2, 1, 0))
    b2 = b2_t.reshape(1, C2)

    # BatchNorm1d(448), eval mode, default init (gamma=1, beta=0, mean=0, var=1).
    gamma = jnp.ones((FLAT,), jnp.float32)
    beta = jnp.zeros((FLAT,), jnp.float32)
    rmean = jnp.zeros((FLAT,), jnp.float32)
    rvar = jnp.ones((FLAT,), jnp.float32)
    scale_t = gamma / jnp.sqrt(rvar + 1e-5)          # torch feature order (c, l)
    shift_t = beta - rmean * scale_t
    scale_lc = scale_t.reshape(C2, L2).T             # (14, 32) kernel (l, c) order
    shift_lc = shift_t.reshape(C2, L2).T

    # Linear(448, 256): torch weight (H1, 448) with 448 ordered (c, l);
    # reorder to (L2, C2, H1) for accumulated per-position matmuls, fold BN.
    w3_t = jax.random.normal(ks[5], (H1, FLAT), jnp.float32) / jnp.sqrt(FLAT)
    b3_t = jax.random.normal(ks[6], (H1,), jnp.float32) * 0.01
    w3_lc = jnp.transpose(w3_t.reshape(H1, C2, L2), (2, 1, 0))   # (14, 32, 256)
    w3 = scale_lc[:, :, None] * w3_lc                            # BN scale folded
    b3 = (b3_t + jnp.einsum('lc,lch->h', shift_lc, w3_lc)).reshape(1, H1)

    # Linear(256, 10) padded to 128 output lanes; pad biases -1e30 (kept f32)
    # so padded lanes vanish exactly in the softmax.
    w4_t = jax.random.normal(ks[7], (NCLS, H1), jnp.float32) / jnp.sqrt(H1)
    b4_t = jnp.zeros((NCLS,), jnp.float32)
    w4 = jnp.zeros((H1, NPAD), jnp.float32).at[:, :NCLS].set(w4_t.T)
    b4 = jnp.full((1, NPAD), -1e30, jnp.float32).at[0, :NCLS].set(b4_t)

    kernel_params = (emb_table.astype(bf16), w1c.astype(bf16), b1,
                     w2.astype(bf16), b2, w3.astype(bf16), b3,
                     w4.astype(bf16), b4)
    torch_params = dict(emb=emb_table, w1=w1_t, b1=b1_t, w2=w2_t, b2=b2_t,
                        gamma=gamma, beta=beta, rmean=rmean, rvar=rvar,
                        w3=w3_t, b3=b3_t, w4=w4_t, b4=b4_t)
    return kernel_params, torch_params


def _conv1d_ref(x, w, b):  # x (B,Cin,L), w (Cout,Cin,K), b (Cout,)
    kk = w.shape[-1]
    lout = x.shape[-1] - kk + 1
    out = jnp.zeros((x.shape[0], w.shape[0], lout), jnp.float32)
    for k in range(kk):
        out = out + jnp.einsum('bcl,oc->bol', x[:, :, k:k + lout], w[:, :, k])
    return out + b[None, :, None]


def reference_forward(x_ids, tp):
    """Pure-JAX f32 re-implementation of the PyTorch forward (eval mode)."""
    emb = tp['emb'].astype(jnp.bfloat16).astype(jnp.float32)  # match kernel table
    out = jnp.take(emb, x_ids, axis=0)                         # (B, 50, 32)
    out = jnp.transpose(out, (0, 2, 1))                        # (B, 32, 50)
    out = jnp.maximum(_conv1d_ref(out, tp['w1'], tp['b1']), 0.0)   # (B,256,48)
    out = out.reshape(out.shape[0], C1, LP, 3).max(axis=-1)        # (B,256,16)
    out = jnp.maximum(_conv1d_ref(out, tp['w2'], tp['b2']), 0.0)   # (B,32,14)
    out = out.reshape(out.shape[0], FLAT)                          # channel-major
    out = (out - tp['rmean']) / jnp.sqrt(tp['rvar'] + 1e-5) * tp['gamma'] + tp['beta']
    out = out @ tp['w3'].T + tp['b3']
    out = out @ tp['w4'].T + tp['b4']
    return jax.nn.softmax(out, axis=-1)


if __name__ == "__main__":
    key = jax.random.PRNGKey(0)
    pkey, xkey = jax.random.split(key)
    params, torch_params = init_params(pkey)

    B = 16   # with TB=8 -> grid of 2 parallel steps (keeps both v7x TCs busy)
    x = jax.random.randint(xkey, (B, SEQ), 0, VOCAB, dtype=jnp.int32)

    out = jax.block_until_ready(jax.jit(zhaopin_forward)(x, params))

    assert out.shape == (B, NCLS), out.shape
    row_sums = jnp.sum(out, axis=-1)
    assert bool(jnp.all(jnp.abs(row_sums - 1.0) < 1e-4)), row_sums
    assert bool(jnp.all(jnp.isfinite(out)))

    ref = reference_forward(x, torch_params)
    err = float(jnp.max(jnp.abs(out - ref)))
    assert err < 2e-2, err   # bf16 matmul operands vs f32 reference

    print("KERNEL_OK")
</pallas_src>

<mosaic_0001>
module attributes {stable_mosaic.version = 11 : i64} {
  func.func @zhaopin_kernel(%arg0: i32, %arg1: memref<1x384x128xbf16, #tpu.memory_space<vmem>>, %arg2: memref<128x256xbf16, #tpu.memory_space<vmem>>, %arg3: memref<1x256xf32, #tpu.memory_space<vmem>>, %arg4: memref<3x256x32xbf16, #tpu.memory_space<vmem>>, %arg5: memref<1x32xf32, #tpu.memory_space<vmem>>, %arg6: memref<14x32x256xbf16, #tpu.memory_space<vmem>>, %arg7: memref<1x256xf32, #tpu.memory_space<vmem>>, %arg8: memref<256x128xbf16, #tpu.memory_space<vmem>>, %arg9: memref<1x128xf32, #tpu.memory_space<vmem>>, %arg10: memref<8x128xf32, #tpu.memory_space<vmem>>) attributes {dimension_semantics = [#tpu.dimension_semantics<parallel>], iteration_bounds = array<i64: 2>, scalar_prefetch = 0 : i64, scratch_operands = 0 : i64, tpu.core_type = #tpu.core_type<tc>, window_params = [{transform_indices = @transform_0, window_bounds = array<i64: 1, 384, 128>}, {pipeline_mode = #tpu.pipeline_mode<synchronous>, transform_indices = @transform_1, window_bounds = array<i64: 128, 256>}, {pipeline_mode = #tpu.pipeline_mode<synchronous>, transform_indices = @transform_2, window_bounds = array<i64: 1, 256>}, {pipeline_mode = #tpu.pipeline_mode<synchronous>, transform_indices = @transform_3, window_bounds = array<i64: 3, 256, 32>}, {pipeline_mode = #tpu.pipeline_mode<synchronous>, transform_indices = @transform_4, window_bounds = array<i64: 1, 32>}, {pipeline_mode = #tpu.pipeline_mode<synchronous>, transform_indices = @transform_5, window_bounds = array<i64: 14, 32, 256>}, {pipeline_mode = #tpu.pipeline_mode<synchronous>, transform_indices = @transform_6, window_bounds = array<i64: 1, 256>}, {pipeline_mode = #tpu.pipeline_mode<synchronous>, transform_indices = @transform_7, window_bounds = array<i64: 256, 128>}, {pipeline_mode = #tpu.pipeline_mode<synchronous>, transform_indices = @transform_8, window_bounds = array<i64: 1, 128>}, {transform_indices = @transform_9, window_bounds = array<i64: 8, 128>}]} {
    %c0 = arith.constant 0 : index
    %c0_0 = arith.constant 0 : index
    %c0_1 = arith.constant 0 : index
    %0 = vector.load %arg1[%c0, %c0_0, %c0_1] : memref<1x384x128xbf16, #tpu.memory_space<vmem>>, vector<1x384x128xbf16>
    %1 = vector.shape_cast %0 : vector<1x384x128xbf16> to vector<384x128xbf16>
    %c0_2 = arith.constant 0 : index
    %c0_3 = arith.constant 0 : index
    %2 = vector.load %arg2[%c0_2, %c0_3] : memref<128x256xbf16, #tpu.memory_space<vmem>>, vector<128x256xbf16>
    %cst = arith.constant dense<0.000000e+00> : vector<384x256xf32>
    %3 = tpu.matmul %1, %2, %cst {dimension_numbers = #tpu.dot_dimension_numbers<[1], [0], [0], [1], [0, 0, 1, 1], [], []>} : vector<384x128xbf16>, vector<128x256xbf16>, vector<384x256xf32> -> vector<384x256xf32>
    %4 = vector.extract_strided_slice %3 {offsets = [0, 0], sizes = [128, 256], strides = [1, 1]} : vector<384x256xf32> to vector<128x256xf32>
    %5 = vector.extract_strided_slice %3 {offsets = [128, 0], sizes = [128, 256], strides = [1, 1]} : vector<384x256xf32> to vector<128x256xf32>
    %6 = arith.maximumf %4, %5 : vector<128x256xf32>
    %7 = vector.extract_strided_slice %3 {offsets = [256, 0], sizes = [128, 256], strides = [1, 1]} : vector<384x256xf32> to vector<128x256xf32>
    %8 = arith.maximumf %6, %7 : vector<128x256xf32>
    %c0_4 = arith.constant 0 : index
    %c0_5 = arith.constant 0 : index
    %9 = vector.load %arg3[%c0_4, %c0_5] : memref<1x256xf32, #tpu.memory_space<vmem>>, vector<1x256xf32>
    %10 = vector.broadcast %9 : vector<1x256xf32> to vector<128x256xf32>
    %11 = arith.addf %8, %10 : vector<128x256xf32>
    %cst_6 = arith.constant 0.000000e+00 : f32
    %12 = vector.broadcast %cst_6 : f32 to vector<128x256xf32>
    %13 = arith.maximumf %11, %12 : vector<128x256xf32>
    %14 = arith.truncf %13 : vector<128x256xf32> to vector<128x256xbf16>
    %15 = vector.extract_strided_slice %14 {offsets = [0, 0], sizes = [112, 256], strides = [1, 1]} : vector<128x256xbf16> to vector<112x256xbf16>
    %c0_7 = arith.constant 0 : index
    %c0_8 = arith.constant 0 : index
    %c0_9 = arith.constant 0 : index
    %16 = vector.load %arg4[%c0_7, %c0_8, %c0_9] : memref<3x256x32xbf16, #tpu.memory_space<vmem>>, vector<1x256x32xbf16>
    %17 = vector.shape_cast %16 : vector<1x256x32xbf16> to vector<256x32xbf16>
    %cst_10 = arith.constant dense<0.000000e+00> : vector<112x32xf32>
    %18 = tpu.matmul %15, %17, %cst_10 {dimension_numbers = #tpu.dot_dimension_numbers<[1], [0], [0], [1], [0, 0, 1, 1], [], []>} : vector<112x256xbf16>, vector<256x32xbf16>, vector<112x32xf32> -> vector<112x32xf32>
    %19 = vector.extract_strided_slice %14 {offsets = [8, 0], sizes = [112, 256], strides = [1, 1]} : vector<128x256xbf16> to vector<112x256xbf16>
    %c1 = arith.constant 1 : index
    %c0_11 = arith.constant 0 : index
    %c0_12 = arith.constant 0 : index
    %20 = vector.load %arg4[%c1, %c0_11, %c0_12] : memref<3x256x32xbf16, #tpu.memory_space<vmem>>, vector<1x256x32xbf16>
    %21 = vector.shape_cast %20 : vector<1x256x32xbf16> to vector<256x32xbf16>
    %cst_13 = arith.constant dense<0.000000e+00> : vector<112x32xf32>
    %22 = tpu.matmul %19, %21, %cst_13 {dimension_numbers = #tpu.dot_dimension_numbers<[1], [0], [0], [1], [0, 0, 1, 1], [], []>} : vector<112x256xbf16>, vector<256x32xbf16>, vector<112x32xf32> -> vector<112x32xf32>
    %23 = arith.addf %18, %22 : vector<112x32xf32>
    %24 = vector.extract_strided_slice %14 {offsets = [16, 0], sizes = [112, 256], strides = [1, 1]} : vector<128x256xbf16> to vector<112x256xbf16>
    %c2 = arith.constant 2 : index
    %c0_14 = arith.constant 0 : index
    %c0_15 = arith.constant 0 : index
    %25 = vector.load %arg4[%c2, %c0_14, %c0_15] : memref<3x256x32xbf16, #tpu.memory_space<vmem>>, vector<1x256x32xbf16>
    %26 = vector.shape_cast %25 : vector<1x256x32xbf16> to vector<256x32xbf16>
    %cst_16 = arith.constant dense<0.000000e+00> : vector<112x32xf32>
    %27 = tpu.matmul %24, %26, %cst_16 {dimension_numbers = #tpu.dot_dimension_numbers<[1], [0], [0], [1], [0, 0, 1, 1], [], []>} : vector<112x256xbf16>, vector<256x32xbf16>, vector<112x32xf32> -> vector<112x32xf32>
    %28 = arith.addf %23, %27 : vector<112x32xf32>
    %c0_17 = arith.constant 0 : index
    %c0_18 = arith.constant 0 : index
    %29 = vector.load %arg5[%c0_17, %c0_18] : memref<1x32xf32, #tpu.memory_space<vmem>>, vector<1x32xf32>
    %30 = vector.broadcast %29 : vector<1x32xf32> to vector<112x32xf32>
    %31 = arith.addf %28, %30 : vector<112x32xf32>
    %cst_19 = arith.constant 0.000000e+00 : f32
    %32 = vector.broadcast %cst_19 : f32 to vector<112x32xf32>
    %33 = arith.maximumf %31, %32 : vector<112x32xf32>
    %34 = arith.truncf %33 : vector<112x32xf32> to vector<112x32xbf16>
    %35 = vector.extract_strided_slice %34 {offsets = [0, 0], sizes = [8, 32], strides = [1, 1]} : vector<112x32xbf16> to vector<8x32xbf16>
    %c0_20 = arith.constant 0 : index
    %c0_21 = arith.constant 0 : index
    %c0_22 = arith.constant 0 : index
    %36 = vector.load %arg6[%c0_20, %c0_21, %c0_22] : memref<14x32x256xbf16, #tpu.memory_space<vmem>>, vector<1x32x256xbf16>
    %37 = vector.shape_cast %36 : vector<1x32x256xbf16> to vector<32x256xbf16>
    %cst_23 = arith.constant dense<0.000000e+00> : vector<8x256xf32>
    %38 = tpu.matmul %35, %37, %cst_23 {dimension_numbers = #tpu.dot_dimension_numbers<[1], [0], [0], [1], [0, 0, 1, 1], [], []>} : vector<8x32xbf16>, vector<32x256xbf16>, vector<8x256xf32> -> vector<8x256xf32>
    %39 = vector.extract_strided_slice %34 {offsets = [8, 0], sizes = [8, 32], strides = [1, 1]} : vector<112x32xbf16> to vector<8x32xbf16>
    %c1_24 = arith.constant 1 : index
    %c0_25 = arith.constant 0 : index
    %c0_26 = arith.constant 0 : index
    %40 = vector.load %arg6[%c1_24, %c0_25, %c0_26] : memref<14x32x256xbf16, #tpu.memory_space<vmem>>, vector<1x32x256xbf16>
    %41 = vector.shape_cast %40 : vector<1x32x256xbf16> to vector<32x256xbf16>
    %cst_27 = arith.constant dense<0.000000e+00> : vector<8x256xf32>
    %42 = tpu.matmul %39, %41, %cst_27 {dimension_numbers = #tpu.dot_dimension_numbers<[1], [0], [0], [1], [0, 0, 1, 1], [], []>} : vector<8x32xbf16>, vector<32x256xbf16>, vector<8x256xf32> -> vector<8x256xf32>
    %43 = arith.addf %38, %42 : vector<8x256xf32>
    %44 = vector.extract_strided_slice %34 {offsets = [16, 0], sizes = [8, 32], strides = [1, 1]} : vector<112x32xbf16> to vector<8x32xbf16>
    %c2_28 = arith.constant 2 : index
    %c0_29 = arith.constant 0 : index
    %c0_30 = arith.constant 0 : index
    %45 = vector.load %arg6[%c2_28, %c0_29, %c0_30] : memref<14x32x256xbf16, #tpu.memory_space<vmem>>, vector<1x32x256xbf16>
    %46 = vector.shape_cast %45 : vector<1x32x256xbf16> to vector<32x256xbf16>
    %cst_31 = arith.constant dense<0.000000e+00> : vector<8x256xf32>
    %47 = tpu.matmul %44, %46, %cst_31 {dimension_numbers = #tpu.dot_dimension_numbers<[1], [0], [0], [1], [0, 0, 1, 1], [], []>} : vector<8x32xbf16>, vector<32x256xbf16>, vector<8x256xf32> -> vector<8x256xf32>
    %48 = arith.addf %43, %47 : vector<8x256xf32>
    %49 = vector.extract_strided_slice %34 {offsets = [24, 0], sizes = [8, 32], strides = [1, 1]} : vector<112x32xbf16> to vector<8x32xbf16>
    %c3 = arith.constant 3 : index
    %c0_32 = arith.constant 0 : index
    %c0_33 = arith.constant 0 : index
    %50 = vector.load %arg6[%c3, %c0_32, %c0_33] : memref<14x32x256xbf16, #tpu.memory_space<vmem>>, vector<1x32x256xbf16>
    %51 = vector.shape_cast %50 : vector<1x32x256xbf16> to vector<32x256xbf16>
    %cst_34 = arith.constant dense<0.000000e+00> : vector<8x256xf32>
    %52 = tpu.matmul %49, %51, %cst_34 {dimension_numbers = #tpu.dot_dimension_numbers<[1], [0], [0], [1], [0, 0, 1, 1], [], []>} : vector<8x32xbf16>, vector<32x256xbf16>, vector<8x256xf32> -> vector<8x256xf32>
    %53 = arith.addf %48, %52 : vector<8x256xf32>
    %54 = vector.extract_strided_slice %34 {offsets = [32, 0], sizes = [8, 32], strides = [1, 1]} : vector<112x32xbf16> to vector<8x32xbf16>
    %c4 = arith.constant 4 : index
    %c0_35 = arith.constant 0 : index
    %c0_36 = arith.constant 0 : index
    %55 = vector.load %arg6[%c4, %c0_35, %c0_36] : memref<14x32x256xbf16, #tpu.memory_space<vmem>>, vector<1x32x256xbf16>
    %56 = vector.shape_cast %55 : vector<1x32x256xbf16> to vector<32x256xbf16>
    %cst_37 = arith.constant dense<0.000000e+00> : vector<8x256xf32>
    %57 = tpu.matmul %54, %56, %cst_37 {dimension_numbers = #tpu.dot_dimension_numbers<[1], [0], [0], [1], [0, 0, 1, 1], [], []>} : vector<8x32xbf16>, vector<32x256xbf16>, vector<8x256xf32> -> vector<8x256xf32>
    %58 = arith.addf %53, %57 : vector<8x256xf32>
    %59 = vector.extract_strided_slice %34 {offsets = [40, 0], sizes = [8, 32], strides = [1, 1]} : vector<112x32xbf16> to vector<8x32xbf16>
    %c5 = arith.constant 5 : index
    %c0_38 = arith.constant 0 : index
    %c0_39 = arith.constant 0 : index
    %60 = vector.load %arg6[%c5, %c0_38, %c0_39] : memref<14x32x256xbf16, #tpu.memory_space<vmem>>, vector<1x32x256xbf16>
    %61 = vector.shape_cast %60 : vector<1x32x256xbf16> to vector<32x256xbf16>
    %cst_40 = arith.constant dense<0.000000e+00> : vector<8x256xf32>
    %62 = tpu.matmul %59, %61, %cst_40 {dimension_numbers = #tpu.dot_dimension_numbers<[1], [0], [0], [1], [0, 0, 1, 1], [], []>} : vector<8x32xbf16>, vector<32x256xbf16>, vector<8x256xf32> -> vector<8x256xf32>
    %63 = arith.addf %58, %62 : vector<8x256xf32>
    %64 = vector.extract_strided_slice %34 {offsets = [48, 0], sizes = [8, 32], strides = [1, 1]} : vector<112x32xbf16> to vector<8x32xbf16>
    %c6 = arith.constant 6 : index
    %c0_41 = arith.constant 0 : index
    %c0_42 = arith.constant 0 : index
    %65 = vector.load %arg6[%c6, %c0_41, %c0_42] : memref<14x32x256xbf16, #tpu.memory_space<vmem>>, vector<1x32x256xbf16>
    %66 = vector.shape_cast %65 : vector<1x32x256xbf16> to vector<32x256xbf16>
    %cst_43 = arith.constant dense<0.000000e+00> : vector<8x256xf32>
    %67 = tpu.matmul %64, %66, %cst_43 {dimension_numbers = #tpu.dot_dimension_numbers<[1], [0], [0], [1], [0, 0, 1, 1], [], []>} : vector<8x32xbf16>, vector<32x256xbf16>, vector<8x256xf32> -> vector<8x256xf32>
    %68 = arith.addf %63, %67 : vector<8x256xf32>
    %69 = vector.extract_strided_slice %34 {offsets = [56, 0], sizes = [8, 32], strides = [1, 1]} : vector<112x32xbf16> to vector<8x32xbf16>
    %c7 = arith.constant 7 : index
    %c0_44 = arith.constant 0 : index
    %c0_45 = arith.constant 0 : index
    %70 = vector.load %arg6[%c7, %c0_44, %c0_45] : memref<14x32x256xbf16, #tpu.memory_space<vmem>>, vector<1x32x256xbf16>
    %71 = vector.shape_cast %70 : vector<1x32x256xbf16> to vector<32x256xbf16>
    %cst_46 = arith.constant dense<0.000000e+00> : vector<8x256xf32>
    %72 = tpu.matmul %69, %71, %cst_46 {dimension_numbers = #tpu.dot_dimension_numbers<[1], [0], [0], [1], [0, 0, 1, 1], [], []>} : vector<8x32xbf16>, vector<32x256xbf16>, vector<8x256xf32> -> vector<8x256xf32>
    %73 = arith.addf %68, %72 : vector<8x256xf32>
    %74 = vector.extract_strided_slice %34 {offsets = [64, 0], sizes = [8, 32], strides = [1, 1]} : vector<112x32xbf16> to vector<8x32xbf16>
    %c8 = arith.constant 8 : index
    %c0_47 = arith.constant 0 : index
    %c0_48 = arith.constant 0 : index
    %75 = vector.load %arg6[%c8, %c0_47, %c0_48] : memref<14x32x256xbf16, #tpu.memory_space<vmem>>, vector<1x32x256xbf16>
    %76 = vector.shape_cast %75 : vector<1x32x256xbf16> to vector<32x256xbf16>
    %cst_49 = arith.constant dense<0.000000e+00> : vector<8x256xf32>
    %77 = tpu.matmul %74, %76, %cst_49 {dimension_numbers = #tpu.dot_dimension_numbers<[1], [0], [0], [1], [0, 0, 1, 1], [], []>} : vector<8x32xbf16>, vector<32x256xbf16>, vector<8x256xf32> -> vector<8x256xf32>
    %78 = arith.addf %73, %77 : vector<8x256xf32>
    %79 = vector.extract_strided_slice %34 {offsets = [72, 0], sizes = [8, 32], strides = [1, 1]} : vector<112x32xbf16> to vector<8x32xbf16>
    %c9 = arith.constant 9 : index
    %c0_50 = arith.constant 0 : index
    %c0_51 = arith.constant 0 : index
    %80 = vector.load %arg6[%c9, %c0_50, %c0_51] : memref<14x32x256xbf16, #tpu.memory_space<vmem>>, vector<1x32x256xbf16>
    %81 = vector.shape_cast %80 : vector<1x32x256xbf16> to vector<32x256xbf16>
    %cst_52 = arith.constant dense<0.000000e+00> : vector<8x256xf32>
    %82 = tpu.matmul %79, %81, %cst_52 {dimension_numbers = #tpu.dot_dimension_numbers<[1], [0], [0], [1], [0, 0, 1, 1], [], []>} : vector<8x32xbf16>, vector<32x256xbf16>, vector<8x256xf32> -> vector<8x256xf32>
    %83 = arith.addf %78, %82 : vector<8x256xf32>
    %84 = vector.extract_strided_slice %34 {offsets = [80, 0], sizes = [8, 32], strides = [1, 1]} : vector<112x32xbf16> to vector<8x32xbf16>
    %c10 = arith.constant 10 : index
    %c0_53 = arith.constant 0 : index
    %c0_54 = arith.constant 0 : index
    %85 = vector.load %arg6[%c10, %c0_53, %c0_54] : memref<14x32x256xbf16, #tpu.memory_space<vmem>>, vector<1x32x256xbf16>
    %86 = vector.shape_cast %85 : vector<1x32x256xbf16> to vector<32x256xbf16>
    %cst_55 = arith.constant dense<0.000000e+00> : vector<8x256xf32>
    %87 = tpu.matmul %84, %86, %cst_55 {dimension_numbers = #tpu.dot_dimension_numbers<[1], [0], [0], [1], [0, 0, 1, 1], [], []>} : vector<8x32xbf16>, vector<32x256xbf16>, vector<8x256xf32> -> vector<8x256xf32>
    %88 = arith.addf %83, %87 : vector<8x256xf32>
    %89 = vector.extract_strided_slice %34 {offsets = [88, 0], sizes = [8, 32], strides = [1, 1]} : vector<112x32xbf16> to vector<8x32xbf16>
    %c11 = arith.constant 11 : index
    %c0_56 = arith.constant 0 : index
    %c0_57 = arith.constant 0 : index
    %90 = vector.load %arg6[%c11, %c0_56, %c0_57] : memref<14x32x256xbf16, #tpu.memory_space<vmem>>, vector<1x32x256xbf16>
    %91 = vector.shape_cast %90 : vector<1x32x256xbf16> to vector<32x256xbf16>
    %cst_58 = arith.constant dense<0.000000e+00> : vector<8x256xf32>
    %92 = tpu.matmul %89, %91, %cst_58 {dimension_numbers = #tpu.dot_dimension_numbers<[1], [0], [0], [1], [0, 0, 1, 1], [], []>} : vector<8x32xbf16>, vector<32x256xbf16>, vector<8x256xf32> -> vector<8x256xf32>
    %93 = arith.addf %88, %92 : vector<8x256xf32>
    %94 = vector.extract_strided_slice %34 {offsets = [96, 0], sizes = [8, 32], strides = [1, 1]} : vector<112x32xbf16> to vector<8x32xbf16>
    %c12 = arith.constant 12 : index
    %c0_59 = arith.constant 0 : index
    %c0_60 = arith.constant 0 : index
    %95 = vector.load %arg6[%c12, %c0_59, %c0_60] : memref<14x32x256xbf16, #tpu.memory_space<vmem>>, vector<1x32x256xbf16>
    %96 = vector.shape_cast %95 : vector<1x32x256xbf16> to vector<32x256xbf16>
    %cst_61 = arith.constant dense<0.000000e+00> : vector<8x256xf32>
    %97 = tpu.matmul %94, %96, %cst_61 {dimension_numbers = #tpu.dot_dimension_numbers<[1], [0], [0], [1], [0, 0, 1, 1], [], []>} : vector<8x32xbf16>, vector<32x256xbf16>, vector<8x256xf32> -> vector<8x256xf32>
    %98 = arith.addf %93, %97 : vector<8x256xf32>
    %99 = vector.extract_strided_slice %34 {offsets = [104, 0], sizes = [8, 32], strides = [1, 1]} : vector<112x32xbf16> to vector<8x32xbf16>
    %c13 = arith.constant 13 : index
    %c0_62 = arith.constant 0 : index
    %c0_63 = arith.constant 0 : index
    %100 = vector.load %arg6[%c13, %c0_62, %c0_63] : memref<14x32x256xbf16, #tpu.memory_space<vmem>>, vector<1x32x256xbf16>
    %101 = vector.shape_cast %100 : vector<1x32x256xbf16> to vector<32x256xbf16>
    %cst_64 = arith.constant dense<0.000000e+00> : vector<8x256xf32>
    %102 = tpu.matmul %99, %101, %cst_64 {dimension_numbers = #tpu.dot_dimension_numbers<[1], [0], [0], [1], [0, 0, 1, 1], [], []>} : vector<8x32xbf16>, vector<32x256xbf16>, vector<8x256xf32> -> vector<8x256xf32>
    %103 = arith.addf %98, %102 : vector<8x256xf32>
    %c0_65 = arith.constant 0 : index
    %c0_66 = arith.constant 0 : index
    %104 = vector.load %arg7[%c0_65, %c0_66] : memref<1x256xf32, #tpu.memory_space<vmem>>, vector<1x256xf32>
    %105 = vector.broadcast %104 : vector<1x256xf32> to vector<8x256xf32>
    %106 = arith.addf %103, %105 : vector<8x256xf32>
    %107 = arith.truncf %106 : vector<8x256xf32> to vector<8x256xbf16>
    %c0_67 = arith.constant 0 : index
    %c0_68 = arith.constant 0 : index
    %108 = vector.load %arg8[%c0_67, %c0_68] : memref<256x128xbf16, #tpu.memory_space<vmem>>, vector<256x128xbf16>
    %cst_69 = arith.constant dense<0.000000e+00> : vector<8x128xf32>
    %109 = tpu.matmul %107, %108, %cst_69 {dimension_numbers = #tpu.dot_dimension_numbers<[1], [0], [0], [1], [0, 0, 1, 1], [], []>} : vector<8x256xbf16>, vector<256x128xbf16>, vector<8x128xf32> -> vector<8x128xf32>
    %c0_70 = arith.constant 0 : index
    %c0_71 = arith.constant 0 : index
    %110 = vector.load %arg9[%c0_70, %c0_71] : memref<1x128xf32, #tpu.memory_space<vmem>>, vector<1x128xf32>
    %111 = vector.broadcast %110 : vector<1x128xf32> to vector<8x128xf32>
    %112 = arith.addf %109, %111 : vector<8x128xf32>
    %cst_72 = arith.constant dense<0xFF800000> : vector<8xf32>
    %113 = vector.multi_reduction <maximumf>, %112, %cst_72 [1] : vector<8x128xf32> to vector<8xf32>
    %114 = vector.shape_cast %113 : vector<8xf32> to vector<8x1xf32>
    %115 = vector.broadcast %114 : vector<8x1xf32> to vector<8x128xf32>
    %116 = arith.subf %112, %115 : vector<8x128xf32>
    %117 = math.exp %116 : vector<8x128xf32>
    %cst_73 = arith.constant dense<0.000000e+00> : vector<8xf32>
    %118 = vector.multi_reduction <add>, %117, %cst_73 [1] : vector<8x128xf32> to vector<8xf32>
    %119 = vector.shape_cast %118 : vector<8xf32> to vector<8x1xf32>
    %120 = vector.broadcast %119 : vector<8x1xf32> to vector<8x128xf32>
    %121 = arith.divf %117, %120 : vector<8x128xf32>
    %c0_74 = arith.constant 0 : index
    %c0_75 = arith.constant 0 : index
    %122 = vector.load %arg10[%c0_74, %c0_75] : memref<8x128xf32, #tpu.memory_space<vmem>>, vector<8x128xf32>
    tpu.vector_store %arg10[%c0_74, %c0_75], %121 {strides = array<i32>} : memref<8x128xf32, #tpu.memory_space<vmem>>, vector<8x128xf32>,
    return
  }
  func.func @transform_0(%arg0: i32) -> (i32, i32, i32) {
    %c0_i32 = arith.constant 0 : i32
    %c0_i32_0 = arith.constant 0 : i32
    %c0_i32_1 = arith.constant 0 : i32
    return %arg0, %c0_i32, %c0_i32_0 : i32, i32, i32
  }
  func.func @transform_1(%arg0: i32) -> (i32, i32) {
    %c0_i32 = arith.constant 0 : i32
    %c0_i32_0 = arith.constant 0 : i32
    %c0_i32_1 = arith.constant 0 : i32
    return %c0_i32, %c0_i32_0 : i32, i32
  }
  func.func @transform_2(%arg0: i32) -> (i32, i32) {
    %c0_i32 = arith.constant 0 : i32
    %c0_i32_0 = arith.constant 0 : i32
    %c0_i32_1 = arith.constant 0 : i32
    return %c0_i32, %c0_i32_0 : i32, i32
  }
  func.func @transform_3(%arg0: i32) -> (i32, i32, i32) {
    %c0_i32 = arith.constant 0 : i32
    %c0_i32_0 = arith.constant 0 : i32
    %c0_i32_1 = arith.constant 0 : i32
    %c0_i32_2 = arith.constant 0 : i32
    return %c0_i32, %c0_i32_0, %c0_i32_1 : i32, i32, i32
  }
  func.func @transform_4(%arg0: i32) -> (i32, i32) {
    %c0_i32 = arith.constant 0 : i32
    %c0_i32_0 = arith.constant 0 : i32
    %c0_i32_1 = arith.constant 0 : i32
    return %c0_i32, %c0_i32_0 : i32, i32
  }
  func.func @transform_5(%arg0: i32) -> (i32, i32, i32) {
    %c0_i32 = arith.constant 0 : i32
    %c0_i32_0 = arith.constant 0 : i32
    %c0_i32_1 = arith.constant 0 : i32
    %c0_i32_2 = arith.constant 0 : i32
    return %c0_i32, %c0_i32_0, %c0_i32_1 : i32, i32, i32
  }
  func.func @transform_6(%arg0: i32) -> (i32, i32) {
    %c0_i32 = arith.constant 0 : i32
    %c0_i32_0 = arith.constant 0 : i32
    %c0_i32_1 = arith.constant 0 : i32
    return %c0_i32, %c0_i32_0 : i32, i32
  }
  func.func @transform_7(%arg0: i32) -> (i32, i32) {
    %c0_i32 = arith.constant 0 : i32
    %c0_i32_0 = arith.constant 0 : i32
    %c0_i32_1 = arith.constant 0 : i32
    return %c0_i32, %c0_i32_0 : i32, i32
  }
  func.func @transform_8(%arg0: i32) -> (i32, i32) {
    %c0_i32 = arith.constant 0 : i32
    %c0_i32_0 = arith.constant 0 : i32
    %c0_i32_1 = arith.constant 0 : i32
    return %c0_i32, %c0_i32_0 : i32, i32
  }
  func.func @transform_9(%arg0: i32) -> (i32, i32) {
    %c0_i32 = arith.constant 0 : i32
    %c0_i32_0 = arith.constant 0 : i32
    return %arg0, %c0_i32 : i32, i32
  }
}

</mosaic_0001>

<llo_original>
// kernel: zhaopin_forward.1
$region0: #{zhaopin_forward.1}
  #allocation0 [shape = 'u32[]', space=smem, size = 0x4, offset = 0x4, fixed_abs, tag = 'smem constant byte address 0x4 - core index']
  #allocation1 [shape = 'u32[144,128]{1,0:T(1,128)}', space=vmem, size = 0x12000, scoped, tag = 'internal scratch']
  %s0 = inlined_call_operand.vmem [shape: bf16[2,384,128], index: 0, kind: input, shape index: {}]
  %s1 = inlined_call_operand.vmem [shape: bf16[128,256], index: 1, kind: input, shape index: {}]
  %s2 = inlined_call_operand.vmem [shape: f32[1,256], index: 2, kind: input, shape index: {}]
  %s3 = inlined_call_operand.vmem [shape: bf16[3,256,32], index: 3, kind: input, shape index: {}]
  %s4 = inlined_call_operand.vmem [shape: f32[1,32], index: 4, kind: input, shape index: {}]
  %s5 = inlined_call_operand.vmem [shape: bf16[14,32,256], index: 5, kind: input, shape index: {}]
  %s6 = inlined_call_operand.vmem [shape: f32[1,256], index: 6, kind: input, shape index: {}]
  %s7 = inlined_call_operand.vmem [shape: bf16[256,128], index: 7, kind: input, shape index: {}]
  %s8 = inlined_call_operand.vmem [shape: f32[1,128], index: 8, kind: input, shape index: {}]
  %s9 = inlined_call_operand.hbm [shape: f32[16,128], index: 9, kind: output, shape index: {}]
  %s10 = sld [smem:[#allocation0]]
  $region69: #{zhaopin_forward.1} parent=0
    _
  %s12 = ssub.s32 1, %s10
  %s13 = scalar_select 0, %s12, %s10
  $region1: #{zhaopin_forward.1} parent=0
    #allocation2 [shape = 'u8[8192]{0}', space=vmem, size = 0x2000, scoped, tag = 'output window, operand 0']
    #allocation3 [shape = 's32[2]{0}', space=sflag, size = 0x8, scoped, tag = 'scoped memory for zhaopin_forward.1']
    %14 = vsyncpa [#allocation3], 0
    %s15 = scalar_lea.sflag [#allocation3], 1
    %16 = vsyncpa %s15, 0
    loop: start=0, step=1, limit=4
    $region2: #{zhaopin_forward.1} parent=1 // loop_pre_header
      _
    $region3: #{zhaopin_forward.1} parent=1 // loop_header
      %s18 = sphi 0, %s22
      %p19 = scmp.ge.s32.totalorder %s18, 4
      %s28 = sphi 0, %s30
      %s31 = sphi 0, %s28
      %s32 = sphi 0, %s31
      %s48 = sphi 0, %s32
      %s52 = sphi 0, %s52
      %s54 = sphi 0, %s52
      %s55 = sphi 0, %s54
      %s69 = sphi 0, %s55
      %s73 = sphi 0, %s73
      %s75 = sphi 0, %s73
      %s76 = sphi 0, %s75
      %s90 = sphi 0, %s76
      %s94 = sphi 0, %s94
      %s96 = sphi 0, %s94
      %s97 = sphi 0, %s96
      %s111 = sphi 0, %s97
      %s115 = sphi 0, %s115
      %s117 = sphi 0, %s115
      %s118 = sphi 0, %s117
      %s132 = sphi 0, %s118
      %s136 = sphi 0, %s136
      %s138 = sphi 0, %s136
      %s139 = sphi 0, %s138
      %s153 = sphi 0, %s139
      %s157 = sphi 0, %s157
      %s159 = sphi 0, %s157
      %s160 = sphi 0, %s159
      %s174 = sphi 0, %s160
      %s178 = sphi 0, %s178
      %s180 = sphi 0, %s178
      %s181 = sphi 0, %s180
      %s195 = sphi 0, %s181
      %s199 = sphi 0, %s199
      %s201 = sphi 0, %s199
      %s202 = sphi 0, %s201
      %s216 = sphi 0, %s202
      %s222 = sphi 0, %s224
      %s225 = sphi 0, %s222
      %s226 = sphi 0, %s225
      %s242 = sphi 0, %s226
    $region4: #{zhaopin_forward.1} parent=1 // loop_header_branch
      %21 = sbr.rel (%p19) target = $region8
    $region5: #{zhaopin_forward.1} parent=1 // loop_body
      %s23 = ssub.s32 %s18, 1
      %s24 = ssub.s32 %s18, 2
      %s25 = sadd.s32 %s18, 1
      %s26 = ssub.s32 %s18, %s25
      %p27 = scmp.eq.s32.totalorder %s26, 0
      %s29 = sadd.s32 %s28, 1
      %s30 = scalar_select %p27, %s28, %s29
      %p33 = pneg %p27
      %p34 = scmp.eq.s32.totalorder %s18, 1
      %p35 = por %p33, %p34
      %p36 = scmp.ne.s32.totalorder %s28, %s31
      %p37 = scmp.eq.s32.totalorder %s18, 0
      %p38 = por %p36, %p37
      %p39 = scmp.ne.s32.totalorder %s28, %s31
      %p40 = scmp.eq.s32.totalorder %s23, 1
      %p41 = por %p39, %p40
      %p42 = scmp.ne.s32.totalorder %s31, %s32
      %p43 = scmp.eq.s32.totalorder %s23, 0
      %p44 = por %p42, %p43
      %p45 = scmp.ne.s32.totalorder %s31, %s32
      %p46 = scmp.eq.s32.totalorder %s24, 1
      %p47 = por %p45, %p46
      %p49 = scmp.ne.s32.totalorder %s32, %s48
      %p50 = scmp.eq.s32.totalorder %s24, 0
      %p51 = por %p49, %p50
      %s53 = sadd.s32 %s52, 1
      %p56 = scmp.eq.s32.totalorder %s18, 1
      %p57 = scmp.ne.s32.totalorder %s52, %s54
      %p58 = scmp.eq.s32.totalorder %s18, 0
      %p59 = por %p57, %p58
      %p60 = scmp.ne.s32.totalorder %s52, %s54
      %p61 = scmp.eq.s32.totalorder %s23, 1
      %p62 = por %p60, %p61
      %p63 = scmp.ne.s32.totalorder %s54, %s55
      %p64 = scmp.eq.s32.totalorder %s23, 0
      %p65 = por %p63, %p64
      %p66 = scmp.ne.s32.totalorder %s54, %s55
      %p67 = scmp.eq.s32.totalorder %s24, 1
      %p68 = por %p66, %p67
      %p70 = scmp.ne.s32.totalorder %s55, %s69
      %p71 = scmp.eq.s32.totalorder %s24, 0
      %p72 = por %p70, %p71
      %s74 = sadd.s32 %s73, 1
      %p77 = scmp.eq.s32.totalorder %s18, 1
      %p78 = scmp.ne.s32.totalorder %s73, %s75
      %p79 = scmp.eq.s32.totalorder %s18, 0
      %p80 = por %p78, %p79
      %p81 = scmp.ne.s32.totalorder %s73, %s75
      %p82 = scmp.eq.s32.totalorder %s23, 1
      %p83 = por %p81, %p82
      %p84 = scmp.ne.s32.totalorder %s75, %s76
      %p85 = scmp.eq.s32.totalorder %s23, 0
      %p86 = por %p84, %p85
      %p87 = scmp.ne.s32.totalorder %s75, %s76
      %p88 = scmp.eq.s32.totalorder %s24, 1
      %p89 = por %p87, %p88
      %p91 = scmp.ne.s32.totalorder %s76, %s90
      %p92 = scmp.eq.s32.totalorder %s24, 0
      %p93 = por %p91, %p92
      %s95 = sadd.s32 %s94, 1
      %p98 = scmp.eq.s32.totalorder %s18, 1
      %p99 = scmp.ne.s32.totalorder %s94, %s96
      %p100 = scmp.eq.s32.totalorder %s18, 0
      %p101 = por %p99, %p100
      %p102 = scmp.ne.s32.totalorder %s94, %s96
      %p103 = scmp.eq.s32.totalorder %s23, 1
      %p104 = por %p102, %p103
      %p105 = scmp.ne.s32.totalorder %s96, %s97
      %p106 = scmp.eq.s32.totalorder %s23, 0
      %p107 = por %p105, %p106
      %p108 = scmp.ne.s32.totalorder %s96, %s97
      %p109 = scmp.eq.s32.totalorder %s24, 1
      %p110 = por %p108, %p109
      %p112 = scmp.ne.s32.totalorder %s97, %s111
      %p113 = scmp.eq.s32.totalorder %s24, 0
      %p114 = por %p112, %p113
      %s116 = sadd.s32 %s115, 1
      %p119 = scmp.eq.s32.totalorder %s18, 1
      %p120 = scmp.ne.s32.totalorder %s115, %s117
      %p121 = scmp.eq.s32.totalorder %s18, 0
      %p122 = por %p120, %p121
      %p123 = scmp.ne.s32.totalorder %s115, %s117
      %p124 = scmp.eq.s32.totalorder %s23, 1
      %p125 = por %p123, %p124
      %p126 = scmp.ne.s32.totalorder %s117, %s118
      %p127 = scmp.eq.s32.totalorder %s23, 0
      %p128 = por %p126, %p127
      %p129 = scmp.ne.s32.totalorder %s117, %s118
      %p130 = scmp.eq.s32.totalorder %s24, 1
      %p131 = por %p129, %p130
      %p133 = scmp.ne.s32.totalorder %s118, %s132
      %p134 = scmp.eq.s32.totalorder %s24, 0
      %p135 = por %p133, %p134
      %s137 = sadd.s32 %s136, 1
      %p140 = scmp.eq.s32.totalorder %s18, 1
      %p141 = scmp.ne.s32.totalorder %s136, %s138
      %p142 = scmp.eq.s32.totalorder %s18, 0
      %p143 = por %p141, %p142
      %p144 = scmp.ne.s32.totalorder %s136, %s138
      %p145 = scmp.eq.s32.totalorder %s23, 1
      %p146 = por %p144, %p145
      %p147 = scmp.ne.s32.totalorder %s138, %s139
      %p148 = scmp.eq.s32.totalorder %s23, 0
      %p149 = por %p147, %p148
      %p150 = scmp.ne.s32.totalorder %s138, %s139
      %p151 = scmp.eq.s32.totalorder %s24, 1
      %p152 = por %p150, %p151
      %p154 = scmp.ne.s32.totalorder %s139, %s153
      %p155 = scmp.eq.s32.totalorder %s24, 0
      %p156 = por %p154, %p155
      %s158 = sadd.s32 %s157, 1
      %p161 = scmp.eq.s32.totalorder %s18, 1
      %p162 = scmp.ne.s32.totalorder %s157, %s159
      %p163 = scmp.eq.s32.totalorder %s18, 0
      %p164 = por %p162, %p163
      %p165 = scmp.ne.s32.totalorder %s157, %s159
      %p166 = scmp.eq.s32.totalorder %s23, 1
      %p167 = por %p165, %p166
      %p168 = scmp.ne.s32.totalorder %s159, %s160
      %p169 = scmp.eq.s32.totalorder %s23, 0
      %p170 = por %p168, %p169
      %p171 = scmp.ne.s32.totalorder %s159, %s160
      %p172 = scmp.eq.s32.totalorder %s24, 1
      %p173 = por %p171, %p172
      %p175 = scmp.ne.s32.totalorder %s160, %s174
      %p176 = scmp.eq.s32.totalorder %s24, 0
      %p177 = por %p175, %p176
      %s179 = sadd.s32 %s178, 1
      %p182 = scmp.eq.s32.totalorder %s18, 1
      %p183 = scmp.ne.s32.totalorder %s178, %s180
      %p184 = scmp.eq.s32.totalorder %s18, 0
      %p185 = por %p183, %p184
      %p186 = scmp.ne.s32.totalorder %s178, %s180
      %p187 = scmp.eq.s32.totalorder %s23, 1
      %p188 = por %p186, %p187
      %p189 = scmp.ne.s32.totalorder %s180, %s181
      %p190 = scmp.eq.s32.totalorder %s23, 0
      %p191 = por %p189, %p190
      %p192 = scmp.ne.s32.totalorder %s180, %s181
      %p193 = scmp.eq.s32.totalorder %s24, 1
      %p194 = por %p192, %p193
      %p196 = scmp.ne.s32.totalorder %s181, %s195
      %p197 = scmp.eq.s32.totalorder %s24, 0
      %p198 = por %p196, %p197
      %s200 = sadd.s32 %s199, 1
      %p203 = scmp.eq.s32.totalorder %s18, 1
      %p204 = scmp.ne.s32.totalorder %s199, %s201
      %p205 = scmp.eq.s32.totalorder %s18, 0
      %p206 = por %p204, %p205
      %p207 = scmp.ne.s32.totalorder %s199, %s201
      %p208 = scmp.eq.s32.totalorder %s23, 1
      %p209 = por %p207, %p208
      %p210 = scmp.ne.s32.totalorder %s201, %s202
      %p211 = scmp.eq.s32.totalorder %s23, 0
      %p212 = por %p210, %p211
      %p213 = scmp.ne.s32.totalorder %s201, %s202
      %p214 = scmp.eq.s32.totalorder %s24, 1
      %p215 = por %p213, %p214
      %p217 = scmp.ne.s32.totalorder %s202, %s216
      %p218 = scmp.eq.s32.totalorder %s24, 0
      %p219 = por %p217, %p218
      %s220 = ssub.s32 %s18, %s25
      %p221 = scmp.eq.s32.totalorder %s220, 0
      %s223 = sadd.s32 %s222, 1
      %s224 = scalar_select %p221, %s222, %s223
      %p227 = pneg %p221
      %p228 = scmp.eq.s32.totalorder %s18, 1
      %p229 = por %p227, %p228
      %p230 = scmp.ne.s32.totalorder %s222, %s225
      %p231 = scmp.eq.s32.totalorder %s18, 0
      %p232 = por %p230, %p231
      %p233 = scmp.ne.s32.totalorder %s222, %s225
      %p234 = scmp.eq.s32.totalorder %s23, 1
      %p235 = por %p233, %p234
      %p236 = scmp.ne.s32.totalorder %s225, %s226
      %p237 = scmp.eq.s32.totalorder %s23, 0
      %p238 = por %p236, %p237
      %p239 = scmp.ne.s32.totalorder %s225, %s226
      %p240 = scmp.eq.s32.totalorder %s24, 1
      %p241 = por %p239, %p240
      %p243 = scmp.ne.s32.totalorder %s226, %s242
      %p244 = scmp.eq.s32.totalorder %s24, 0
      %p245 = por %p243, %p244
      %p246 = scmp.le.s32.totalorder 1, %s18
      %p247 = scmp.lt.s32.totalorder %s18, 3
      %p248 = pnand %p246, %p247
      %p249 = pneg %p248
      // Predicated region
      $region9: #{zhaopin_forward.1} parent=5 // pred_check
        _
      $region10: #{zhaopin_forward.1} parent=5 // pred_check_branch
        %251 = sbr.rel (%p248) target = $region12
      $region11: #{zhaopin_forward.1} parent=5 // pred_region
        %s252 = ssub.s32 %s18, 1
        // Predicated region
        $region13: #{zhaopin_forward.1} parent=11 // pred_check
          %p253 = pneg %p65
        $region14: #{zhaopin_forward.1} parent=11 // pred_check_branch
          %255 = sbr.rel (%p253) target = $region16
        $region15: #{zhaopin_forward.1} parent=11 // pred_region
          _
        $region16: #{zhaopin_forward.1} parent=11 // pred_fallthru
          _
        // Predicated region
        $region17: #{zhaopin_forward.1} parent=11 // pred_check
          %p256 = pneg %p86
        $region18: #{zhaopin_forward.1} parent=11 // pred_check_branch
          %258 = sbr.rel (%p256) target = $region20
        $region19: #{zhaopin_forward.1} parent=11 // pred_region
          _
        $region20: #{zhaopin_forward.1} parent=11 // pred_fallthru
          _
        // Predicated region
        $region21: #{zhaopin_forward.1} parent=11 // pred_check
          %p259 = pneg %p107
        $region22: #{zhaopin_forward.1} parent=11 // pred_check_branch
          %261 = sbr.rel (%p259) target = $region24
        $region23: #{zhaopin_forward.1} parent=11 // pred_region
          _
        $region24: #{zhaopin_forward.1} parent=11 // pred_fallthru
          _
        // Predicated region
        $region25: #{zhaopin_forward.1} parent=11 // pred_check
          %p262 = pneg %p128
        $region26: #{zhaopin_forward.1} parent=11 // pred_check_branch
          %264 = sbr.rel (%p262) target = $region28
        $region27: #{zhaopin_forward.1} parent=11 // pred_region
          _
        $region28: #{zhaopin_forward.1} parent=11 // pred_fallthru
          _
        // Predicated region
        $region29: #{zhaopin_forward.1} parent=11 // pred_check
          %p265 = pneg %p149
        $region30: #{zhaopin_forward.1} parent=11 // pred_check_branch
          %267 = sbr.rel (%p265) target = $region32
        $region31: #{zhaopin_forward.1} parent=11 // pred_region
          _
        $region32: #{zhaopin_forward.1} parent=11 // pred_fallthru
          _
        // Predicated region
        $region33: #{zhaopin_forward.1} parent=11 // pred_check
          %p268 = pneg %p170
        $region34: #{zhaopin_forward.1} parent=11 // pred_check_branch
          %270 = sbr.rel (%p268) target = $region36
        $region35: #{zhaopin_forward.1} parent=11 // pred_region
          _
        $region36: #{zhaopin_forward.1} parent=11 // pred_fallthru
          _
        // Predicated region
        $region37: #{zhaopin_forward.1} parent=11 // pred_check
          %p271 = pneg %p191
        $region38: #{zhaopin_forward.1} parent=11 // pred_check_branch
          %273 = sbr.rel (%p271) target = $region40
        $region39: #{zhaopin_forward.1} parent=11 // pred_region
          _
        $region40: #{zhaopin_forward.1} parent=11 // pred_fallthru
          _
        // Predicated region
        $region41: #{zhaopin_forward.1} parent=11 // pred_check
          %p274 = pneg %p212
        $region42: #{zhaopin_forward.1} parent=11 // pred_check_branch
          %276 = sbr.rel (%p274) target = $region44
        $region43: #{zhaopin_forward.1} parent=11 // pred_region
          _
        $region44: #{zhaopin_forward.1} parent=11 // pred_fallthru
          _
      $region12: #{zhaopin_forward.1} parent=5 // pred_fallthru
        _
      %p277 = scmp.lt.s32.totalorder %s18, 2
      // Predicated region
      $region45: #{zhaopin_forward.1} parent=5 // pred_check
        %p278 = pneg %p277
      $region46: #{zhaopin_forward.1} parent=5 // pred_check_branch
        %280 = sbr.rel (%p278) target = $region48
      $region47: #{zhaopin_forward.1} parent=5 // pred_region
        // Predicated region
        $region49: #{zhaopin_forward.1} parent=47 // pred_check
          %p281 = pneg %p38
        $region50: #{zhaopin_forward.1} parent=47 // pred_check_branch
          %283 = sbr.rel (%p281) target = $region52
        $region51: #{zhaopin_forward.1} parent=47 // pred_region
          %p284 = scmp.lt.s32.totalorder %s18, 1
          %s285 = scalar_select %p284, %s18, 1
          %s286 = smul.addr %s285, 48
          %s287 = smul.addr %s286, 4
          %s288 = scalar_lea.vmem %s0, %s287
        $region52: #{zhaopin_forward.1} parent=47 // pred_fallthru
          _
      $region48: #{zhaopin_forward.1} parent=5 // pred_fallthru
        _
      %p289 = scmp.le.s32.totalorder 1, %s18
      %p290 = scmp.lt.s32.totalorder %s18, 3
      %p291 = pnand %p289, %p290
      %p292 = pneg %p291
      // Predicated region
      $region53: #{zhaopin_forward.1} parent=5 // pred_check
        _
      $region54: #{zhaopin_forward.1} parent=5 // pred_check_branch
        %294 = sbr.rel (%p291) target = $region56
      $region55: #{zhaopin_forward.1} parent=5 // pred_region
        %s295 = ssub.s32 %s18, 1
        %p296 = scmp.lt.s32.totalorder %s23, 1
        %s297 = scalar_select %p296, %s23, 1
        %s298 = smul.addr %s297, 48
        %s299 = smul.addr %s298, 4
        %s300 = scalar_lea.vmem %s0, %s299
        %p301 = pneg %p44
        %p302 = pneg %p41
        %p303 = pneg %p65
        %p304 = pneg %p62
        %p305 = pneg %p86
        %p306 = pneg %p83
        %p307 = pneg %p107
        %p308 = pneg %p104
        %p309 = pneg %p128
        %p310 = pneg %p125
        %p311 = pneg %p149
        %p312 = pneg %p146
        %p313 = pneg %p170
        %p314 = pneg %p167
        %p315 = pneg %p191
        %p316 = pneg %p188
        %p317 = pneg %p212
        %p318 = pneg %p209
        %p319 = pneg %p238
        %p320 = pneg %p235
        %s321 = sand.u32 %s225, 1
        %s322 = scalar_lea.sflag [#allocation3], %s321
        %s323 = sand.u32 %s225, 1
        %s324 = smul.addr %s323, 8
        %s325 = scalar_lea.vmem [#allocation2], %s324
        %p326 = scmp.lt.s32.totalorder %s23, 1
        %s327 = scalar_select %p326, %s23, 1
        %s328 = smul.addr %s327, 48
        %s329 = smul.addr %s328, 4
        %s330 = scalar_lea.vmem %s0, %s329
        %v332 = vld [vmem:[%s330] sm:$0xf]
        %v333 = vld [vmem:[%s330 + $0x4] sm:$0xf]
        %v334 = vld [vmem:[%s330 + $0x8] sm:$0xf]
        %v335 = vld [vmem:[%s330 + $0xc] sm:$0xf]
        %v336 = vld [vmem:[%s330 + $0x10] sm:$0xf]
        %v337 = vld [vmem:[%s330 + $0x14] sm:$0xf]
        %v338 = vld [vmem:[%s330 + $0x18] sm:$0xf]
        %v339 = vld [vmem:[%s330 + $0x1c] sm:$0xf]
        %v340 = vld [vmem:[%s330 + $0x20] sm:$0xf]
        %v341 = vld [vmem:[%s330 + $0x24] sm:$0xf]
        %v342 = vld [vmem:[%s330 + $0x28] sm:$0xf]
        %v343 = vld [vmem:[%s330 + $0x2c] sm:$0xf]
        %v344 = vld [vmem:[%s330 + $0x30] sm:$0xf]
        %v345 = vld [vmem:[%s330 + $0x34] sm:$0xf]
        %v346 = vld [vmem:[%s330 + $0x38] sm:$0xf]
        %v347 = vld [vmem:[%s330 + $0x3c] sm:$0xf]
        %v348 = vld [vmem:[%s330 + $0x40] sm:$0xf]
        %v349 = vld [vmem:[%s330 + $0x44] sm:$0xf]
        %v350 = vld [vmem:[%s330 + $0x48] sm:$0xf]
        %v351 = vld [vmem:[%s330 + $0x4c] sm:$0xf]
        %v352 = vld [vmem:[%s330 + $0x50] sm:$0xf]
        %v353 = vld [vmem:[%s330 + $0x54] sm:$0xf]
        %v354 = vld [vmem:[%s330 + $0x58] sm:$0xf]
        %v355 = vld [vmem:[%s330 + $0x5c] sm:$0xf]
        %v356 = vld [vmem:[%s330 + $0x60] sm:$0xf]
        %v357 = vld [vmem:[%s330 + $0x64] sm:$0xf]
        %v358 = vld [vmem:[%s330 + $0x68] sm:$0xf]
        %v359 = vld [vmem:[%s330 + $0x6c] sm:$0xf]
        %v360 = vld [vmem:[%s330 + $0x70] sm:$0xf]
        %v361 = vld [vmem:[%s330 + $0x74] sm:$0xf]
        %v362 = vld [vmem:[%s330 + $0x78] sm:$0xf]
        %v363 = vld [vmem:[%s330 + $0x7c] sm:$0xf]
        %v364 = vld [vmem:[%s330 + $0x80] sm:$0xf]
        %v365 = vld [vmem:[%s330 + $0x84] sm:$0xf]
        %v366 = vld [vmem:[%s330 + $0x88] sm:$0xf]
        %v367 = vld [vmem:[%s330 + $0x8c] sm:$0xf]
        %v368 = vld [vmem:[%s330 + $0x90] sm:$0xf]
        %v369 = vld [vmem:[%s330 + $0x94] sm:$0xf]
        %v370 = vld [vmem:[%s330 + $0x98] sm:$0xf]
        %v371 = vld [vmem:[%s330 + $0x9c] sm:$0xf]
        %v372 = vld [vmem:[%s330 + $0xa0] sm:$0xf]
        %v373 = vld [vmem:[%s330 + $0xa4] sm:$0xf]
        %v374 = vld [vmem:[%s330 + $0xa8] sm:$0xf]
        %v375 = vld [vmem:[%s330 + $0xac] sm:$0xf]
        %v376 = vld [vmem:[%s330 + $0xb0] sm:$0xf]
        %v377 = vld [vmem:[%s330 + $0xb4] sm:$0xf]
        %v378 = vld [vmem:[%s330 + $0xb8] sm:$0xf]
        %v379 = vld [vmem:[%s330 + $0xbc] sm:$0xf]
        %v380 = vld [vmem:[%s1] sm:$0xff]
        %v381 = vld [vmem:[%s1 + $0x8] sm:$0xff]
        %v382 = vld [vmem:[%s1 + $0x10] sm:$0xff]
        %v383 = vld [vmem:[%s1 + $0x18] sm:$0xff]
        %v384 = vld [vmem:[%s1 + $0x20] sm:$0xff]
        %v385 = vld [vmem:[%s1 + $0x28] sm:$0xff]
        %v386 = vld [vmem:[%s1 + $0x30] sm:$0xff]
        %v387 = vld [vmem:[%s1 + $0x38] sm:$0xff]
        %v388 = vld [vmem:[%s1 + $0x40] sm:$0xff]
        %v389 = vld [vmem:[%s1 + $0x48] sm:$0xff]
        %v390 = vld [vmem:[%s1 + $0x50] sm:$0xff]
        %v391 = vld [vmem:[%s1 + $0x58] sm:$0xff]
        %v392 = vld [vmem:[%s1 + $0x60] sm:$0xff]
        %v393 = vld [vmem:[%s1 + $0x68] sm:$0xff]
        %v394 = vld [vmem:[%s1 + $0x70] sm:$0xff]
        %v395 = vld [vmem:[%s1 + $0x78] sm:$0xff]
        %v444 = vunpack.c.l.b16 %v332
        %v445 = vunpack.c.l.b16 %v333
        %v446 = vunpack.c.l.b16 %v334
        %v447 = vunpack.c.l.b16 %v335
        %v448 = vunpack.c.l.b16 %v336
        %v449 = vunpack.c.l.b16 %v337
        %v450 = vunpack.c.l.b16 %v338
        %v451 = vunpack.c.l.b16 %v339
        %v452 = vunpack.c.l.b16 %v340
        %v453 = vunpack.c.l.b16 %v341
        %v454 = vunpack.c.l.b16 %v342
        %v455 = vunpack.c.l.b16 %v343
        %v456 = vunpack.c.l.b16 %v344
        %v457 = vunpack.c.l.b16 %v345
        %v458 = vunpack.c.l.b16 %v346
        %v459 = vunpack.c.l.b16 %v347
        %v460 = vunpack.c.l.b16 %v348
        %v461 = vunpack.c.l.b16 %v349
        %v462 = vunpack.c.l.b16 %v350
        %v463 = vunpack.c.l.b16 %v351
        %v464 = vunpack.c.l.b16 %v352
        %v465 = vunpack.c.l.b16 %v353
        %v466 = vunpack.c.l.b16 %v354
        %v467 = vunpack.c.l.b16 %v355
        %v468 = vunpack.c.l.b16 %v356
        %v469 = vunpack.c.l.b16 %v357
        %v470 = vunpack.c.l.b16 %v358
        %v471 = vunpack.c.l.b16 %v359
        %v472 = vunpack.c.l.b16 %v360
        %v473 = vunpack.c.l.b16 %v361
        %v474 = vunpack.c.l.b16 %v362
        %v475 = vunpack.c.l.b16 %v363
        %v476 = vunpack.c.l.b16 %v364
        %v477 = vunpack.c.l.b16 %v365
        %v478 = vunpack.c.l.b16 %v366
        %v479 = vunpack.c.l.b16 %v367
        %v480 = vunpack.c.l.b16 %v368
        %v481 = vunpack.c.l.b16 %v369
        %v482 = vunpack.c.l.b16 %v370
        %v483 = vunpack.c.l.b16 %v371
        %v484 = vunpack.c.l.b16 %v372
        %v485 = vunpack.c.l.b16 %v373
        %v486 = vunpack.c.l.b16 %v374
        %v487 = vunpack.c.l.b16 %v375
        %v488 = vunpack.c.l.b16 %v376
        %v489 = vunpack.c.l.b16 %v377
        %v490 = vunpack.c.l.b16 %v378
        %v491 = vunpack.c.l.b16 %v379
        %v492 = vpack.c.b16 %v445, %v444
        %v493 = vpack.c.b16 %v447, %v446
        %v494 = vpack.c.b16 %v449, %v448
        %v495 = vpack.c.b16 %v451, %v450
        %v496 = vpack.c.b16 %v453, %v452
        %v497 = vpack.c.b16 %v455, %v454
        %v498 = vpack.c.b16 %v457, %v456
        %v499 = vpack.c.b16 %v459, %v458
        %v500 = vpack.c.b16 %v461, %v460
        %v501 = vpack.c.b16 %v463, %v462
        %v502 = vpack.c.b16 %v465, %v464
        %v503 = vpack.c.b16 %v467, %v466
        %v504 = vpack.c.b16 %v469, %v468
        %v505 = vpack.c.b16 %v471, %v470
        %v506 = vpack.c.b16 %v473, %v472
        %v507 = vpack.c.b16 %v475, %v474
        %v508 = vpack.c.b16 %v477, %v476
        %v509 = vpack.c.b16 %v479, %v478
        %v510 = vpack.c.b16 %v481, %v480
        %v511 = vpack.c.b16 %v483, %v482
        %v512 = vpack.c.b16 %v485, %v484
        %v513 = vpack.c.b16 %v487, %v486
        %v514 = vpack.c.b16 %v489, %v488
        %v515 = vpack.c.b16 %v491, %v490
        %v556 = vunpack.c.l.b16 %v380
        %v557 = vunpack.c.h.b16 %v380
        %v558 = vunpack.c.l.b16 %v381
        %v559 = vunpack.c.h.b16 %v381
        %v560 = vunpack.c.l.b16 %v382
        %v561 = vunpack.c.h.b16 %v382
        %v562 = vunpack.c.l.b16 %v383
        %v563 = vunpack.c.h.b16 %v383
        %v564 = vunpack.c.l.b16 %v384
        %v565 = vunpack.c.h.b16 %v384
        %v566 = vunpack.c.l.b16 %v385
        %v567 = vunpack.c.h.b16 %v385
        %v568 = vunpack.c.l.b16 %v386
        %v569 = vunpack.c.h.b16 %v386
        %v570 = vunpack.c.l.b16 %v387
        %v571 = vunpack.c.h.b16 %v387
        %v572 = vunpack.c.l.b16 %v388
        %v573 = vunpack.c.h.b16 %v388
        %v574 = vunpack.c.l.b16 %v389
        %v575 = vunpack.c.h.b16 %v389
        %v576 = vunpack.c.l.b16 %v390
        %v577 = vunpack.c.h.b16 %v390
        %v578 = vunpack.c.l.b16 %v391
        %v579 = vunpack.c.h.b16 %v391
        %v580 = vunpack.c.l.b16 %v392
        %v581 = vunpack.c.h.b16 %v392
        %v582 = vunpack.c.l.b16 %v393
        %v583 = vunpack.c.h.b16 %v393
        %v584 = vunpack.c.l.b16 %v394
        %v585 = vunpack.c.h.b16 %v394
        %v586 = vunpack.c.l.b16 %v395
        %v587 = vunpack.c.h.b16 %v395
        %v588 = vpack.c.b16 %v558, %v556
        %v589 = vpack.c.b16 %v559, %v557
        %v590 = vpack.c.b16 %v562, %v560
        %v591 = vpack.c.b16 %v563, %v561
        %v592 = vpack.c.b16 %v566, %v564
        %v593 = vpack.c.b16 %v567, %v565
        %v594 = vpack.c.b16 %v570, %v568
        %v595 = vpack.c.b16 %v571, %v569
        %v596 = vpack.c.b16 %v574, %v572
        %v597 = vpack.c.b16 %v575, %v573
        %v598 = vpack.c.b16 %v578, %v576
        %v599 = vpack.c.b16 %v579, %v577
        %v600 = vpack.c.b16 %v582, %v580
        %v601 = vpack.c.b16 %v583, %v581
        %v602 = vpack.c.b16 %v586, %v584
        %v603 = vpack.c.b16 %v587, %v585
        %620 = vmatprep.subr.bf16.mxu0 %v589
        %621 = vmatpush1.bf16.msra.mxu0 %v588
        %622 = vmatprep.subr.bf16.mxu0 %v591
        %623 = vmatpush1.bf16.msra.mxu0 %v590
        %624 = vmatprep.subr.bf16.mxu0 %v593
        %625 = vmatpush1.bf16.msra.mxu0 %v592
        %626 = vmatprep.subr.bf16.mxu0 %v595
        %627 = vmatpush1.bf16.msra.mxu0 %v594
        %628 = vmatprep.subr.bf16.mxu0 %v597
        %629 = vmatpush1.bf16.msra.mxu0 %v596
        %630 = vmatprep.subr.bf16.mxu0 %v599
        %631 = vmatpush1.bf16.msra.mxu0 %v598
        %632 = vmatprep.subr.bf16.mxu0 %v601
        %633 = vmatpush1.bf16.msra.mxu0 %v600
        %634 = vmatprep.subr.bf16.mxu0 %v603
        %635 = vmatpush1.bf16.msra.mxu0 %v602
        %636 = vmatprep.subr.bf16.mxu0 0
        %637 = vmatpush1.bf16.msra.mxu0 0
        %638 = vmatprep.subr.bf16.mxu0 0
        %639 = vmatpush1.bf16.msra.mxu0 0
        %640 = vmatprep.subr.bf16.mxu0 0
        %641 = vmatpush1.bf16.msra.mxu0 0
        %642 = vmatprep.subr.bf16.mxu0 0
        %643 = vmatpush1.bf16.msra.mxu0 0
        %644 = vmatprep.subr.bf16.mxu0 0
        %645 = vmatpush1.bf16.msra.mxu0 0
        %646 = vmatprep.subr.bf16.mxu0 0
        %647 = vmatpush1.bf16.msra.mxu0 0
        %648 = vmatprep.subr.bf16.mxu0 0
        %649 = vmatpush1.bf16.msra.mxu0 0
        %650 = vmatprep.subr.bf16.mxu0 0
        %651 = vmatpush1.bf16.msra.mxu0 0
        %652 = vmatprep.mubr.bf16.mxu0 0
        %653 = vmatmul.mubr.bf16.gmra.mrb[0].mxu0 %v492
        %v654 = vpop.f32.mrb[0].mxu0
        %v655 = vadd.f32 0.0, %v654
        %v656 = vpop.f32.mrb[0].mxu0
        %v657 = vadd.f32 0.0, %v656
        %v658 = vpop.f32.mrb[0].mxu0
        %v659 = vadd.f32 0.0, %v658
        %v660 = vpop.f32.mrb[0].mxu0
        %v661 = vadd.f32 0.0, %v660
        %662 = vmatprep.mubr.bf16.mxu0 0
        %663 = vmatmul.mubr.bf16.gmra.mrb[0].mxu0 %v493
        %v664 = vpop.f32.mrb[0].mxu0
        %v665 = vadd.f32 0.0, %v664
        %v666 = vpop.f32.mrb[0].mxu0
        %v667 = vadd.f32 0.0, %v666
        %v668 = vpop.f32.mrb[0].mxu0
        %v669 = vadd.f32 0.0, %v668
        %v670 = vpop.f32.mrb[0].mxu0
        %v671 = vadd.f32 0.0, %v670
        %672 = vmatprep.mubr.bf16.mxu0 0
        %673 = vmatmul.mubr.bf16.gmra.mrb[0].mxu0 %v494
        %v674 = vpop.f32.mrb[0].mxu0
        %v675 = vadd.f32 0.0, %v674
        %v676 = vpop.f32.mrb[0].mxu0
        %v677 = vadd.f32 0.0, %v676
        %v678 = vpop.f32.mrb[0].mxu0
        %v679 = vadd.f32 0.0, %v678
        %v680 = vpop.f32.mrb[0].mxu0
        %v681 = vadd.f32 0.0, %v680
        %682 = vmatprep.mubr.bf16.mxu0 0
        %683 = vmatmul.mubr.bf16.gmra.mrb[0].mxu0 %v495
        %v684 = vpop.f32.mrb[0].mxu0
        %v685 = vadd.f32 0.0, %v684
        %v686 = vpop.f32.mrb[0].mxu0
        %v687 = vadd.f32 0.0, %v686
        %v688 = vpop.f32.mrb[0].mxu0
        %v689 = vadd.f32 0.0, %v688
        %v690 = vpop.f32.mrb[0].mxu0
        %v691 = vadd.f32 0.0, %v690
        %692 = vmatprep.mubr.bf16.mxu0 0
        %693 = vmatmul.mubr.bf16.gmra.mrb[0].mxu0 %v496
        %v694 = vpop.f32.mrb[0].mxu0
        %v695 = vadd.f32 0.0, %v694
        %v696 = vpop.f32.mrb[0].mxu0
        %v697 = vadd.f32 0.0, %v696
        %v698 = vpop.f32.mrb[0].mxu0
        %v699 = vadd.f32 0.0, %v698
        %v700 = vpop.f32.mrb[0].mxu0
        %v701 = vadd.f32 0.0, %v700
        %702 = vmatprep.mubr.bf16.mxu0 0
        %703 = vmatmul.mubr.bf16.gmra.mrb[0].mxu0 %v497
        %v704 = vpop.f32.mrb[0].mxu0
        %v705 = vadd.f32 0.0, %v704
        %v706 = vpop.f32.mrb[0].mxu0
        %v707 = vadd.f32 0.0, %v706
        %v708 = vpop.f32.mrb[0].mxu0
        %v709 = vadd.f32 0.0, %v708
        %v710 = vpop.f32.mrb[0].mxu0
        %v711 = vadd.f32 0.0, %v710
        %712 = vmatprep.mubr.bf16.mxu0 0
        %713 = vmatmul.mubr.bf16.gmra.mrb[0].mxu0 %v498
        %v714 = vpop.f32.mrb[0].mxu0
        %v715 = vadd.f32 0.0, %v714
        %v716 = vpop.f32.mrb[0].mxu0
        %v717 = vadd.f32 0.0, %v716
        %v718 = vpop.f32.mrb[0].mxu0
        %v719 = vadd.f32 0.0, %v718
        %v720 = vpop.f32.mrb[0].mxu0
        %v721 = vadd.f32 0.0, %v720
        %722 = vmatprep.mubr.bf16.mxu0 0
        %723 = vmatmul.mubr.bf16.gmra.mrb[0].mxu0 %v499
        %v724 = vpop.f32.mrb[0].mxu0
        %v725 = vadd.f32 0.0, %v724
        %v726 = vpop.f32.mrb[0].mxu0
        %v727 = vadd.f32 0.0, %v726
        %v728 = vpop.f32.mrb[0].mxu0
        %v729 = vadd.f32 0.0, %v728
        %v730 = vpop.f32.mrb[0].mxu0
        %v731 = vadd.f32 0.0, %v730
        %732 = vmatprep.mubr.bf16.mxu0 0
        %733 = vmatmul.mubr.bf16.gmra.mrb[0].mxu0 %v500
        %v734 = vpop.f32.mrb[0].mxu0
        %v735 = vadd.f32 0.0, %v734
        %v736 = vpop.f32.mrb[0].mxu0
        %v737 = vadd.f32 0.0, %v736
        %v738 = vpop.f32.mrb[0].mxu0
        %v739 = vadd.f32 0.0, %v738
        %v740 = vpop.f32.mrb[0].mxu0
        %v741 = vadd.f32 0.0, %v740
        %742 = vmatprep.mubr.bf16.mxu0 0
        %743 = vmatmul.mubr.bf16.gmra.mrb[0].mxu0 %v501
        %v744 = vpop.f32.mrb[0].mxu0
        %v745 = vadd.f32 0.0, %v744
        %v746 = vpop.f32.mrb[0].mxu0
        %v747 = vadd.f32 0.0, %v746
        %v748 = vpop.f32.mrb[0].mxu0
        %v749 = vadd.f32 0.0, %v748
        %v750 = vpop.f32.mrb[0].mxu0
        %v751 = vadd.f32 0.0, %v750
        %752 = vmatprep.mubr.bf16.mxu0 0
        %753 = vmatmul.mubr.bf16.gmra.mrb[0].mxu0 %v502
        %v754 = vpop.f32.mrb[0].mxu0
        %v755 = vadd.f32 0.0, %v754
        %v756 = vpop.f32.mrb[0].mxu0
        %v757 = vadd.f32 0.0, %v756
        %v758 = vpop.f32.mrb[0].mxu0
        %v759 = vadd.f32 0.0, %v758
        %v760 = vpop.f32.mrb[0].mxu0
        %v761 = vadd.f32 0.0, %v760
        %762 = vmatprep.mubr.bf16.mxu0 0
        %763 = vmatmul.mubr.bf16.gmra.mrb[0].mxu0 %v503
        %v764 = vpop.f32.mrb[0].mxu0
        %v765 = vadd.f32 0.0, %v764
        %v766 = vpop.f32.mrb[0].mxu0
        %v767 = vadd.f32 0.0, %v766
        %v768 = vpop.f32.mrb[0].mxu0
        %v769 = vadd.f32 0.0, %v768
        %v770 = vpop.f32.mrb[0].mxu0
        %v771 = vadd.f32 0.0, %v770
        %772 = vmatprep.mubr.bf16.mxu0 0
        %773 = vmatmul.mubr.bf16.gmra.mrb[0].mxu0 %v504
        %v774 = vpop.f32.mrb[0].mxu0
        %v775 = vadd.f32 0.0, %v774
        %v776 = vpop.f32.mrb[0].mxu0
        %v777 = vadd.f32 0.0, %v776
        %v778 = vpop.f32.mrb[0].mxu0
        %v779 = vadd.f32 0.0, %v778
        %v780 = vpop.f32.mrb[0].mxu0
        %v781 = vadd.f32 0.0, %v780
        %782 = vmatprep.mubr.bf16.mxu0 0
        %783 = vmatmul.mubr.bf16.gmra.mrb[0].mxu0 %v505
        %v784 = vpop.f32.mrb[0].mxu0
        %v785 = vadd.f32 0.0, %v784
        %v786 = vpop.f32.mrb[0].mxu0
        %v787 = vadd.f32 0.0, %v786
        %v788 = vpop.f32.mrb[0].mxu0
        %v789 = vadd.f32 0.0, %v788
        %v790 = vpop.f32.mrb[0].mxu0
        %v791 = vadd.f32 0.0, %v790
        %792 = vmatprep.mubr.bf16.mxu0 0
        %793 = vmatmul.mubr.bf16.gmra.mrb[0].mxu0 %v506
        %v794 = vpop.f32.mrb[0].mxu0
        %v795 = vadd.f32 0.0, %v794
        %v796 = vpop.f32.mrb[0].mxu0
        %v797 = vadd.f32 0.0, %v796
        %v798 = vpop.f32.mrb[0].mxu0
        %v799 = vadd.f32 0.0, %v798
        %v800 = vpop.f32.mrb[0].mxu0
        %v801 = vadd.f32 0.0, %v800
        %802 = vmatprep.mubr.bf16.mxu0 0
        %803 = vmatmul.mubr.bf16.gmra.mrb[0].mxu0 %v507
        %v804 = vpop.f32.mrb[0].mxu0
        %v805 = vadd.f32 0.0, %v804
        %v806 = vpop.f32.mrb[0].mxu0
        %v807 = vadd.f32 0.0, %v806
        %v808 = vpop.f32.mrb[0].mxu0
        %v809 = vadd.f32 0.0, %v808
        %v810 = vpop.f32.mrb[0].mxu0
        %v811 = vadd.f32 0.0, %v810
        %812 = vmatprep.mubr.bf16.mxu0 0
        %813 = vmatmul.mubr.bf16.gmra.mrb[0].mxu0 %v508
        %v814 = vpop.f32.mrb[0].mxu0
        %v815 = vadd.f32 0.0, %v814
        %v816 = vpop.f32.mrb[0].mxu0
        %v817 = vadd.f32 0.0, %v816
        %v818 = vpop.f32.mrb[0].mxu0
        %v819 = vadd.f32 0.0, %v818
        %v820 = vpop.f32.mrb[0].mxu0
        %v821 = vadd.f32 0.0, %v820
        %822 = vmatprep.mubr.bf16.mxu0 0
        %823 = vmatmul.mubr.bf16.gmra.mrb[0].mxu0 %v509
        %v824 = vpop.f32.mrb[0].mxu0
        %v825 = vadd.f32 0.0, %v824
        %v826 = vpop.f32.mrb[0].mxu0
        %v827 = vadd.f32 0.0, %v826
        %v828 = vpop.f32.mrb[0].mxu0
        %v829 = vadd.f32 0.0, %v828
        %v830 = vpop.f32.mrb[0].mxu0
        %v831 = vadd.f32 0.0, %v830
        %832 = vmatprep.mubr.bf16.mxu0 0
        %833 = vmatmul.mubr.bf16.gmra.mrb[0].mxu0 %v510
        %v834 = vpop.f32.mrb[0].mxu0
        %v835 = vadd.f32 0.0, %v834
        %v836 = vpop.f32.mrb[0].mxu0
        %v837 = vadd.f32 0.0, %v836
        %v838 = vpop.f32.mrb[0].mxu0
        %v839 = vadd.f32 0.0, %v838
        %v840 = vpop.f32.mrb[0].mxu0
        %v841 = vadd.f32 0.0, %v840
        %842 = vmatprep.mubr.bf16.mxu0 0
        %843 = vmatmul.mubr.bf16.gmra.mrb[0].mxu0 %v511
        %v844 = vpop.f32.mrb[0].mxu0
        %v845 = vadd.f32 0.0, %v844
        %v846 = vpop.f32.mrb[0].mxu0
        %v847 = vadd.f32 0.0, %v846
        %v848 = vpop.f32.mrb[0].mxu0
        %v849 = vadd.f32 0.0, %v848
        %v850 = vpop.f32.mrb[0].mxu0
        %v851 = vadd.f32 0.0, %v850
        %852 = vmatprep.mubr.bf16.mxu0 0
        %853 = vmatmul.mubr.bf16.gmra.mrb[0].mxu0 %v512
        %v854 = vpop.f32.mrb[0].mxu0
        %v855 = vadd.f32 0.0, %v854
        %v856 = vpop.f32.mrb[0].mxu0
        %v857 = vadd.f32 0.0, %v856
        %v858 = vpop.f32.mrb[0].mxu0
        %v859 = vadd.f32 0.0, %v858
        %v860 = vpop.f32.mrb[0].mxu0
        %v861 = vadd.f32 0.0, %v860
        %862 = vmatprep.mubr.bf16.mxu0 0
        %863 = vmatmul.mubr.bf16.gmra.mrb[0].mxu0 %v513
        %v864 = vpop.f32.mrb[0].mxu0
        %v865 = vadd.f32 0.0, %v864
        %v866 = vpop.f32.mrb[0].mxu0
        %v867 = vadd.f32 0.0, %v866
        %v868 = vpop.f32.mrb[0].mxu0
        %v869 = vadd.f32 0.0, %v868
        %v870 = vpop.f32.mrb[0].mxu0
        %v871 = vadd.f32 0.0, %v870
        %872 = vmatprep.mubr.bf16.mxu0 0
        %873 = vmatmul.mubr.bf16.gmra.mrb[0].mxu0 %v514
        %v874 = vpop.f32.mrb[0].mxu0
        %v875 = vadd.f32 0.0, %v874
        %v876 = vpop.f32.mrb[0].mxu0
        %v877 = vadd.f32 0.0, %v876
        %v878 = vpop.f32.mrb[0].mxu0
        %v879 = vadd.f32 0.0, %v878
        %v880 = vpop.f32.mrb[0].mxu0
        %v881 = vadd.f32 0.0, %v880
        %882 = vmatprep.mubr.bf16.mxu0 0
        %883 = vmatmul.mubr.bf16.gmra.mrb[0].mxu0 %v515
        %v884 = vpop.f32.mrb[0].mxu0
        %v885 = vadd.f32 0.0, %v884
        %v886 = vpop.f32.mrb[0].mxu0
        %v887 = vadd.f32 0.0, %v886
        %v888 = vpop.f32.mrb[0].mxu0
        %v889 = vadd.f32 0.0, %v888
        %v890 = vpop.f32.mrb[0].mxu0
        %v891 = vadd.f32 0.0, %v890
        %892 = vdwg.mxu0
        %v893 = vmax.f32 %v655, %v735
        %v894 = vmax.f32 %v657, %v737
        %v895 = vmax.f32 %v659, %v739
        %v896 = vmax.f32 %v661, %v741
        %v897 = vmax.f32 %v665, %v745
        %v898 = vmax.f32 %v667, %v747
        %v899 = vmax.f32 %v669, %v749
        %v900 = vmax.f32 %v671, %v751
        %v901 = vmax.f32 %v675, %v755
        %v902 = vmax.f32 %v677, %v757
        %v903 = vmax.f32 %v679, %v759
        %v904 = vmax.f32 %v681, %v761
        %v905 = vmax.f32 %v685, %v765
        %v906 = vmax.f32 %v687, %v767
        %v907 = vmax.f32 %v689, %v769
        %v908 = vmax.f32 %v691, %v771
        %v909 = vmax.f32 %v695, %v775
        %v910 = vmax.f32 %v697, %v777
        %v911 = vmax.f32 %v699, %v779
        %v912 = vmax.f32 %v701, %v781
        %v913 = vmax.f32 %v705, %v785
        %v914 = vmax.f32 %v707, %v787
        %v915 = vmax.f32 %v709, %v789
        %v916 = vmax.f32 %v711, %v791
        %v917 = vmax.f32 %v715, %v795
        %v918 = vmax.f32 %v717, %v797
        %v919 = vmax.f32 %v719, %v799
        %v920 = vmax.f32 %v721, %v801
        %v921 = vmax.f32 %v725, %v805
        %v922 = vmax.f32 %v727, %v807
        %v923 = vmax.f32 %v729, %v809
        %v924 = vmax.f32 %v731, %v811
        %v925 = vmax.f32 %v893, %v815
        %v926 = vmax.f32 %v894, %v817
        %v927 = vmax.f32 %v895, %v819
        %v928 = vmax.f32 %v896, %v821
        %v929 = vmax.f32 %v897, %v825
        %v930 = vmax.f32 %v898, %v827
        %v931 = vmax.f32 %v899, %v829
        %v932 = vmax.f32 %v900, %v831
        %v933 = vmax.f32 %v901, %v835
        %v934 = vmax.f32 %v902, %v837
        %v935 = vmax.f32 %v903, %v839
        %v936 = vmax.f32 %v904, %v841
        %v937 = vmax.f32 %v905, %v845
        %v938 = vmax.f32 %v906, %v847
        %v939 = vmax.f32 %v907, %v849
        %v940 = vmax.f32 %v908, %v851
        %v941 = vmax.f32 %v909, %v855
        %v942 = vmax.f32 %v910, %v857
        %v943 = vmax.f32 %v911, %v859
        %v944 = vmax.f32 %v912, %v861
        %v945 = vmax.f32 %v913, %v865
        %v946 = vmax.f32 %v914, %v867
        %v947 = vmax.f32 %v915, %v869
        %v948 = vmax.f32 %v916, %v871
        %v949 = vmax.f32 %v917, %v875
        %v950 = vmax.f32 %v918, %v877
        %v951 = vmax.f32 %v919, %v879
        %v952 = vmax.f32 %v920, %v881
        %v953 = vmax.f32 %v921, %v885
        %v954 = vmax.f32 %v922, %v887
        %v955 = vmax.f32 %v923, %v889
        %v956 = vmax.f32 %v924, %v891
        %v957 = vld [vmem:[%s2] sm:$0x3]
        %v959 = vlaneseq
        %v960 = vshrl.u32 %v959, 7
        %v961 = vsub.s32 0, %v960
        %v962 = vrot.slane %v957, %v961
        %v963 = vlaneseq
        %v964 = vshrl.u32 %v963, 7
        %v965 = vsub.s32 1, %v964
        %v966 = vrot.slane %v957, %v965
        %v969 = vadd.f32 %v925, %v962
        %v970 = vadd.f32 %v926, %v966
        %v971 = vadd.f32 %v927, %v962
        %v972 = vadd.f32 %v928, %v966
        %v973 = vadd.f32 %v929, %v962
        %v974 = vadd.f32 %v930, %v966
        %v975 = vadd.f32 %v931, %v962
        %v976 = vadd.f32 %v932, %v966
        %v977 = vadd.f32 %v933, %v962
        %v978 = vadd.f32 %v934, %v966
        %v979 = vadd.f32 %v935, %v962
        %v980 = vadd.f32 %v936, %v966
        %v981 = vadd.f32 %v937, %v962
        %v982 = vadd.f32 %v938, %v966
        %v983 = vadd.f32 %v939, %v962
        %v984 = vadd.f32 %v940, %v966
        %v985 = vadd.f32 %v941, %v962
        %v986 = vadd.f32 %v942, %v966
        %v987 = vadd.f32 %v943, %v962
        %v988 = vadd.f32 %v944, %v966
        %v989 = vadd.f32 %v945, %v962
        %v990 = vadd.f32 %v946, %v966
        %v991 = vadd.f32 %v947, %v962
        %v992 = vadd.f32 %v948, %v966
        %v993 = vadd.f32 %v949, %v962
        %v994 = vadd.f32 %v950, %v966
        %v995 = vadd.f32 %v951, %v962
        %v996 = vadd.f32 %v952, %v966
        %v997 = vadd.f32 %v953, %v962
        %v998 = vadd.f32 %v954, %v966
        %v999 = vadd.f32 %v955, %v962
        %v1000 = vadd.f32 %v956, %v966
        %v1001 = vmax.f32 %v969, 0.0
        %v1002 = vmax.f32 %v970, 0.0
        %v1003 = vmax.f32 %v971, 0.0
        %v1004 = vmax.f32 %v972, 0.0
        %v1005 = vmax.f32 %v973, 0.0
        %v1006 = vmax.f32 %v974, 0.0
        %v1007 = vmax.f32 %v975, 0.0
        %v1008 = vmax.f32 %v976, 0.0
        %v1009 = vmax.f32 %v977, 0.0
        %v1010 = vmax.f32 %v978, 0.0
        %v1011 = vmax.f32 %v979, 0.0
        %v1012 = vmax.f32 %v980, 0.0
        %v1013 = vmax.f32 %v981, 0.0
        %v1014 = vmax.f32 %v982, 0.0
        %v1015 = vmax.f32 %v983, 0.0
        %v1016 = vmax.f32 %v984, 0.0
        %v1017 = vmax.f32 %v985, 0.0
        %v1018 = vmax.f32 %v986, 0.0
        %v1019 = vmax.f32 %v987, 0.0
        %v1020 = vmax.f32 %v988, 0.0
        %v1021 = vmax.f32 %v989, 0.0
        %v1022 = vmax.f32 %v990, 0.0
        %v1023 = vmax.f32 %v991, 0.0
        %v1024 = vmax.f32 %v992, 0.0
        %v1025 = vmax.f32 %v993, 0.0
        %v1026 = vmax.f32 %v994, 0.0
        %v1027 = vmax.f32 %v995, 0.0
        %v1028 = vmax.f32 %v996, 0.0
        %v1029 = vmax.f32 %v997, 0.0
        %v1030 = vmax.f32 %v998, 0.0
        %v1031 = vmax.f32 %v999, 0.0
        %v1032 = vmax.f32 %v1000, 0.0
        %v1033 = vpack.c.bf16 %v1003, %v1001
        %v1034 = vpack.c.bf16 %v1004, %v1002
        %v1035 = vpack.c.bf16 %v1007, %v1005
        %v1036 = vpack.c.bf16 %v1008, %v1006
        %v1037 = vpack.c.bf16 %v1011, %v1009
        %v1038 = vpack.c.bf16 %v1012, %v1010
        %v1039 = vpack.c.bf16 %v1015, %v1013
        %v1040 = vpack.c.bf16 %v1016, %v1014
        %v1041 = vpack.c.bf16 %v1019, %v1017
        %v1042 = vpack.c.bf16 %v1020, %v1018
        %v1043 = vpack.c.bf16 %v1023, %v1021
        %v1044 = vpack.c.bf16 %v1024, %v1022
        %v1045 = vpack.c.bf16 %v1027, %v1025
        %v1046 = vpack.c.bf16 %v1028, %v1026
        %v1047 = vpack.c.bf16 %v1031, %v1029
        %v1048 = vpack.c.bf16 %v1032, %v1030
        %v1049 = vld [vmem:[%s3] sm:$0xf]
        %v1050 = vld [vmem:[%s3 + $0x4] sm:$0xf]
        %v1051 = vld [vmem:[%s3 + $0x8] sm:$0xf]
        %v1052 = vld [vmem:[%s3 + $0xc] sm:$0xf]
        %v1053 = vld [vmem:[%s3 + $0x10] sm:$0xf]
        %v1054 = vld [vmem:[%s3 + $0x14] sm:$0xf]
        %v1055 = vld [vmem:[%s3 + $0x18] sm:$0xf]
        %v1056 = vld [vmem:[%s3 + $0x1c] sm:$0xf]
        %v1057 = vld [vmem:[%s3 + $0x20] sm:$0xf]
        %v1058 = vld [vmem:[%s3 + $0x24] sm:$0xf]
        %v1059 = vld [vmem:[%s3 + $0x28] sm:$0xf]
        %v1060 = vld [vmem:[%s3 + $0x2c] sm:$0xf]
        %v1061 = vld [vmem:[%s3 + $0x30] sm:$0xf]
        %v1062 = vld [vmem:[%s3 + $0x34] sm:$0xf]
        %v1063 = vld [vmem:[%s3 + $0x38] sm:$0xf]
        %v1064 = vld [vmem:[%s3 + $0x3c] sm:$0xf]
        %v1065 = vld [vmem:[%s3 + $0x40] sm:$0xf]
        %v1066 = vld [vmem:[%s3 + $0x44] sm:$0xf]
        %v1067 = vld [vmem:[%s3 + $0x48] sm:$0xf]
        %v1068 = vld [vmem:[%s3 + $0x4c] sm:$0xf]
        %v1069 = vld [vmem:[%s3 + $0x50] sm:$0xf]
        %v1070 = vld [vmem:[%s3 + $0x54] sm:$0xf]
        %v1071 = vld [vmem:[%s3 + $0x58] sm:$0xf]
        %v1072 = vld [vmem:[%s3 + $0x5c] sm:$0xf]
        %v1073 = vld [vmem:[%s3 + $0x60] sm:$0xf]
        %v1074 = vld [vmem:[%s3 + $0x64] sm:$0xf]
        %v1075 = vld [vmem:[%s3 + $0x68] sm:$0xf]
        %v1076 = vld [vmem:[%s3 + $0x6c] sm:$0xf]
        %v1077 = vld [vmem:[%s3 + $0x70] sm:$0xf]
        %v1078 = vld [vmem:[%s3 + $0x74] sm:$0xf]
        %v1079 = vld [vmem:[%s3 + $0x78] sm:$0xf]
        %v1080 = vld [vmem:[%s3 + $0x7c] sm:$0xf]
        %s1081 = scalar_lea.vmem %s3, 128
        %v1082 = vld [vmem:[%s1081] sm:$0xf]
        %v1083 = vld [vmem:[%s1081 + $0x4] sm:$0xf]
        %v1084 = vld [vmem:[%s1081 + $0x8] sm:$0xf]
        %v1085 = vld [vmem:[%s1081 + $0xc] sm:$0xf]
        %v1086 = vld [vmem:[%s1081 + $0x10] sm:$0xf]
        %v1087 = vld [vmem:[%s1081 + $0x14] sm:$0xf]
        %v1088 = vld [vmem:[%s1081 + $0x18] sm:$0xf]
        %v1089 = vld [vmem:[%s1081 + $0x1c] sm:$0xf]
        %v1090 = vld [vmem:[%s1081 + $0x20] sm:$0xf]
        %v1091 = vld [vmem:[%s1081 + $0x24] sm:$0xf]
        %v1092 = vld [vmem:[%s1081 + $0x28] sm:$0xf]
        %v1093 = vld [vmem:[%s1081 + $0x2c] sm:$0xf]
        %v1094 = vld [vmem:[%s1081 + $0x30] sm:$0xf]
        %v1095 = vld [vmem:[%s1081 + $0x34] sm:$0xf]
        %v1096 = vld [vmem:[%s1081 + $0x38] sm:$0xf]
        %v1097 = vld [vmem:[%s1081 + $0x3c] sm:$0xf]
        %v1098 = vld [vmem:[%s1081 + $0x40] sm:$0xf]
        %v1099 = vld [vmem:[%s1081 + $0x44] sm:$0xf]
        %v1100 = vld [vmem:[%s1081 + $0x48] sm:$0xf]
        %v1101 = vld [vmem:[%s1081 + $0x4c] sm:$0xf]
        %v1102 = vld [vmem:[%s1081 + $0x50] sm:$0xf]
        %v1103 = vld [vmem:[%s1081 + $0x54] sm:$0xf]
        %v1104 = vld [vmem:[%s1081 + $0x58] sm:$0xf]
        %v1105 = vld [vmem:[%s1081 + $0x5c] sm:$0xf]
        %v1106 = vld [vmem:[%s1081 + $0x60] sm:$0xf]
        %v1107 = vld [vmem:[%s1081 + $0x64] sm:$0xf]
        %v1108 = vld [vmem:[%s1081 + $0x68] sm:$0xf]
        %v1109 = vld [vmem:[%s1081 + $0x6c] sm:$0xf]
        %v1110 = vld [vmem:[%s1081 + $0x70] sm:$0xf]
        %v1111 = vld [vmem:[%s1081 + $0x74] sm:$0xf]
        %v1112 = vld [vmem:[%s1081 + $0x78] sm:$0xf]
        %v1113 = vld [vmem:[%s1081 + $0x7c] sm:$0xf]
        %vm1130 = vcmask 1043456
        %v1131 = vrot.slane %v1033, 4
        %v1132 = vrot.slane %v1035, 4
        %v1133 = vsel %vm1130, %v1131, %v1132
        %v1134 = vrot.slane %v1034, 4
        %v1135 = vrot.slane %v1036, 4
        %v1136 = vsel %vm1130, %v1134, %v1135
        %v1137 = vrot.slane %v1037, 4
        %v1138 = vsel %vm1130, %v1132, %v1137
        %v1139 = vrot.slane %v1038, 4
        %v1140 = vsel %vm1130, %v1135, %v1139
        %v1141 = vrot.slane %v1039, 4
        %v1142 = vsel %vm1130, %v1137, %v1141
        %v1143 = vrot.slane %v1040, 4
        %v1144 = vsel %vm1130, %v1139, %v1143
        %v1145 = vrot.slane %v1041, 4
        %v1146 = vsel %vm1130, %v1141, %v1145
        %v1147 = vrot.slane %v1042, 4
        %v1148 = vsel %vm1130, %v1143, %v1147
        %v1149 = vrot.slane %v1043, 4
        %v1150 = vsel %vm1130, %v1145, %v1149
        %v1151 = vrot.slane %v1044, 4
        %v1152 = vsel %vm1130, %v1147, %v1151
        %v1153 = vrot.slane %v1045, 4
        %v1154 = vsel %vm1130, %v1149, %v1153
        %v1155 = vrot.slane %v1046, 4
        %v1156 = vsel %vm1130, %v1151, %v1155
        %v1157 = vrot.slane %v1047, 4
        %v1158 = vsel %vm1130, %v1153, %v1157
        %v1159 = vrot.slane %v1048, 4
        %v1160 = vsel %vm1130, %v1155, %v1159
        %v1207 = vunpack.c.l.b16 %v1082
        %v1208 = vunpack.c.l.b16 %v1083
        %v1209 = vunpack.c.l.b16 %v1084
        %v1210 = vunpack.c.l.b16 %v1085
        %v1211 = vunpack.c.l.b16 %v1086
        %v1212 = vunpack.c.l.b16 %v1087
        %v1213 = vunpack.c.l.b16 %v1088
        %v1214 = vunpack.c.l.b16 %v1089
        %v1215 = vunpack.c.l.b16 %v1090
        %v1216 = vunpack.c.l.b16 %v1091
        %v1217 = vunpack.c.l.b16 %v1092
        %v1218 = vunpack.c.l.b16 %v1093
        %v1219 = vunpack.c.l.b16 %v1094
        %v1220 = vunpack.c.l.b16 %v1095
        %v1221 = vunpack.c.l.b16 %v1096
        %v1222 = vunpack.c.l.b16 %v1097
        %v1223 = vunpack.c.l.b16 %v1098
        %v1224 = vunpack.c.l.b16 %v1099
        %v1225 = vunpack.c.l.b16 %v1100
        %v1226 = vunpack.c.l.b16 %v1101
        %v1227 = vunpack.c.l.b16 %v1102
        %v1228 = vunpack.c.l.b16 %v1103
        %v1229 = vunpack.c.l.b16 %v1104
        %v1230 = vunpack.c.l.b16 %v1105
        %v1231 = vunpack.c.l.b16 %v1106
        %v1232 = vunpack.c.l.b16 %v1107
        %v1233 = vunpack.c.l.b16 %v1108
        %v1234 = vunpack.c.l.b16 %v1109
        %v1235 = vunpack.c.l.b16 %v1110
        %v1236 = vunpack.c.l.b16 %v1111
        %v1237 = vunpack.c.l.b16 %v1112
        %v1238 = vunpack.c.l.b16 %v1113
        %v1239 = vpack.c.b16 %v1208, %v1207
        %v1240 = vpack.c.b16 %v1210, %v1209
        %v1241 = vpack.c.b16 %v1212, %v1211
        %v1242 = vpack.c.b16 %v1214, %v1213
        %v1243 = vpack.c.b16 %v1216, %v1215
        %v1244 = vpack.c.b16 %v1218, %v1217
        %v1245 = vpack.c.b16 %v1220, %v1219
        %v1246 = vpack.c.b16 %v1222, %v1221
        %v1247 = vpack.c.b16 %v1224, %v1223
        %v1248 = vpack.c.b16 %v1226, %v1225
        %v1249 = vpack.c.b16 %v1228, %v1227
        %v1250 = vpack.c.b16 %v1230, %v1229
        %v1251 = vpack.c.b16 %v1232, %v1231
        %v1252 = vpack.c.b16 %v1234, %v1233
        %v1253 = vpack.c.b16 %v1236, %v1235
        %v1254 = vpack.c.b16 %v1238, %v1237
        %1271 = vmatprep.subr.bf16.mxu0 0
        %1272 = vmatpush1.bf16.msra.mxu0 %v1239
        %1273 = vmatprep.subr.bf16.mxu0 0
        %1274 = vmatpush1.bf16.msra.mxu0 %v1240
        %1275 = vmatprep.subr.bf16.mxu0 0
        %1276 = vmatpush1.bf16.msra.mxu0 %v1241
        %1277 = vmatprep.subr.bf16.mxu0 0
        %1278 = vmatpush1.bf16.msra.mxu0 %v1242
        %1279 = vmatprep.subr.bf16.mxu0 0
        %1280 = vmatpush1.bf16.msra.mxu0 %v1243
        %1281 = vmatprep.subr.bf16.mxu0 0
        %1282 = vmatpush1.bf16.msra.mxu0 %v1244
        %1283 = vmatprep.subr.bf16.mxu0 0
        %1284 = vmatpush1.bf16.msra.mxu0 %v1245
        %1285 = vmatprep.subr.bf16.mxu0 0
        %1286 = vmatpush1.bf16.msra.mxu0 %v1246
        %1287 = vmatprep.subr.bf16.mxu0 0
        %1288 = vmatpush1.bf16.msra.mxu0 %v1247
        %1289 = vmatprep.subr.bf16.mxu0 0
        %1290 = vmatpush1.bf16.msra.mxu0 %v1248
        %1291 = vmatprep.subr.bf16.mxu0 0
        %1292 = vmatpush1.bf16.msra.mxu0 %v1249
        %1293 = vmatprep.subr.bf16.mxu0 0
        %1294 = vmatpush1.bf16.msra.mxu0 %v1250
        %1295 = vmatprep.subr.bf16.mxu0 0
        %1296 = vmatpush1.bf16.msra.mxu0 %v1251
        %1297 = vmatprep.subr.bf16.mxu0 0
        %1298 = vmatpush1.bf16.msra.mxu0 %v1252
        %1299 = vmatprep.subr.bf16.mxu0 0
        %1300 = vmatpush1.bf16.msra.mxu0 %v1253
        %1301 = vmatprep.subr.bf16.mxu0 0
        %1302 = vmatpush1.bf16.msra.mxu0 %v1254
        %1303 = vmatprep.mubr.bf16.mxu0 %v1136
        %1304 = vmatmul.mubr.bf16.gmra.mrb[0].mxu0 %v1133
        %v1305 = vpop.f32.mrb[0].mxu0
        %v1306 = vadd.f32 0.0, %v1305
        %v1307 = vpop.f32.mrb[0].mxu0
        %v1308 = vpop.f32.mrb[0].mxu0
        %v1309 = vadd.f32 0.0, %v1308
        %v1310 = vpop.f32.mrb[0].mxu0
        %1311 = vmatprep.mubr.bf16.mxu0 %v1140
        %1312 = vmatmul.mubr.bf16.gmra.mrb[0].mxu0 %v1138
        %v1313 = vpop.f32.mrb[0].mxu0
        %v1314 = vadd.f32 0.0, %v1313
        %v1315 = vpop.f32.mrb[0].mxu0
        %v1316 = vpop.f32.mrb[0].mxu0
        %v1317 = vadd.f32 0.0, %v1316
        %v1318 = vpop.f32.mrb[0].mxu0
        %1319 = vmatprep.mubr.bf16.mxu0 %v1144
        %1320 = vmatmul.mubr.bf16.gmra.mrb[0].mxu0 %v1142
        %v1321 = vpop.f32.mrb[0].mxu0
        %v1322 = vadd.f32 0.0, %v1321
        %v1323 = vpop.f32.mrb[0].mxu0
        %v1324 = vpop.f32.mrb[0].mxu0
        %v1325 = vadd.f32 0.0, %v1324
        %v1326 = vpop.f32.mrb[0].mxu0
        %1327 = vmatprep.mubr.bf16.mxu0 %v1148
        %1328 = vmatmul.mubr.bf16.gmra.mrb[0].mxu0 %v1146
        %v1329 = vpop.f32.mrb[0].mxu0
        %v1330 = vadd.f32 0.0, %v1329
        %v1331 = vpop.f32.mrb[0].mxu0
        %v1332 = vpop.f32.mrb[0].mxu0
        %v1333 = vadd.f32 0.0, %v1332
        %v1334 = vpop.f32.mrb[0].mxu0
        %1335 = vmatprep.mubr.bf16.mxu0 %v1152
        %1336 = vmatmul.mubr.bf16.gmra.mrb[0].mxu0 %v1150
        %v1337 = vpop.f32.mrb[0].mxu0
        %v1338 = vadd.f32 0.0, %v1337
        %v1339 = vpop.f32.mrb[0].mxu0
        %v1340 = vpop.f32.mrb[0].mxu0
        %v1341 = vadd.f32 0.0, %v1340
        %v1342 = vpop.f32.mrb[0].mxu0
        %1343 = vmatprep.mubr.bf16.mxu0 %v1156
        %1344 = vmatmul.mubr.bf16.gmra.mrb[0].mxu0 %v1154
        %v1345 = vpop.f32.mrb[0].mxu0
        %v1346 = vadd.f32 0.0, %v1345
        %v1347 = vpop.f32.mrb[0].mxu0
        %v1348 = vpop.f32.mrb[0].mxu0
        %v1349 = vadd.f32 0.0, %v1348
        %v1350 = vpop.f32.mrb[0].mxu0
        %1351 = vmatprep.mubr.bf16.mxu0 %v1160
        %1352 = vmatmul.mubr.bf16.gmra.mrb[0].mxu0 %v1158
        %v1353 = vpop.f32.mrb[0].mxu0
        %v1354 = vadd.f32 0.0, %v1353
        %v1355 = vpop.f32.mrb[0].mxu0
        %v1356 = vpop.f32.mrb[0].mxu0
        %v1357 = vadd.f32 0.0, %v1356
        %v1358 = vpop.f32.mrb[0].mxu0
        %1359 = vdwg.mxu0
        %v1392 = vunpack.c.l.b16 %v1049
        %v1393 = vunpack.c.l.b16 %v1050
        %v1394 = vunpack.c.l.b16 %v1051
        %v1395 = vunpack.c.l.b16 %v1052
        %v1396 = vunpack.c.l.b16 %v1053
        %v1397 = vunpack.c.l.b16 %v1054
        %v1398 = vunpack.c.l.b16 %v1055
        %v1399 = vunpack.c.l.b16 %v1056
        %v1400 = vunpack.c.l.b16 %v1057
        %v1401 = vunpack.c.l.b16 %v1058
        %v1402 = vunpack.c.l.b16 %v1059
        %v1403 = vunpack.c.l.b16 %v1060
        %v1404 = vunpack.c.l.b16 %v1061
        %v1405 = vunpack.c.l.b16 %v1062
        %v1406 = vunpack.c.l.b16 %v1063
        %v1407 = vunpack.c.l.b16 %v1064
        %v1408 = vunpack.c.l.b16 %v1065
        %v1409 = vunpack.c.l.b16 %v1066
        %v1410 = vunpack.c.l.b16 %v1067
        %v1411 = vunpack.c.l.b16 %v1068
        %v1412 = vunpack.c.l.b16 %v1069
        %v1413 = vunpack.c.l.b16 %v1070
        %v1414 = vunpack.c.l.b16 %v1071
        %v1415 = vunpack.c.l.b16 %v1072
        %v1416 = vunpack.c.l.b16 %v1073
        %v1417 = vunpack.c.l.b16 %v1074
        %v1418 = vunpack.c.l.b16 %v1075
        %v1419 = vunpack.c.l.b16 %v1076
        %v1420 = vunpack.c.l.b16 %v1077
        %v1421 = vunpack.c.l.b16 %v1078
        %v1422 = vunpack.c.l.b16 %v1079
        %v1423 = vunpack.c.l.b16 %v1080
        %v1424 = vpack.c.b16 %v1393, %v1392
        %v1425 = vpack.c.b16 %v1395, %v1394
        %v1426 = vpack.c.b16 %v1397, %v1396
        %v1427 = vpack.c.b16 %v1399, %v1398
        %v1428 = vpack.c.b16 %v1401, %v1400
        %v1429 = vpack.c.b16 %v1403, %v1402
        %v1430 = vpack.c.b16 %v1405, %v1404
        %v1431 = vpack.c.b16 %v1407, %v1406
        %v1432 = vpack.c.b16 %v1409, %v1408
        %v1433 = vpack.c.b16 %v1411, %v1410
        %v1434 = vpack.c.b16 %v1413, %v1412
        %v1435 = vpack.c.b16 %v1415, %v1414
        %v1436 = vpack.c.b16 %v1417, %v1416
        %v1437 = vpack.c.b16 %v1419, %v1418
        %v1438 = vpack.c.b16 %v1421, %v1420
        %v1439 = vpack.c.b16 %v1423, %v1422
        %1456 = vmatprep.subr.bf16.mxu0 0
        %1457 = vmatpush1.bf16.msra.mxu0 %v1424
        %1458 = vmatprep.subr.bf16.mxu0 0
        %1459 = vmatpush1.bf16.msra.mxu0 %v1425
        %1460 = vmatprep.subr.bf16.mxu0 0
        %1461 = vmatpush1.bf16.msra.mxu0 %v1426
        %1462 = vmatprep.subr.bf16.mxu0 0
        %1463 = vmatpush1.bf16.msra.mxu0 %v1427
        %1464 = vmatprep.subr.bf16.mxu0 0
        %1465 = vmatpush1.bf16.msra.mxu0 %v1428
        %1466 = vmatprep.subr.bf16.mxu0 0
        %1467 = vmatpush1.bf16.msra.mxu0 %v1429
        %1468 = vmatprep.subr.bf16.mxu0 0
        %1469 = vmatpush1.bf16.msra.mxu0 %v1430
        %1470 = vmatprep.subr.bf16.mxu0 0
        %1471 = vmatpush1.bf16.msra.mxu0 %v1431
        %1472 = vmatprep.subr.bf16.mxu0 0
        %1473 = vmatpush1.bf16.msra.mxu0 %v1432
        %1474 = vmatprep.subr.bf16.mxu0 0
        %1475 = vmatpush1.bf16.msra.mxu0 %v1433
        %1476 = vmatprep.subr.bf16.mxu0 0
        %1477 = vmatpush1.bf16.msra.mxu0 %v1434
        %1478 = vmatprep.subr.bf16.mxu0 0
        %1479 = vmatpush1.bf16.msra.mxu0 %v1435
        %1480 = vmatprep.subr.bf16.mxu0 0
        %1481 = vmatpush1.bf16.msra.mxu0 %v1436
        %1482 = vmatprep.subr.bf16.mxu0 0
        %1483 = vmatpush1.bf16.msra.mxu0 %v1437
        %1484 = vmatprep.subr.bf16.mxu0 0
        %1485 = vmatpush1.bf16.msra.mxu0 %v1438
        %1486 = vmatprep.subr.bf16.mxu0 0
        %1487 = vmatpush1.bf16.msra.mxu0 %v1439
        %1488 = vmatprep.mubr.bf16.mxu0 %v1034
        %1489 = vmatmul.mubr.bf16.gmra.mrb[0].mxu0 %v1033
        %v1490 = vpop.f32.mrb[0].mxu0
        %v1491 = vadd.f32 %v1306, %v1490
        %v1492 = vpop.f32.mrb[0].mxu0
        %v1493 = vpop.f32.mrb[0].mxu0
        %v1494 = vadd.f32 %v1309, %v1493
        %v1495 = vpop.f32.mrb[0].mxu0
        %1496 = vmatprep.mubr.bf16.mxu0 %v1036
        %1497 = vmatmul.mubr.bf16.gmra.mrb[0].mxu0 %v1035
        %v1498 = vpop.f32.mrb[0].mxu0
        %v1499 = vadd.f32 %v1314, %v1498
        %v1500 = vpop.f32.mrb[0].mxu0
        %v1501 = vpop.f32.mrb[0].mxu0
        %v1502 = vadd.f32 %v1317, %v1501
        %v1503 = vpop.f32.mrb[0].mxu0
        %1504 = vmatprep.mubr.bf16.mxu0 %v1038
        %1505 = vmatmul.mubr.bf16.gmra.mrb[0].mxu0 %v1037
        %v1506 = vpop.f32.mrb[0].mxu0
        %v1507 = vadd.f32 %v1322, %v1506
        %v1508 = vpop.f32.mrb[0].mxu0
        %v1509 = vpop.f32.mrb[0].mxu0
        %v1510 = vadd.f32 %v1325, %v1509
        %v1511 = vpop.f32.mrb[0].mxu0
        %1512 = vmatprep.mubr.bf16.mxu0 %v1040
        %1513 = vmatmul.mubr.bf16.gmra.mrb[0].mxu0 %v1039
        %v1514 = vpop.f32.mrb[0].mxu0
        %v1515 = vadd.f32 %v1330, %v1514
        %v1516 = vpop.f32.mrb[0].mxu0
        %v1517 = vpop.f32.mrb[0].mxu0
        %v1518 = vadd.f32 %v1333, %v1517
        %v1519 = vpop.f32.mrb[0].mxu0
        %1520 = vmatprep.mubr.bf16.mxu0 %v1042
        %1521 = vmatmul.mubr.bf16.gmra.mrb[0].mxu0 %v1041
        %v1522 = vpop.f32.mrb[0].mxu0
        %v1523 = vadd.f32 %v1338, %v1522
        %v1524 = vpop.f32.mrb[0].mxu0
        %v1525 = vpop.f32.mrb[0].mxu0
        %v1526 = vadd.f32 %v1341, %v1525
        %v1527 = vpop.f32.mrb[0].mxu0
        %1528 = vmatprep.mubr.bf16.mxu0 %v1044
        %1529 = vmatmul.mubr.bf16.gmra.mrb[0].mxu0 %v1043
        %v1530 = vpop.f32.mrb[0].mxu0
        %v1531 = vadd.f32 %v1346, %v1530
        %v1532 = vpop.f32.mrb[0].mxu0
        %v1533 = vpop.f32.mrb[0].mxu0
        %v1534 = vadd.f32 %v1349, %v1533
        %v1535 = vpop.f32.mrb[0].mxu0
        %1536 = vmatprep.mubr.bf16.mxu0 %v1046
        %1537 = vmatmul.mubr.bf16.gmra.mrb[0].mxu0 %v1045
        %v1538 = vpop.f32.mrb[0].mxu0
        %v1539 = vadd.f32 %v1354, %v1538
        %v1540 = vpop.f32.mrb[0].mxu0
        %v1541 = vpop.f32.mrb[0].mxu0
        %v1542 = vadd.f32 %v1357, %v1541
        %v1543 = vpop.f32.mrb[0].mxu0
        %1544 = vdwg.mxu0
        %s1545 = scalar_lea.vmem %s3, 256
        %v1546 = vld [vmem:[%s1545] sm:$0xf]
        %v1547 = vld [vmem:[%s1545 + $0x4] sm:$0xf]
        %v1548 = vld [vmem:[%s1545 + $0x8] sm:$0xf]
        %v1549 = vld [vmem:[%s1545 + $0xc] sm:$0xf]
        %v1550 = vld [vmem:[%s1545 + $0x10] sm:$0xf]
        %v1551 = vld [vmem:[%s1545 + $0x14] sm:$0xf]
        %v1552 = vld [vmem:[%s1545 + $0x18] sm:$0xf]
        %v1553 = vld [vmem:[%s1545 + $0x1c] sm:$0xf]
        %v1554 = vld [vmem:[%s1545 + $0x20] sm:$0xf]
        %v1555 = vld [vmem:[%s1545 + $0x24] sm:$0xf]
        %v1556 = vld [vmem:[%s1545 + $0x28] sm:$0xf]
        %v1557 = vld [vmem:[%s1545 + $0x2c] sm:$0xf]
        %v1558 = vld [vmem:[%s1545 + $0x30] sm:$0xf]
        %v1559 = vld [vmem:[%s1545 + $0x34] sm:$0xf]
        %v1560 = vld [vmem:[%s1545 + $0x38] sm:$0xf]
        %v1561 = vld [vmem:[%s1545 + $0x3c] sm:$0xf]
        %v1562 = vld [vmem:[%s1545 + $0x40] sm:$0xf]
        %v1563 = vld [vmem:[%s1545 + $0x44] sm:$0xf]
        %v1564 = vld [vmem:[%s1545 + $0x48] sm:$0xf]
        %v1565 = vld [vmem:[%s1545 + $0x4c] sm:$0xf]
        %v1566 = vld [vmem:[%s1545 + $0x50] sm:$0xf]
        %v1567 = vld [vmem:[%s1545 + $0x54] sm:$0xf]
        %v1568 = vld [vmem:[%s1545 + $0x58] sm:$0xf]
        %v1569 = vld [vmem:[%s1545 + $0x5c] sm:$0xf]
        %v1570 = vld [vmem:[%s1545 + $0x60] sm:$0xf]
        %v1571 = vld [vmem:[%s1545 + $0x64] sm:$0xf]
        %v1572 = vld [vmem:[%s1545 + $0x68] sm:$0xf]
        %v1573 = vld [vmem:[%s1545 + $0x6c] sm:$0xf]
        %v1574 = vld [vmem:[%s1545 + $0x70] sm:$0xf]
        %v1575 = vld [vmem:[%s1545 + $0x74] sm:$0xf]
        %v1576 = vld [vmem:[%s1545 + $0x78] sm:$0xf]
        %v1577 = vld [vmem:[%s1545 + $0x7c] sm:$0xf]
        %v1610 = vunpack.c.l.b16 %v1546
        %v1611 = vunpack.c.l.b16 %v1547
        %v1612 = vunpack.c.l.b16 %v1548
        %v1613 = vunpack.c.l.b16 %v1549
        %v1614 = vunpack.c.l.b16 %v1550
        %v1615 = vunpack.c.l.b16 %v1551
        %v1616 = vunpack.c.l.b16 %v1552
        %v1617 = vunpack.c.l.b16 %v1553
        %v1618 = vunpack.c.l.b16 %v1554
        %v1619 = vunpack.c.l.b16 %v1555
        %v1620 = vunpack.c.l.b16 %v1556
        %v1621 = vunpack.c.l.b16 %v1557
        %v1622 = vunpack.c.l.b16 %v1558
        %v1623 = vunpack.c.l.b16 %v1559
        %v1624 = vunpack.c.l.b16 %v1560
        %v1625 = vunpack.c.l.b16 %v1561
        %v1626 = vunpack.c.l.b16 %v1562
        %v1627 = vunpack.c.l.b16 %v1563
        %v1628 = vunpack.c.l.b16 %v1564
        %v1629 = vunpack.c.l.b16 %v1565
        %v1630 = vunpack.c.l.b16 %v1566
        %v1631 = vunpack.c.l.b16 %v1567
        %v1632 = vunpack.c.l.b16 %v1568
        %v1633 = vunpack.c.l.b16 %v1569
        %v1634 = vunpack.c.l.b16 %v1570
        %v1635 = vunpack.c.l.b16 %v1571
        %v1636 = vunpack.c.l.b16 %v1572
        %v1637 = vunpack.c.l.b16 %v1573
        %v1638 = vunpack.c.l.b16 %v1574
        %v1639 = vunpack.c.l.b16 %v1575
        %v1640 = vunpack.c.l.b16 %v1576
        %v1641 = vunpack.c.l.b16 %v1577
        %v1642 = vpack.c.b16 %v1611, %v1610
        %v1643 = vpack.c.b16 %v1613, %v1612
        %v1644 = vpack.c.b16 %v1615, %v1614
        %v1645 = vpack.c.b16 %v1617, %v1616
        %v1646 = vpack.c.b16 %v1619, %v1618
        %v1647 = vpack.c.b16 %v1621, %v1620
        %v1648 = vpack.c.b16 %v1623, %v1622
        %v1649 = vpack.c.b16 %v1625, %v1624
        %v1650 = vpack.c.b16 %v1627, %v1626
        %v1651 = vpack.c.b16 %v1629, %v1628
        %v1652 = vpack.c.b16 %v1631, %v1630
        %v1653 = vpack.c.b16 %v1633, %v1632
        %v1654 = vpack.c.b16 %v1635, %v1634
        %v1655 = vpack.c.b16 %v1637, %v1636
        %v1656 = vpack.c.b16 %v1639, %v1638
        %v1657 = vpack.c.b16 %v1641, %v1640
        %1674 = vmatprep.subr.bf16.mxu0 0
        %1675 = vmatpush1.bf16.msra.mxu0 %v1642
        %1676 = vmatprep.subr.bf16.mxu0 0
        %1677 = vmatpush1.bf16.msra.mxu0 %v1643
        %1678 = vmatprep.subr.bf16.mxu0 0
        %1679 = vmatpush1.bf16.msra.mxu0 %v1644
        %1680 = vmatprep.subr.bf16.mxu0 0
        %1681 = vmatpush1.bf16.msra.mxu0 %v1645
        %1682 = vmatprep.subr.bf16.mxu0 0
        %1683 = vmatpush1.bf16.msra.mxu0 %v1646
        %1684 = vmatprep.subr.bf16.mxu0 0
        %1685 = vmatpush1.bf16.msra.mxu0 %v1647
        %1686 = vmatprep.subr.bf16.mxu0 0
        %1687 = vmatpush1.bf16.msra.mxu0 %v1648
        %1688 = vmatprep.subr.bf16.mxu0 0
        %1689 = vmatpush1.bf16.msra.mxu0 %v1649
        %1690 = vmatprep.subr.bf16.mxu0 0
        %1691 = vmatpush1.bf16.msra.mxu0 %v1650
        %1692 = vmatprep.subr.bf16.mxu0 0
        %1693 = vmatpush1.bf16.msra.mxu0 %v1651
        %1694 = vmatprep.subr.bf16.mxu0 0
        %1695 = vmatpush1.bf16.msra.mxu0 %v1652
        %1696 = vmatprep.subr.bf16.mxu0 0
        %1697 = vmatpush1.bf16.msra.mxu0 %v1653
        %1698 = vmatprep.subr.bf16.mxu0 0
        %1699 = vmatpush1.bf16.msra.mxu0 %v1654
        %1700 = vmatprep.subr.bf16.mxu0 0
        %1701 = vmatpush1.bf16.msra.mxu0 %v1655
        %1702 = vmatprep.subr.bf16.mxu0 0
        %1703 = vmatpush1.bf16.msra.mxu0 %v1656
        %1704 = vmatprep.subr.bf16.mxu0 0
        %1705 = vmatpush1.bf16.msra.mxu0 %v1657
        %1706 = vmatprep.mubr.bf16.mxu0 %v1036
        %1707 = vmatmul.mubr.bf16.gmra.mrb[0].mxu0 %v1035
        %v1708 = vpop.f32.mrb[0].mxu0
        %v1709 = vadd.f32 0.0, %v1708
        %v1710 = vpop.f32.mrb[0].mxu0
        %v1711 = vpop.f32.mrb[0].mxu0
        %v1712 = vadd.f32 0.0, %v1711
        %v1713 = vpop.f32.mrb[0].mxu0
        %1714 = vmatprep.mubr.bf16.mxu0 %v1038
        %1715 = vmatmul.mubr.bf16.gmra.mrb[0].mxu0 %v1037
        %v1716 = vpop.f32.mrb[0].mxu0
        %v1717 = vadd.f32 0.0, %v1716
        %v1718 = vpop.f32.mrb[0].mxu0
        %v1719 = vpop.f32.mrb[0].mxu0
        %v1720 = vadd.f32 0.0, %v1719
        %v1721 = vpop.f32.mrb[0].mxu0
        %1722 = vmatprep.mubr.bf16.mxu0 %v1040
        %1723 = vmatmul.mubr.bf16.gmra.mrb[0].mxu0 %v1039
        %v1724 = vpop.f32.mrb[0].mxu0
        %v1725 = vadd.f32 0.0, %v1724
        %v1726 = vpop.f32.mrb[0].mxu0
        %v1727 = vpop.f32.mrb[0].mxu0
        %v1728 = vadd.f32 0.0, %v1727
        %v1729 = vpop.f32.mrb[0].mxu0
        %1730 = vmatprep.mubr.bf16.mxu0 %v1042
        %1731 = vmatmul.mubr.bf16.gmra.mrb[0].mxu0 %v1041
        %v1732 = vpop.f32.mrb[0].mxu0
        %v1733 = vadd.f32 0.0, %v1732
        %v1734 = vpop.f32.mrb[0].mxu0
        %v1735 = vpop.f32.mrb[0].mxu0
        %v1736 = vadd.f32 0.0, %v1735
        %v1737 = vpop.f32.mrb[0].mxu0
        %1738 = vmatprep.mubr.bf16.mxu0 %v1044
        %1739 = vmatmul.mubr.bf16.gmra.mrb[0].mxu0 %v1043
        %v1740 = vpop.f32.mrb[0].mxu0
        %v1741 = vadd.f32 0.0, %v1740
        %v1742 = vpop.f32.mrb[0].mxu0
        %v1743 = vpop.f32.mrb[0].mxu0
        %v1744 = vadd.f32 0.0, %v1743
        %v1745 = vpop.f32.mrb[0].mxu0
        %1746 = vmatprep.mubr.bf16.mxu0 %v1046
        %1747 = vmatmul.mubr.bf16.gmra.mrb[0].mxu0 %v1045
        %v1748 = vpop.f32.mrb[0].mxu0
        %v1749 = vadd.f32 0.0, %v1748
        %v1750 = vpop.f32.mrb[0].mxu0
        %v1751 = vpop.f32.mrb[0].mxu0
        %v1752 = vadd.f32 0.0, %v1751
        %v1753 = vpop.f32.mrb[0].mxu0
        %1754 = vmatprep.mubr.bf16.mxu0 %v1048
        %1755 = vmatmul.mubr.bf16.gmra.mrb[0].mxu0 %v1047
        %v1756 = vpop.f32.mrb[0].mxu0
        %v1757 = vadd.f32 0.0, %v1756
        %v1758 = vpop.f32.mrb[0].mxu0
        %v1759 = vpop.f32.mrb[0].mxu0
        %v1760 = vadd.f32 0.0, %v1759
        %v1761 = vpop.f32.mrb[0].mxu0
        %1762 = vdwg.mxu0
        %v1763 = vadd.f32 %v1491, %v1709
        %v1764 = vadd.f32 %v1494, %v1712
        %v1765 = vadd.f32 %v1499, %v1717
        %v1766 = vadd.f32 %v1502, %v1720
        %v1767 = vadd.f32 %v1507, %v1725
        %v1768 = vadd.f32 %v1510, %v1728
        %v1769 = vadd.f32 %v1515, %v1733
        %v1770 = vadd.f32 %v1518, %v1736
        %v1771 = vadd.f32 %v1523, %v1741
        %v1772 = vadd.f32 %v1526, %v1744
        %v1773 = vadd.f32 %v1531, %v1749
        %v1774 = vadd.f32 %v1534, %v1752
        %v1775 = vadd.f32 %v1539, %v1757
        %v1776 = vadd.f32 %v1542, %v1760
        %v1777 = vld [vmem:[%s4] sm:$0x1]
        %v1779 = vlaneseq
        %v1780 = vshrl.u32 %v1779, 7
        %v1781 = vsub.s32 0, %v1780
        %v1782 = vrot.slane %v1777, %v1781
        %v1784 = vadd.f32 %v1763, %v1782
        %v1785 = vadd.f32 %v1764, %v1782
        %v1786 = vadd.f32 %v1765, %v1782
        %v1787 = vadd.f32 %v1766, %v1782
        %v1788 = vadd.f32 %v1767, %v1782
        %v1789 = vadd.f32 %v1768, %v1782
        %v1790 = vadd.f32 %v1769, %v1782
        %v1791 = vadd.f32 %v1770, %v1782
        %v1792 = vadd.f32 %v1771, %v1782
        %v1793 = vadd.f32 %v1772, %v1782
        %v1794 = vadd.f32 %v1773, %v1782
        %v1795 = vadd.f32 %v1774, %v1782
        %v1796 = vadd.f32 %v1775, %v1782
        %v1797 = vadd.f32 %v1776, %v1782
        %v1798 = vmax.f32 %v1784, 0.0
        %v1799 = vmax.f32 %v1785, 0.0
        %v1800 = vmax.f32 %v1786, 0.0
        %v1801 = vmax.f32 %v1787, 0.0
        %v1802 = vmax.f32 %v1788, 0.0
        %v1803 = vmax.f32 %v1789, 0.0
        %v1804 = vmax.f32 %v1790, 0.0
        %v1805 = vmax.f32 %v1791, 0.0
        %v1806 = vmax.f32 %v1792, 0.0
        %v1807 = vmax.f32 %v1793, 0.0
        %v1808 = vmax.f32 %v1794, 0.0
        %v1809 = vmax.f32 %v1795, 0.0
        %v1810 = vmax.f32 %v1796, 0.0
        %v1811 = vmax.f32 %v1797, 0.0
        %v1812 = vpack.c.bf16 %v1799, %v1798
        %v1813 = vpack.c.bf16 %v1801, %v1800
        %v1814 = vpack.c.bf16 %v1803, %v1802
        %v1815 = vpack.c.bf16 %v1805, %v1804
        %v1816 = vpack.c.bf16 %v1807, %v1806
        %v1817 = vpack.c.bf16 %v1809, %v1808
        %v1818 = vpack.c.bf16 %v1811, %v1810
        %v1819 = vld [vmem:[%s5] sm:$0xff]
        %v1820 = vld [vmem:[%s5 + $0x8] sm:$0xff]
        %v1821 = vld [vmem:[%s5 + $0x10] sm:$0xff]
        %v1822 = vld [vmem:[%s5 + $0x18] sm:$0xff]
        %s1823 = scalar_lea.vmem %s5, 32
        %v1824 = vld [vmem:[%s1823] sm:$0xff]
        %v1825 = vld [vmem:[%s1823 + $0x8] sm:$0xff]
        %v1826 = vld [vmem:[%s1823 + $0x10] sm:$0xff]
        %v1827 = vld [vmem:[%s1823 + $0x18] sm:$0xff]
        %v1829 = vrot.slane %v1812, 4
        %v1834 = vunpack.c.l.b16 %v1824
        %v1835 = vunpack.c.h.b16 %v1824
        %v1836 = vunpack.c.l.b16 %v1825
        %v1837 = vunpack.c.h.b16 %v1825
        %v1838 = vunpack.c.l.b16 %v1826
        %v1839 = vunpack.c.h.b16 %v1826
        %v1840 = vunpack.c.l.b16 %v1827
        %v1841 = vunpack.c.h.b16 %v1827
        %v1842 = vpack.c.b16 %v1836, %v1834
        %v1843 = vpack.c.b16 %v1837, %v1835
        %v1844 = vpack.c.b16 %v1840, %v1838
        %v1845 = vpack.c.b16 %v1841, %v1839
        %vm1850 = vcmask 261120
        %v1852 = vsel %vm1850, %v1829, 0
        %1854 = vmatprep.subr.bf16.mxu0 %v1843
        %1855 = vmatpush1.bf16.msra.mxu0 %v1842
        %1856 = vmatprep.subr.bf16.mxu0 %v1845
        %1857 = vmatpush1.bf16.msra.mxu0 %v1844
        %1858 = vmatprep.subr.bf16.mxu0 0
        %1859 = vmatpush1.bf16.msra.mxu0 0
        %1860 = vmatprep.subr.bf16.mxu0 0
        %1861 = vmatpush1.bf16.msra.mxu0 0
        %1862 = vmatprep.subr.bf16.mxu0 0
        %1863 = vmatpush1.bf16.msra.mxu0 0
        %1864 = vmatprep.subr.bf16.mxu0 0
        %1865 = vmatpush1.bf16.msra.mxu0 0
        %1866 = vmatprep.subr.bf16.mxu0 0
        %1867 = vmatpush1.bf16.msra.mxu0 0
        %1868 = vmatprep.subr.bf16.mxu0 0
        %1869 = vmatpush1.bf16.msra.mxu0 0
        %1870 = vmatprep.subr.bf16.mxu0 0
        %1871 = vmatpush1.bf16.msra.mxu0 0
        %1872 = vmatprep.subr.bf16.mxu0 0
        %1873 = vmatpush1.bf16.msra.mxu0 0
        %1874 = vmatprep.subr.bf16.mxu0 0
        %1875 = vmatpush1.bf16.msra.mxu0 0
        %1876 = vmatprep.subr.bf16.mxu0 0
        %1877 = vmatpush1.bf16.msra.mxu0 0
        %1878 = vmatprep.subr.bf16.mxu0 0
        %1879 = vmatpush1.bf16.msra.mxu0 0
        %1880 = vmatprep.subr.bf16.mxu0 0
        %1881 = vmatpush1.bf16.msra.mxu0 0
        %1882 = vmatprep.subr.bf16.mxu0 0
        %1883 = vmatpush1.bf16.msra.mxu0 0
        %1884 = vmatprep.subr.bf16.mxu0 0
        %1885 = vmatpush1.bf16.msra.mxu0 0
        %1886 = vmatprep.mubr.bf16.mxu0 0
        %1887 = vmatmul.mubr.bf16.gmra.mrb[0].mxu0 %v1852
        %v1888 = vpop.f32.mrb[0].mxu0
        %v1889 = vadd.f32 0.0, %v1888
        %v1890 = vpop.f32.mrb[0].mxu0
        %v1891 = vadd.f32 0.0, %v1890
        %v1892 = vpop.f32.mrb[0].mxu0
        %v1893 = vpop.f32.mrb[0].mxu0
        %1894 = vdwg.mxu0
        %v1899 = vunpack.c.l.b16 %v1819
        %v1900 = vunpack.c.h.b16 %v1819
        %v1901 = vunpack.c.l.b16 %v1820
        %v1902 = vunpack.c.h.b16 %v1820
        %v1903 = vunpack.c.l.b16 %v1821
        %v1904 = vunpack.c.h.b16 %v1821
        %v1905 = vunpack.c.l.b16 %v1822
        %v1906 = vunpack.c.h.b16 %v1822
        %v1907 = vpack.c.b16 %v1901, %v1899
        %v1908 = vpack.c.b16 %v1902, %v1900
        %v1909 = vpack.c.b16 %v1905, %v1903
        %v1910 = vpack.c.b16 %v1906, %v1904
        %v1916 = vsel %vm1850, %v1812, 0
        %1918 = vmatprep.subr.bf16.mxu0 %v1908
        %1919 = vmatpush1.bf16.msra.mxu0 %v1907
        %1920 = vmatprep.subr.bf16.mxu0 %v1910
        %1921 = vmatpush1.bf16.msra.mxu0 %v1909
        %1922 = vmatprep.subr.bf16.mxu0 0
        %1923 = vmatpush1.bf16.msra.mxu0 0
        %1924 = vmatprep.subr.bf16.mxu0 0
        %1925 = vmatpush1.bf16.msra.mxu0 0
        %1926 = vmatprep.subr.bf16.mxu0 0
        %1927 = vmatpush1.bf16.msra.mxu0 0
        %1928 = vmatprep.subr.bf16.mxu0 0
        %1929 = vmatpush1.bf16.msra.mxu0 0
        %1930 = vmatprep.subr.bf16.mxu0 0
        %1931 = vmatpush1.bf16.msra.mxu0 0
        %1932 = vmatprep.subr.bf16.mxu0 0
        %1933 = vmatpush1.bf16.msra.mxu0 0
        %1934 = vmatprep.subr.bf16.mxu0 0
        %1935 = vmatpush1.bf16.msra.mxu0 0
        %1936 = vmatprep.subr.bf16.mxu0 0
        %1937 = vmatpush1.bf16.msra.mxu0 0
        %1938 = vmatprep.subr.bf16.mxu0 0
        %1939 = vmatpush1.bf16.msra.mxu0 0
        %1940 = vmatprep.subr.bf16.mxu0 0
        %1941 = vmatpush1.bf16.msra.mxu0 0
        %1942 = vmatprep.subr.bf16.mxu0 0
        %1943 = vmatpush1.bf16.msra.mxu0 0
        %1944 = vmatprep.subr.bf16.mxu0 0
        %1945 = vmatpush1.bf16.msra.mxu0 0
        %1946 = vmatprep.subr.bf16.mxu0 0
        %1947 = vmatpush1.bf16.msra.mxu0 0
        %1948 = vmatprep.subr.bf16.mxu0 0
        %1949 = vmatpush1.bf16.msra.mxu0 0
        %1950 = vmatprep.mubr.bf16.mxu0 0
        %1951 = vmatmul.mubr.bf16.gmra.mrb[0].mxu0 %v1916
        %v1952 = vpop.f32.mrb[0].mxu0
        %v1953 = vadd.f32 %v1889, %v1952
        %v1954 = vpop.f32.mrb[0].mxu0
        %v1955 = vadd.f32 %v1891, %v1954
        %v1956 = vpop.f32.mrb[0].mxu0
        %v1957 = vpop.f32.mrb[0].mxu0
        %1958 = vdwg.mxu0
        %s1959 = scalar_lea.vmem %s5, 64
        %v1960 = vld [vmem:[%s1959] sm:$0xff]
        %v1961 = vld [vmem:[%s1959 + $0x8] sm:$0xff]
        %v1962 = vld [vmem:[%s1959 + $0x10] sm:$0xff]
        %v1963 = vld [vmem:[%s1959 + $0x18] sm:$0xff]
        %v1968 = vunpack.c.l.b16 %v1960
        %v1969 = vunpack.c.h.b16 %v1960
        %v1970 = vunpack.c.l.b16 %v1961
        %v1971 = vunpack.c.h.b16 %v1961
        %v1972 = vunpack.c.l.b16 %v1962
        %v1973 = vunpack.c.h.b16 %v1962
        %v1974 = vunpack.c.l.b16 %v1963
        %v1975 = vunpack.c.h.b16 %v1963
        %v1976 = vpack.c.b16 %v1970, %v1968
        %v1977 = vpack.c.b16 %v1971, %v1969
        %v1978 = vpack.c.b16 %v1974, %v1972
        %v1979 = vpack.c.b16 %v1975, %v1973
        %v1985 = vsel %vm1850, %v1813, 0
        %1987 = vmatprep.subr.bf16.mxu0 %v1977
        %1988 = vmatpush1.bf16.msra.mxu0 %v1976
        %1989 = vmatprep.subr.bf16.mxu0 %v1979
        %1990 = vmatpush1.bf16.msra.mxu0 %v1978
        %1991 = vmatprep.subr.bf16.mxu0 0
        %1992 = vmatpush1.bf16.msra.mxu0 0
        %1993 = vmatprep.subr.bf16.mxu0 0
        %1994 = vmatpush1.bf16.msra.mxu0 0
        %1995 = vmatprep.subr.bf16.mxu0 0
        %1996 = vmatpush1.bf16.msra.mxu0 0
        %1997 = vmatprep.subr.bf16.mxu0 0
        %1998 = vmatpush1.bf16.msra.mxu0 0
        %1999 = vmatprep.subr.bf16.mxu0 0
        %2000 = vmatpush1.bf16.msra.mxu0 0
        %2001 = vmatprep.subr.bf16.mxu0 0
        %2002 = vmatpush1.bf16.msra.mxu0 0
        %2003 = vmatprep.subr.bf16.mxu0 0
        %2004 = vmatpush1.bf16.msra.mxu0 0
        %2005 = vmatprep.subr.bf16.mxu0 0
        %2006 = vmatpush1.bf16.msra.mxu0 0
        %2007 = vmatprep.subr.bf16.mxu0 0
        %2008 = vmatpush1.bf16.msra.mxu0 0
        %2009 = vmatprep.subr.bf16.mxu0 0
        %2010 = vmatpush1.bf16.msra.mxu0 0
        %2011 = vmatprep.subr.bf16.mxu0 0
        %2012 = vmatpush1.bf16.msra.mxu0 0
        %2013 = vmatprep.subr.bf16.mxu0 0
        %2014 = vmatpush1.bf16.msra.mxu0 0
        %2015 = vmatprep.subr.bf16.mxu0 0
        %2016 = vmatpush1.bf16.msra.mxu0 0
        %2017 = vmatprep.subr.bf16.mxu0 0
        %2018 = vmatpush1.bf16.msra.mxu0 0
        %2019 = vmatprep.mubr.bf16.mxu0 0
        %2020 = vmatmul.mubr.bf16.gmra.mrb[0].mxu0 %v1985
        %v2021 = vpop.f32.mrb[0].mxu0
        %v2022 = vadd.f32 0.0, %v2021
        %v2023 = vpop.f32.mrb[0].mxu0
        %v2024 = vadd.f32 0.0, %v2023
        %v2025 = vpop.f32.mrb[0].mxu0
        %v2026 = vpop.f32.mrb[0].mxu0
        %2027 = vdwg.mxu0
        %v2028 = vadd.f32 %v1953, %v2022
        %v2029 = vadd.f32 %v1955, %v2024
        %s2030 = scalar_lea.vmem %s5, 96
        %v2031 = vld [vmem:[%s2030] sm:$0xff]
        %v2032 = vld [vmem:[%s2030 + $0x8] sm:$0xff]
        %v2033 = vld [vmem:[%s2030 + $0x10] sm:$0xff]
        %v2034 = vld [vmem:[%s2030 + $0x18] sm:$0xff]
        %v2036 = vrot.slane %v1813, 4
        %v2041 = vunpack.c.l.b16 %v2031
        %v2042 = vunpack.c.h.b16 %v2031
        %v2043 = vunpack.c.l.b16 %v2032
        %v2044 = vunpack.c.h.b16 %v2032
        %v2045 = vunpack.c.l.b16 %v2033
        %v2046 = vunpack.c.h.b16 %v2033
        %v2047 = vunpack.c.l.b16 %v2034
        %v2048 = vunpack.c.h.b16 %v2034
        %v2049 = vpack.c.b16 %v2043, %v2041
        %v2050 = vpack.c.b16 %v2044, %v2042
        %v2051 = vpack.c.b16 %v2047, %v2045
        %v2052 = vpack.c.b16 %v2048, %v2046
        %v2058 = vsel %vm1850, %v2036, 0
        %2060 = vmatprep.subr.bf16.mxu0 %v2050
        %2061 = vmatpush1.bf16.msra.mxu0 %v2049
        %2062 = vmatprep.subr.bf16.mxu0 %v2052
        %2063 = vmatpush1.bf16.msra.mxu0 %v2051
        %2064 = vmatprep.subr.bf16.mxu0 0
        %2065 = vmatpush1.bf16.msra.mxu0 0
        %2066 = vmatprep.subr.bf16.mxu0 0
        %2067 = vmatpush1.bf16.msra.mxu0 0
        %2068 = vmatprep.subr.bf16.mxu0 0
        %2069 = vmatpush1.bf16.msra.mxu0 0
        %2070 = vmatprep.subr.bf16.mxu0 0
        %2071 = vmatpush1.bf16.msra.mxu0 0
        %2072 = vmatprep.subr.bf16.mxu0 0
        %2073 = vmatpush1.bf16.msra.mxu0 0
        %2074 = vmatprep.subr.bf16.mxu0 0
        %2075 = vmatpush1.bf16.msra.mxu0 0
        %2076 = vmatprep.subr.bf16.mxu0 0
        %2077 = vmatpush1.bf16.msra.mxu0 0
        %2078 = vmatprep.subr.bf16.mxu0 0
        %2079 = vmatpush1.bf16.msra.mxu0 0
        %2080 = vmatprep.subr.bf16.mxu0 0
        %2081 = vmatpush1.bf16.msra.mxu0 0
        %2082 = vmatprep.subr.bf16.mxu0 0
        %2083 = vmatpush1.bf16.msra.mxu0 0
        %2084 = vmatprep.subr.bf16.mxu0 0
        %2085 = vmatpush1.bf16.msra.mxu0 0
        %2086 = vmatprep.subr.bf16.mxu0 0
        %2087 = vmatpush1.bf16.msra.mxu0 0
        %2088 = vmatprep.subr.bf16.mxu0 0
        %2089 = vmatpush1.bf16.msra.mxu0 0
        %2090 = vmatprep.subr.bf16.mxu0 0
        %2091 = vmatpush1.bf16.msra.mxu0 0
        %2092 = vmatprep.mubr.bf16.mxu0 0
        %2093 = vmatmul.mubr.bf16.gmra.mrb[0].mxu0 %v2058
        %v2094 = vpop.f32.mrb[0].mxu0
        %v2095 = vadd.f32 0.0, %v2094
        %v2096 = vpop.f32.mrb[0].mxu0
        %v2097 = vadd.f32 0.0, %v2096
        %v2098 = vpop.f32.mrb[0].mxu0
        %v2099 = vpop.f32.mrb[0].mxu0
        %2100 = vdwg.mxu0
        %v2101 = vadd.f32 %v2028, %v2095
        %v2102 = vadd.f32 %v2029, %v2097
        %s2103 = scalar_lea.vmem %s5, 128
        %v2104 = vld [vmem:[%s2103] sm:$0xff]
        %v2105 = vld [vmem:[%s2103 + $0x8] sm:$0xff]
        %v2106 = vld [vmem:[%s2103 + $0x10] sm:$0xff]
        %v2107 = vld [vmem:[%s2103 + $0x18] sm:$0xff]
        %v2112 = vunpack.c.l.b16 %v2104
        %v2113 = vunpack.c.h.b16 %v2104
        %v2114 = vunpack.c.l.b16 %v2105
        %v2115 = vunpack.c.h.b16 %v2105
        %v2116 = vunpack.c.l.b16 %v2106
        %v2117 = vunpack.c.h.b16 %v2106
        %v2118 = vunpack.c.l.b16 %v2107
        %v2119 = vunpack.c.h.b16 %v2107
        %v2120 = vpack.c.b16 %v2114, %v2112
        %v2121 = vpack.c.b16 %v2115, %v2113
        %v2122 = vpack.c.b16 %v2118, %v2116
        %v2123 = vpack.c.b16 %v2119, %v2117
        %v2129 = vsel %vm1850, %v1814, 0
        %2131 = vmatprep.subr.bf16.mxu0 %v2121
        %2132 = vmatpush1.bf16.msra.mxu0 %v2120
        %2133 = vmatprep.subr.bf16.mxu0 %v2123
        %2134 = vmatpush1.bf16.msra.mxu0 %v2122
        %2135 = vmatprep.subr.bf16.mxu0 0
        %2136 = vmatpush1.bf16.msra.mxu0 0
        %2137 = vmatprep.subr.bf16.mxu0 0
        %2138 = vmatpush1.bf16.msra.mxu0 0
        %2139 = vmatprep.subr.bf16.mxu0 0
        %2140 = vmatpush1.bf16.msra.mxu0 0
        %2141 = vmatprep.subr.bf16.mxu0 0
        %2142 = vmatpush1.bf16.msra.mxu0 0
        %2143 = vmatprep.subr.bf16.mxu0 0
        %2144 = vmatpush1.bf16.msra.mxu0 0
        %2145 = vmatprep.subr.bf16.mxu0 0
        %2146 = vmatpush1.bf16.msra.mxu0 0
        %2147 = vmatprep.subr.bf16.mxu0 0
        %2148 = vmatpush1.bf16.msra.mxu0 0
        %2149 = vmatprep.subr.bf16.mxu0 0
        %2150 = vmatpush1.bf16.msra.mxu0 0
        %2151 = vmatprep.subr.bf16.mxu0 0
        %2152 = vmatpush1.bf16.msra.mxu0 0
        %2153 = vmatprep.subr.bf16.mxu0 0
        %2154 = vmatpush1.bf16.msra.mxu0 0
        %2155 = vmatprep.subr.bf16.mxu0 0
        %2156 = vmatpush1.bf16.msra.mxu0 0
        %2157 = vmatprep.subr.bf16.mxu0 0
        %2158 = vmatpush1.bf16.msra.mxu0 0
        %2159 = vmatprep.subr.bf16.mxu0 0
        %2160 = vmatpush1.bf16.msra.mxu0 0
        %2161 = vmatprep.subr.bf16.mxu0 0
        %2162 = vmatpush1.bf16.msra.mxu0 0
        %2163 = vmatprep.mubr.bf16.mxu0 0
        %2164 = vmatmul.mubr.bf16.gmra.mrb[0].mxu0 %v2129
        %v2165 = vpop.f32.mrb[0].mxu0
        %v2166 = vadd.f32 0.0, %v2165
        %v2167 = vpop.f32.mrb[0].mxu0
        %v2168 = vadd.f32 0.0, %v2167
        %v2169 = vpop.f32.mrb[0].mxu0
        %v2170 = vpop.f32.mrb[0].mxu0
        %2171 = vdwg.mxu0
        %v2172 = vadd.f32 %v2101, %v2166
        %v2173 = vadd.f32 %v2102, %v2168
        %s2174 = scalar_lea.vmem %s5, 160
        %v2175 = vld [vmem:[%s2174] sm:$0xff]
        %v2176 = vld [vmem:[%s2174 + $0x8] sm:$0xff]
        %v2177 = vld [vmem:[%s2174 + $0x10] sm:$0xff]
        %v2178 = vld [vmem:[%s2174 + $0x18] sm:$0xff]
        %v2180 = vrot.slane %v1814, 4
        %v2185 = vunpack.c.l.b16 %v2175
        %v2186 = vunpack.c.h.b16 %v2175
        %v2187 = vunpack.c.l.b16 %v2176
        %v2188 = vunpack.c.h.b16 %v2176
        %v2189 = vunpack.c.l.b16 %v2177
        %v2190 = vunpack.c.h.b16 %v2177
        %v2191 = vunpack.c.l.b16 %v2178
        %v2192 = vunpack.c.h.b16 %v2178
        %v2193 = vpack.c.b16 %v2187, %v2185
        %v2194 = vpack.c.b16 %v2188, %v2186
        %v2195 = vpack.c.b16 %v2191, %v2189
        %v2196 = vpack.c.b16 %v2192, %v2190
        %v2202 = vsel %vm1850, %v2180, 0
        %2204 = vmatprep.subr.bf16.mxu0 %v2194
        %2205 = vmatpush1.bf16.msra.mxu0 %v2193
        %2206 = vmatprep.subr.bf16.mxu0 %v2196
        %2207 = vmatpush1.bf16.msra.mxu0 %v2195
        %2208 = vmatprep.subr.bf16.mxu0 0
        %2209 = vmatpush1.bf16.msra.mxu0 0
        %2210 = vmatprep.subr.bf16.mxu0 0
        %2211 = vmatpush1.bf16.msra.mxu0 0
        %2212 = vmatprep.subr.bf16.mxu0 0
        %2213 = vmatpush1.bf16.msra.mxu0 0
        %2214 = vmatprep.subr.bf16.mxu0 0
        %2215 = vmatpush1.bf16.msra.mxu0 0
        %2216 = vmatprep.subr.bf16.mxu0 0
        %2217 = vmatpush1.bf16.msra.mxu0 0
        %2218 = vmatprep.subr.bf16.mxu0 0
        %2219 = vmatpush1.bf16.msra.mxu0 0
        %2220 = vmatprep.subr.bf16.mxu0 0
        %2221 = vmatpush1.bf16.msra.mxu0 0
        %2222 = vmatprep.subr.bf16.mxu0 0
        %2223 = vmatpush1.bf16.msra.mxu0 0
        %2224 = vmatprep.subr.bf16.mxu0 0
        %2225 = vmatpush1.bf16.msra.mxu0 0
        %2226 = vmatprep.subr.bf16.mxu0 0
        %2227 = vmatpush1.bf16.msra.mxu0 0
        %2228 = vmatprep.subr.bf16.mxu0 0
        %2229 = vmatpush1.bf16.msra.mxu0 0
        %2230 = vmatprep.subr.bf16.mxu0 0
        %2231 = vmatpush1.bf16.msra.mxu0 0
        %2232 = vmatprep.subr.bf16.mxu0 0
        %2233 = vmatpush1.bf16.msra.mxu0 0
        %2234 = vmatprep.subr.bf16.mxu0 0
        %2235 = vmatpush1.bf16.msra.mxu0 0
        %2236 = vmatprep.mubr.bf16.mxu0 0
        %2237 = vmatmul.mubr.bf16.gmra.mrb[0].mxu0 %v2202
        %v2238 = vpop.f32.mrb[0].mxu0
        %v2239 = vadd.f32 0.0, %v2238
        %v2240 = vpop.f32.mrb[0].mxu0
        %v2241 = vadd.f32 0.0, %v2240
        %v2242 = vpop.f32.mrb[0].mxu0
        %v2243 = vpop.f32.mrb[0].mxu0
        %2244 = vdwg.mxu0
        %v2245 = vadd.f32 %v2172, %v2239
        %v2246 = vadd.f32 %v2173, %v2241
        %s2247 = scalar_lea.vmem %s5, 192
        %v2248 = vld [vmem:[%s2247] sm:$0xff]
        %v2249 = vld [vmem:[%s2247 + $0x8] sm:$0xff]
        %v2250 = vld [vmem:[%s2247 + $0x10] sm:$0xff]
        %v2251 = vld [vmem:[%s2247 + $0x18] sm:$0xff]
        %v2256 = vunpack.c.l.b16 %v2248
        %v2257 = vunpack.c.h.b16 %v2248
        %v2258 = vunpack.c.l.b16 %v2249
        %v2259 = vunpack.c.h.b16 %v2249
        %v2260 = vunpack.c.l.b16 %v2250
        %v2261 = vunpack.c.h.b16 %v2250
        %v2262 = vunpack.c.l.b16 %v2251
        %v2263 = vunpack.c.h.b16 %v2251
        %v2264 = vpack.c.b16 %v2258, %v2256
        %v2265 = vpack.c.b16 %v2259, %v2257
        %v2266 = vpack.c.b16 %v2262, %v2260
        %v2267 = vpack.c.b16 %v2263, %v2261
        %v2273 = vsel %vm1850, %v1815, 0
        %2275 = vmatprep.subr.bf16.mxu0 %v2265
        %2276 = vmatpush1.bf16.msra.mxu0 %v2264
        %2277 = vmatprep.subr.bf16.mxu0 %v2267
        %2278 = vmatpush1.bf16.msra.mxu0 %v2266
        %2279 = vmatprep.subr.bf16.mxu0 0
        %2280 = vmatpush1.bf16.msra.mxu0 0
        %2281 = vmatprep.subr.bf16.mxu0 0
        %2282 = vmatpush1.bf16.msra.mxu0 0
        %2283 = vmatprep.subr.bf16.mxu0 0
        %2284 = vmatpush1.bf16.msra.mxu0 0
        %2285 = vmatprep.subr.bf16.mxu0 0
        %2286 = vmatpush1.bf16.msra.mxu0 0
        %2287 = vmatprep.subr.bf16.mxu0 0
        %2288 = vmatpush1.bf16.msra.mxu0 0
        %2289 = vmatprep.subr.bf16.mxu0 0
        %2290 = vmatpush1.bf16.msra.mxu0 0
        %2291 = vmatprep.subr.bf16.mxu0 0
        %2292 = vmatpush1.bf16.msra.mxu0 0
        %2293 = vmatprep.subr.bf16.mxu0 0
        %2294 = vmatpush1.bf16.msra.mxu0 0
        %2295 = vmatprep.subr.bf16.mxu0 0
        %2296 = vmatpush1.bf16.msra.mxu0 0
        %2297 = vmatprep.subr.bf16.mxu0 0
        %2298 = vmatpush1.bf16.msra.mxu0 0
        %2299 = vmatprep.subr.bf16.mxu0 0
        %2300 = vmatpush1.bf16.msra.mxu0 0
        %2301 = vmatprep.subr.bf16.mxu0 0
        %2302 = vmatpush1.bf16.msra.mxu0 0
        %2303 = vmatprep.subr.bf16.mxu0 0
        %2304 = vmatpush1.bf16.msra.mxu0 0
        %2305 = vmatprep.subr.bf16.mxu0 0
        %2306 = vmatpush1.bf16.msra.mxu0 0
        %2307 = vmatprep.mubr.bf16.mxu0 0
        %2308 = vmatmul.mubr.bf16.gmra.mrb[0].mxu0 %v2273
        %v2309 = vpop.f32.mrb[0].mxu0
        %v2310 = vadd.f32 0.0, %v2309
        %v2311 = vpop.f32.mrb[0].mxu0
        %v2312 = vadd.f32 0.0, %v2311
        %v2313 = vpop.f32.mrb[0].mxu0
        %v2314 = vpop.f32.mrb[0].mxu0
        %2315 = vdwg.mxu0
        %v2316 = vadd.f32 %v2245, %v2310
        %v2317 = vadd.f32 %v2246, %v2312
        %s2318 = scalar_lea.vmem %s5, 224
        %v2319 = vld [vmem:[%s2318] sm:$0xff]
        %v2320 = vld [vmem:[%s2318 + $0x8] sm:$0xff]
        %v2321 = vld [vmem:[%s2318 + $0x10] sm:$0xff]
        %v2322 = vld [vmem:[%s2318 + $0x18] sm:$0xff]
        %v2324 = vrot.slane %v1815, 4
        %v2329 = vunpack.c.l.b16 %v2319
        %v2330 = vunpack.c.h.b16 %v2319
        %v2331 = vunpack.c.l.b16 %v2320
        %v2332 = vunpack.c.h.b16 %v2320
        %v2333 = vunpack.c.l.b16 %v2321
        %v2334 = vunpack.c.h.b16 %v2321
        %v2335 = vunpack.c.l.b16 %v2322
        %v2336 = vunpack.c.h.b16 %v2322
        %v2337 = vpack.c.b16 %v2331, %v2329
        %v2338 = vpack.c.b16 %v2332, %v2330
        %v2339 = vpack.c.b16 %v2335, %v2333
        %v2340 = vpack.c.b16 %v2336, %v2334
        %v2346 = vsel %vm1850, %v2324, 0
        %2348 = vmatprep.subr.bf16.mxu0 %v2338
        %2349 = vmatpush1.bf16.msra.mxu0 %v2337
        %2350 = vmatprep.subr.bf16.mxu0 %v2340
        %2351 = vmatpush1.bf16.msra.mxu0 %v2339
        %2352 = vmatprep.subr.bf16.mxu0 0
        %2353 = vmatpush1.bf16.msra.mxu0 0
        %2354 = vmatprep.subr.bf16.mxu0 0
        %2355 = vmatpush1.bf16.msra.mxu0 0
        %2356 = vmatprep.subr.bf16.mxu0 0
        %2357 = vmatpush1.bf16.msra.mxu0 0
        %2358 = vmatprep.subr.bf16.mxu0 0
        %2359 = vmatpush1.bf16.msra.mxu0 0
        %2360 = vmatprep.subr.bf16.mxu0 0
        %2361 = vmatpush1.bf16.msra.mxu0 0
        %2362 = vmatprep.subr.bf16.mxu0 0
        %2363 = vmatpush1.bf16.msra.mxu0 0
        %2364 = vmatprep.subr.bf16.mxu0 0
        %2365 = vmatpush1.bf16.msra.mxu0 0
        %2366 = vmatprep.subr.bf16.mxu0 0
        %2367 = vmatpush1.bf16.msra.mxu0 0
        %2368 = vmatprep.subr.bf16.mxu0 0
        %2369 = vmatpush1.bf16.msra.mxu0 0
        %2370 = vmatprep.subr.bf16.mxu0 0
        %2371 = vmatpush1.bf16.msra.mxu0 0
        %2372 = vmatprep.subr.bf16.mxu0 0
        %2373 = vmatpush1.bf16.msra.mxu0 0
        %2374 = vmatprep.subr.bf16.mxu0 0
        %2375 = vmatpush1.bf16.msra.mxu0 0
        %2376 = vmatprep.subr.bf16.mxu0 0
        %2377 = vmatpush1.bf16.msra.mxu0 0
        %2378 = vmatprep.subr.bf16.mxu0 0
        %2379 = vmatpush1.bf16.msra.mxu0 0
        %2380 = vmatprep.mubr.bf16.mxu0 0
        %2381 = vmatmul.mubr.bf16.gmra.mrb[0].mxu0 %v2346
        %v2382 = vpop.f32.mrb[0].mxu0
        %v2383 = vadd.f32 0.0, %v2382
        %v2384 = vpop.f32.mrb[0].mxu0
        %v2385 = vadd.f32 0.0, %v2384
        %v2386 = vpop.f32.mrb[0].mxu0
        %v2387 = vpop.f32.mrb[0].mxu0
        %2388 = vdwg.mxu0
        %v2389 = vadd.f32 %v2316, %v2383
        %v2390 = vadd.f32 %v2317, %v2385
        %s2391 = scalar_lea.vmem %s5, 256
        %v2392 = vld [vmem:[%s2391] sm:$0xff]
        %v2393 = vld [vmem:[%s2391 + $0x8] sm:$0xff]
        %v2394 = vld [vmem:[%s2391 + $0x10] sm:$0xff]
        %v2395 = vld [vmem:[%s2391 + $0x18] sm:$0xff]
        %v2400 = vunpack.c.l.b16 %v2392
        %v2401 = vunpack.c.h.b16 %v2392
        %v2402 = vunpack.c.l.b16 %v2393
        %v2403 = vunpack.c.h.b16 %v2393
        %v2404 = vunpack.c.l.b16 %v2394
        %v2405 = vunpack.c.h.b16 %v2394
        %v2406 = vunpack.c.l.b16 %v2395
        %v2407 = vunpack.c.h.b16 %v2395
        %v2408 = vpack.c.b16 %v2402, %v2400
        %v2409 = vpack.c.b16 %v2403, %v2401
        %v2410 = vpack.c.b16 %v2406, %v2404
        %v2411 = vpack.c.b16 %v2407, %v2405
        %v2417 = vsel %vm1850, %v1816, 0
        %2419 = vmatprep.subr.bf16.mxu0 %v2409
        %2420 = vmatpush1.bf16.msra.mxu0 %v2408
        %2421 = vmatprep.subr.bf16.mxu0 %v2411
        %2422 = vmatpush1.bf16.msra.mxu0 %v2410
        %2423 = vmatprep.subr.bf16.mxu0 0
        %2424 = vmatpush1.bf16.msra.mxu0 0
        %2425 = vmatprep.subr.bf16.mxu0 0
        %2426 = vmatpush1.bf16.msra.mxu0 0
        %2427 = vmatprep.subr.bf16.mxu0 0
        %2428 = vmatpush1.bf16.msra.mxu0 0
        %2429 = vmatprep.subr.bf16.mxu0 0
        %2430 = vmatpush1.bf16.msra.mxu0 0
        %2431 = vmatprep.subr.bf16.mxu0 0
        %2432 = vmatpush1.bf16.msra.mxu0 0
        %2433 = vmatprep.subr.bf16.mxu0 0
        %2434 = vmatpush1.bf16.msra.mxu0 0
        %2435 = vmatprep.subr.bf16.mxu0 0
        %2436 = vmatpush1.bf16.msra.mxu0 0
        %2437 = vmatprep.subr.bf16.mxu0 0
        %2438 = vmatpush1.bf16.msra.mxu0 0
        %2439 = vmatprep.subr.bf16.mxu0 0
        %2440 = vmatpush1.bf16.msra.mxu0 0
        %2441 = vmatprep.subr.bf16.mxu0 0
        %2442 = vmatpush1.bf16.msra.mxu0 0
        %2443 = vmatprep.subr.bf16.mxu0 0
        %2444 = vmatpush1.bf16.msra.mxu0 0
        %2445 = vmatprep.subr.bf16.mxu0 0
        %2446 = vmatpush1.bf16.msra.mxu0 0
        %2447 = vmatprep.subr.bf16.mxu0 0
        %2448 = vmatpush1.bf16.msra.mxu0 0
        %2449 = vmatprep.subr.bf16.mxu0 0
        %2450 = vmatpush1.bf16.msra.mxu0 0
        %2451 = vmatprep.mubr.bf16.mxu0 0
        %2452 = vmatmul.mubr.bf16.gmra.mrb[0].mxu0 %v2417
        %v2453 = vpop.f32.mrb[0].mxu0
        %v2454 = vadd.f32 0.0, %v2453
        %v2455 = vpop.f32.mrb[0].mxu0
        %v2456 = vadd.f32 0.0, %v2455
        %v2457 = vpop.f32.mrb[0].mxu0
        %v2458 = vpop.f32.mrb[0].mxu0
        %2459 = vdwg.mxu0
        %v2460 = vadd.f32 %v2389, %v2454
        %v2461 = vadd.f32 %v2390, %v2456
        %s2462 = scalar_lea.vmem %s5, 288
        %v2463 = vld [vmem:[%s2462] sm:$0xff]
        %v2464 = vld [vmem:[%s2462 + $0x8] sm:$0xff]
        %v2465 = vld [vmem:[%s2462 + $0x10] sm:$0xff]
        %v2466 = vld [vmem:[%s2462 + $0x18] sm:$0xff]
        %v2468 = vrot.slane %v1816, 4
        %v2473 = vunpack.c.l.b16 %v2463
        %v2474 = vunpack.c.h.b16 %v2463
        %v2475 = vunpack.c.l.b16 %v2464
        %v2476 = vunpack.c.h.b16 %v2464
        %v2477 = vunpack.c.l.b16 %v2465
        %v2478 = vunpack.c.h.b16 %v2465
        %v2479 = vunpack.c.l.b16 %v2466
        %v2480 = vunpack.c.h.b16 %v2466
        %v2481 = vpack.c.b16 %v2475, %v2473
        %v2482 = vpack.c.b16 %v2476, %v2474
        %v2483 = vpack.c.b16 %v2479, %v2477
        %v2484 = vpack.c.b16 %v2480, %v2478
        %v2490 = vsel %vm1850, %v2468, 0
        %2492 = vmatprep.subr.bf16.mxu0 %v2482
        %2493 = vmatpush1.bf16.msra.mxu0 %v2481
        %2494 = vmatprep.subr.bf16.mxu0 %v2484
        %2495 = vmatpush1.bf16.msra.mxu0 %v2483
        %2496 = vmatprep.subr.bf16.mxu0 0
        %2497 = vmatpush1.bf16.msra.mxu0 0
        %2498 = vmatprep.subr.bf16.mxu0 0
        %2499 = vmatpush1.bf16.msra.mxu0 0
        %2500 = vmatprep.subr.bf16.mxu0 0
        %2501 = vmatpush1.bf16.msra.mxu0 0
        %2502 = vmatprep.subr.bf16.mxu0 0
        %2503 = vmatpush1.bf16.msra.mxu0 0
        %2504 = vmatprep.subr.bf16.mxu0 0
        %2505 = vmatpush1.bf16.msra.mxu0 0
        %2506 = vmatprep.subr.bf16.mxu0 0
        %2507 = vmatpush1.bf16.msra.mxu0 0
        %2508 = vmatprep.subr.bf16.mxu0 0
        %2509 = vmatpush1.bf16.msra.mxu0 0
        %2510 = vmatprep.subr.bf16.mxu0 0
        %2511 = vmatpush1.bf16.msra.mxu0 0
        %2512 = vmatprep.subr.bf16.mxu0 0
        %2513 = vmatpush1.bf16.msra.mxu0 0
        %2514 = vmatprep.subr.bf16.mxu0 0
        %2515 = vmatpush1.bf16.msra.mxu0 0
        %2516 = vmatprep.subr.bf16.mxu0 0
        %2517 = vmatpush1.bf16.msra.mxu0 0
        %2518 = vmatprep.subr.bf16.mxu0 0
        %2519 = vmatpush1.bf16.msra.mxu0 0
        %2520 = vmatprep.subr.bf16.mxu0 0
        %2521 = vmatpush1.bf16.msra.mxu0 0
        %2522 = vmatprep.subr.bf16.mxu0 0
        %2523 = vmatpush1.bf16.msra.mxu0 0
        %2524 = vmatprep.mubr.bf16.mxu0 0
        %2525 = vmatmul.mubr.bf16.gmra.mrb[0].mxu0 %v2490
        %v2526 = vpop.f32.mrb[0].mxu0
        %v2527 = vadd.f32 0.0, %v2526
        %v2528 = vpop.f32.mrb[0].mxu0
        %v2529 = vadd.f32 0.0, %v2528
        %v2530 = vpop.f32.mrb[0].mxu0
        %v2531 = vpop.f32.mrb[0].mxu0
        %2532 = vdwg.mxu0
        %v2533 = vadd.f32 %v2460, %v2527
        %v2534 = vadd.f32 %v2461, %v2529
        %s2535 = scalar_lea.vmem %s5, 320
        %v2536 = vld [vmem:[%s2535] sm:$0xff]
        %v2537 = vld [vmem:[%s2535 + $0x8] sm:$0xff]
        %v2538 = vld [vmem:[%s2535 + $0x10] sm:$0xff]
        %v2539 = vld [vmem:[%s2535 + $0x18] sm:$0xff]
        %v2544 = vunpack.c.l.b16 %v2536
        %v2545 = vunpack.c.h.b16 %v2536
        %v2546 = vunpack.c.l.b16 %v2537
        %v2547 = vunpack.c.h.b16 %v2537
        %v2548 = vunpack.c.l.b16 %v2538
        %v2549 = vunpack.c.h.b16 %v2538
        %v2550 = vunpack.c.l.b16 %v2539
        %v2551 = vunpack.c.h.b16 %v2539
        %v2552 = vpack.c.b16 %v2546, %v2544
        %v2553 = vpack.c.b16 %v2547, %v2545
        %v2554 = vpack.c.b16 %v2550, %v2548
        %v2555 = vpack.c.b16 %v2551, %v2549
        %v2561 = vsel %vm1850, %v1817, 0
        %2563 = vmatprep.subr.bf16.mxu0 %v2553
        %2564 = vmatpush1.bf16.msra.mxu0 %v2552
        %2565 = vmatprep.subr.bf16.mxu0 %v2555
        %2566 = vmatpush1.bf16.msra.mxu0 %v2554
        %2567 = vmatprep.subr.bf16.mxu0 0
        %2568 = vmatpush1.bf16.msra.mxu0 0
        %2569 = vmatprep.subr.bf16.mxu0 0
        %2570 = vmatpush1.bf16.msra.mxu0 0
        %2571 = vmatprep.subr.bf16.mxu0 0
        %2572 = vmatpush1.bf16.msra.mxu0 0
        %2573 = vmatprep.subr.bf16.mxu0 0
        %2574 = vmatpush1.bf16.msra.mxu0 0
        %2575 = vmatprep.subr.bf16.mxu0 0
        %2576 = vmatpush1.bf16.msra.mxu0 0
        %2577 = vmatprep.subr.bf16.mxu0 0
        %2578 = vmatpush1.bf16.msra.mxu0 0
        %2579 = vmatprep.subr.bf16.mxu0 0
        %2580 = vmatpush1.bf16.msra.mxu0 0
        %2581 = vmatprep.subr.bf16.mxu0 0
        %2582 = vmatpush1.bf16.msra.mxu0 0
        %2583 = vmatprep.subr.bf16.mxu0 0
        %2584 = vmatpush1.bf16.msra.mxu0 0
        %2585 = vmatprep.subr.bf16.mxu0 0
        %2586 = vmatpush1.bf16.msra.mxu0 0
        %2587 = vmatprep.subr.bf16.mxu0 0
        %2588 = vmatpush1.bf16.msra.mxu0 0
        %2589 = vmatprep.subr.bf16.mxu0 0
        %2590 = vmatpush1.bf16.msra.mxu0 0
        %2591 = vmatprep.subr.bf16.mxu0 0
        %2592 = vmatpush1.bf16.msra.mxu0 0
        %2593 = vmatprep.subr.bf16.mxu0 0
        %2594 = vmatpush1.bf16.msra.mxu0 0
        %2595 = vmatprep.mubr.bf16.mxu0 0
        %2596 = vmatmul.mubr.bf16.gmra.mrb[0].mxu0 %v2561
        %v2597 = vpop.f32.mrb[0].mxu0
        %v2598 = vadd.f32 0.0, %v2597
        %v2599 = vpop.f32.mrb[0].mxu0
        %v2600 = vadd.f32 0.0, %v2599
        %v2601 = vpop.f32.mrb[0].mxu0
        %v2602 = vpop.f32.mrb[0].mxu0
        %2603 = vdwg.mxu0
        %v2604 = vadd.f32 %v2533, %v2598
        %v2605 = vadd.f32 %v2534, %v2600
        %s2606 = scalar_lea.vmem %s5, 352
        %v2607 = vld [vmem:[%s2606] sm:$0xff]
        %v2608 = vld [vmem:[%s2606 + $0x8] sm:$0xff]
        %v2609 = vld [vmem:[%s2606 + $0x10] sm:$0xff]
        %v2610 = vld [vmem:[%s2606 + $0x18] sm:$0xff]
        %v2612 = vrot.slane %v1817, 4
        %v2617 = vunpack.c.l.b16 %v2607
        %v2618 = vunpack.c.h.b16 %v2607
        %v2619 = vunpack.c.l.b16 %v2608
        %v2620 = vunpack.c.h.b16 %v2608
        %v2621 = vunpack.c.l.b16 %v2609
        %v2622 = vunpack.c.h.b16 %v2609
        %v2623 = vunpack.c.l.b16 %v2610
        %v2624 = vunpack.c.h.b16 %v2610
        %v2625 = vpack.c.b16 %v2619, %v2617
        %v2626 = vpack.c.b16 %v2620, %v2618
        %v2627 = vpack.c.b16 %v2623, %v2621
        %v2628 = vpack.c.b16 %v2624, %v2622
        %v2634 = vsel %vm1850, %v2612, 0
        %2636 = vmatprep.subr.bf16.mxu0 %v2626
        %2637 = vmatpush1.bf16.msra.mxu0 %v2625
        %2638 = vmatprep.subr.bf16.mxu0 %v2628
        %2639 = vmatpush1.bf16.msra.mxu0 %v2627
        %2640 = vmatprep.subr.bf16.mxu0 0
        %2641 = vmatpush1.bf16.msra.mxu0 0
        %2642 = vmatprep.subr.bf16.mxu0 0
        %2643 = vmatpush1.bf16.msra.mxu0 0
        %2644 = vmatprep.subr.bf16.mxu0 0
        %2645 = vmatpush1.bf16.msra.mxu0 0
        %2646 = vmatprep.subr.bf16.mxu0 0
        %2647 = vmatpush1.bf16.msra.mxu0 0
        %2648 = vmatprep.subr.bf16.mxu0 0
        %2649 = vmatpush1.bf16.msra.mxu0 0
        %2650 = vmatprep.subr.bf16.mxu0 0
        %2651 = vmatpush1.bf16.msra.mxu0 0
        %2652 = vmatprep.subr.bf16.mxu0 0
        %2653 = vmatpush1.bf16.msra.mxu0 0
        %2654 = vmatprep.subr.bf16.mxu0 0
        %2655 = vmatpush1.bf16.msra.mxu0 0
        %2656 = vmatprep.subr.bf16.mxu0 0
        %2657 = vmatpush1.bf16.msra.mxu0 0
        %2658 = vmatprep.subr.bf16.mxu0 0
        %2659 = vmatpush1.bf16.msra.mxu0 0
        %2660 = vmatprep.subr.bf16.mxu0 0
        %2661 = vmatpush1.bf16.msra.mxu0 0
        %2662 = vmatprep.subr.bf16.mxu0 0
        %2663 = vmatpush1.bf16.msra.mxu0 0
        %2664 = vmatprep.subr.bf16.mxu0 0
        %2665 = vmatpush1.bf16.msra.mxu0 0
        %2666 = vmatprep.subr.bf16.mxu0 0
        %2667 = vmatpush1.bf16.msra.mxu0 0
        %2668 = vmatprep.mubr.bf16.mxu0 0
        %2669 = vmatmul.mubr.bf16.gmra.mrb[0].mxu0 %v2634
        %v2670 = vpop.f32.mrb[0].mxu0
        %v2671 = vadd.f32 0.0, %v2670
        %v2672 = vpop.f32.mrb[0].mxu0
        %v2673 = vadd.f32 0.0, %v2672
        %v2674 = vpop.f32.mrb[0].mxu0
        %v2675 = vpop.f32.mrb[0].mxu0
        %2676 = vdwg.mxu0
        %v2677 = vadd.f32 %v2604, %v2671
        %v2678 = vadd.f32 %v2605, %v2673
        %s2679 = scalar_lea.vmem %s5, 384
        %v2680 = vld [vmem:[%s2679] sm:$0xff]
        %v2681 = vld [vmem:[%s2679 + $0x8] sm:$0xff]
        %v2682 = vld [vmem:[%s2679 + $0x10] sm:$0xff]
        %v2683 = vld [vmem:[%s2679 + $0x18] sm:$0xff]
        %v2688 = vunpack.c.l.b16 %v2680
        %v2689 = vunpack.c.h.b16 %v2680
        %v2690 = vunpack.c.l.b16 %v2681
        %v2691 = vunpack.c.h.b16 %v2681
        %v2692 = vunpack.c.l.b16 %v2682
        %v2693 = vunpack.c.h.b16 %v2682
        %v2694 = vunpack.c.l.b16 %v2683
        %v2695 = vunpack.c.h.b16 %v2683
        %v2696 = vpack.c.b16 %v2690, %v2688
        %v2697 = vpack.c.b16 %v2691, %v2689
        %v2698 = vpack.c.b16 %v2694, %v2692
        %v2699 = vpack.c.b16 %v2695, %v2693
        %v2705 = vsel %vm1850, %v1818, 0
        %2707 = vmatprep.subr.bf16.mxu0 %v2697
        %2708 = vmatpush1.bf16.msra.mxu0 %v2696
        %2709 = vmatprep.subr.bf16.mxu0 %v2699
        %2710 = vmatpush1.bf16.msra.mxu0 %v2698
        %2711 = vmatprep.subr.bf16.mxu0 0
        %2712 = vmatpush1.bf16.msra.mxu0 0
        %2713 = vmatprep.subr.bf16.mxu0 0
        %2714 = vmatpush1.bf16.msra.mxu0 0
        %2715 = vmatprep.subr.bf16.mxu0 0
        %2716 = vmatpush1.bf16.msra.mxu0 0
        %2717 = vmatprep.subr.bf16.mxu0 0
        %2718 = vmatpush1.bf16.msra.mxu0 0
        %2719 = vmatprep.subr.bf16.mxu0 0
        %2720 = vmatpush1.bf16.msra.mxu0 0
        %2721 = vmatprep.subr.bf16.mxu0 0
        %2722 = vmatpush1.bf16.msra.mxu0 0
        %2723 = vmatprep.subr.bf16.mxu0 0
        %2724 = vmatpush1.bf16.msra.mxu0 0
        %2725 = vmatprep.subr.bf16.mxu0 0
        %2726 = vmatpush1.bf16.msra.mxu0 0
        %2727 = vmatprep.subr.bf16.mxu0 0
        %2728 = vmatpush1.bf16.msra.mxu0 0
        %2729 = vmatprep.subr.bf16.mxu0 0
        %2730 = vmatpush1.bf16.msra.mxu0 0
        %2731 = vmatprep.subr.bf16.mxu0 0
        %2732 = vmatpush1.bf16.msra.mxu0 0
        %2733 = vmatprep.subr.bf16.mxu0 0
        %2734 = vmatpush1.bf16.msra.mxu0 0
        %2735 = vmatprep.subr.bf16.mxu0 0
        %2736 = vmatpush1.bf16.msra.mxu0 0
        %2737 = vmatprep.subr.bf16.mxu0 0
        %2738 = vmatpush1.bf16.msra.mxu0 0
        %2739 = vmatprep.mubr.bf16.mxu0 0
        %2740 = vmatmul.mubr.bf16.gmra.mrb[0].mxu0 %v2705
        %v2741 = vpop.f32.mrb[0].mxu0
        %v2742 = vadd.f32 0.0, %v2741
        %v2743 = vpop.f32.mrb[0].mxu0
        %v2744 = vadd.f32 0.0, %v2743
        %v2745 = vpop.f32.mrb[0].mxu0
        %v2746 = vpop.f32.mrb[0].mxu0
        %2747 = vdwg.mxu0
        %v2748 = vadd.f32 %v2677, %v2742
        %v2749 = vadd.f32 %v2678, %v2744
        %s2750 = scalar_lea.vmem %s5, 416
        %v2751 = vld [vmem:[%s2750] sm:$0xff]
        %v2752 = vld [vmem:[%s2750 + $0x8] sm:$0xff]
        %v2753 = vld [vmem:[%s2750 + $0x10] sm:$0xff]
        %v2754 = vld [vmem:[%s2750 + $0x18] sm:$0xff]
        %v2756 = vrot.slane %v1818, 4
        %v2761 = vunpack.c.l.b16 %v2751
        %v2762 = vunpack.c.h.b16 %v2751
        %v2763 = vunpack.c.l.b16 %v2752
        %v2764 = vunpack.c.h.b16 %v2752
        %v2765 = vunpack.c.l.b16 %v2753
        %v2766 = vunpack.c.h.b16 %v2753
        %v2767 = vunpack.c.l.b16 %v2754
        %v2768 = vunpack.c.h.b16 %v2754
        %v2769 = vpack.c.b16 %v2763, %v2761
        %v2770 = vpack.c.b16 %v2764, %v2762
        %v2771 = vpack.c.b16 %v2767, %v2765
        %v2772 = vpack.c.b16 %v2768, %v2766
        %v2778 = vsel %vm1850, %v2756, 0
        %2780 = vmatprep.subr.bf16.mxu0 %v2770
        %2781 = vmatpush1.bf16.msra.mxu0 %v2769
        %2782 = vmatprep.subr.bf16.mxu0 %v2772
        %2783 = vmatpush1.bf16.msra.mxu0 %v2771
        %2784 = vmatprep.subr.bf16.mxu0 0
        %2785 = vmatpush1.bf16.msra.mxu0 0
        %2786 = vmatprep.subr.bf16.mxu0 0
        %2787 = vmatpush1.bf16.msra.mxu0 0
        %2788 = vmatprep.subr.bf16.mxu0 0
        %2789 = vmatpush1.bf16.msra.mxu0 0
        %2790 = vmatprep.subr.bf16.mxu0 0
        %2791 = vmatpush1.bf16.msra.mxu0 0
        %2792 = vmatprep.subr.bf16.mxu0 0
        %2793 = vmatpush1.bf16.msra.mxu0 0
        %2794 = vmatprep.subr.bf16.mxu0 0
        %2795 = vmatpush1.bf16.msra.mxu0 0
        %2796 = vmatprep.subr.bf16.mxu0 0
        %2797 = vmatpush1.bf16.msra.mxu0 0
        %2798 = vmatprep.subr.bf16.mxu0 0
        %2799 = vmatpush1.bf16.msra.mxu0 0
        %2800 = vmatprep.subr.bf16.mxu0 0
        %2801 = vmatpush1.bf16.msra.mxu0 0
        %2802 = vmatprep.subr.bf16.mxu0 0
        %2803 = vmatpush1.bf16.msra.mxu0 0
        %2804 = vmatprep.subr.bf16.mxu0 0
        %2805 = vmatpush1.bf16.msra.mxu0 0
        %2806 = vmatprep.subr.bf16.mxu0 0
        %2807 = vmatpush1.bf16.msra.mxu0 0
        %2808 = vmatprep.subr.bf16.mxu0 0
        %2809 = vmatpush1.bf16.msra.mxu0 0
        %2810 = vmatprep.subr.bf16.mxu0 0
        %2811 = vmatpush1.bf16.msra.mxu0 0
        %2812 = vmatprep.mubr.bf16.mxu0 0
        %2813 = vmatmul.mubr.bf16.gmra.mrb[0].mxu0 %v2778
        %v2814 = vpop.f32.mrb[0].mxu0
        %v2815 = vadd.f32 0.0, %v2814
        %v2816 = vpop.f32.mrb[0].mxu0
        %v2817 = vadd.f32 0.0, %v2816
        %v2818 = vpop.f32.mrb[0].mxu0
        %v2819 = vpop.f32.mrb[0].mxu0
        %2820 = vdwg.mxu0
        %v2821 = vadd.f32 %v2748, %v2815
        %v2822 = vadd.f32 %v2749, %v2817
        %v2823 = vld [vmem:[%s6] sm:$0x3]
        %v2825 = vlaneseq
        %v2826 = vshrl.u32 %v2825, 7
        %v2827 = vsub.s32 0, %v2826
        %v2828 = vrot.slane %v2823, %v2827
        %v2829 = vlaneseq
        %v2830 = vshrl.u32 %v2829, 7
        %v2831 = vsub.s32 1, %v2830
        %v2832 = vrot.slane %v2823, %v2831
        %v2835 = vadd.f32 %v2821, %v2828
        %v2836 = vadd.f32 %v2822, %v2832
        %v2837 = vpack.c.bf16 %v2835, %v2835
        %v2838 = vpack.c.bf16 %v2836, %v2836
        %v2839 = vld [vmem:[%s7] sm:$0xf]
        %v2840 = vld [vmem:[%s7 + $0x4] sm:$0xf]
        %v2841 = vld [vmem:[%s7 + $0x8] sm:$0xf]
        %v2842 = vld [vmem:[%s7 + $0xc] sm:$0xf]
        %v2843 = vld [vmem:[%s7 + $0x10] sm:$0xf]
        %v2844 = vld [vmem:[%s7 + $0x14] sm:$0xf]
        %v2845 = vld [vmem:[%s7 + $0x18] sm:$0xf]
        %v2846 = vld [vmem:[%s7 + $0x1c] sm:$0xf]
        %v2847 = vld [vmem:[%s7 + $0x20] sm:$0xf]
        %v2848 = vld [vmem:[%s7 + $0x24] sm:$0xf]
        %v2849 = vld [vmem:[%s7 + $0x28] sm:$0xf]
        %v2850 = vld [vmem:[%s7 + $0x2c] sm:$0xf]
        %v2851 = vld [vmem:[%s7 + $0x30] sm:$0xf]
        %v2852 = vld [vmem:[%s7 + $0x34] sm:$0xf]
        %v2853 = vld [vmem:[%s7 + $0x38] sm:$0xf]
        %v2854 = vld [vmem:[%s7 + $0x3c] sm:$0xf]
        %v2855 = vld [vmem:[%s7 + $0x40] sm:$0xf]
        %v2856 = vld [vmem:[%s7 + $0x44] sm:$0xf]
        %v2857 = vld [vmem:[%s7 + $0x48] sm:$0xf]
        %v2858 = vld [vmem:[%s7 + $0x4c] sm:$0xf]
        %v2859 = vld [vmem:[%s7 + $0x50] sm:$0xf]
        %v2860 = vld [vmem:[%s7 + $0x54] sm:$0xf]
        %v2861 = vld [vmem:[%s7 + $0x58] sm:$0xf]
        %v2862 = vld [vmem:[%s7 + $0x5c] sm:$0xf]
        %v2863 = vld [vmem:[%s7 + $0x60] sm:$0xf]
        %v2864 = vld [vmem:[%s7 + $0x64] sm:$0xf]
        %v2865 = vld [vmem:[%s7 + $0x68] sm:$0xf]
        %v2866 = vld [vmem:[%s7 + $0x6c] sm:$0xf]
        %v2867 = vld [vmem:[%s7 + $0x70] sm:$0xf]
        %v2868 = vld [vmem:[%s7 + $0x74] sm:$0xf]
        %v2869 = vld [vmem:[%s7 + $0x78] sm:$0xf]
        %v2870 = vld [vmem:[%s7 + $0x7c] sm:$0xf]
        %v2871 = vld [vmem:[%s8] sm:$0x1]
        %v2873 = vlaneseq
        %v2874 = vshrl.u32 %v2873, 7
        %v2875 = vsub.s32 0, %v2874
        %v2876 = vrot.slane %v2871, %v2875
        %v2910 = vunpack.c.l.b16 %v2839
        %v2911 = vunpack.c.l.b16 %v2840
        %v2912 = vunpack.c.l.b16 %v2841
        %v2913 = vunpack.c.l.b16 %v2842
        %v2914 = vunpack.c.l.b16 %v2843
        %v2915 = vunpack.c.l.b16 %v2844
        %v2916 = vunpack.c.l.b16 %v2845
        %v2917 = vunpack.c.l.b16 %v2846
        %v2918 = vunpack.c.l.b16 %v2847
        %v2919 = vunpack.c.l.b16 %v2848
        %v2920 = vunpack.c.l.b16 %v2849
        %v2921 = vunpack.c.l.b16 %v2850
        %v2922 = vunpack.c.l.b16 %v2851
        %v2923 = vunpack.c.l.b16 %v2852
        %v2924 = vunpack.c.l.b16 %v2853
        %v2925 = vunpack.c.l.b16 %v2854
        %v2926 = vunpack.c.l.b16 %v2855
        %v2927 = vunpack.c.l.b16 %v2856
        %v2928 = vunpack.c.l.b16 %v2857
        %v2929 = vunpack.c.l.b16 %v2858
        %v2930 = vunpack.c.l.b16 %v2859
        %v2931 = vunpack.c.l.b16 %v2860
        %v2932 = vunpack.c.l.b16 %v2861
        %v2933 = vunpack.c.l.b16 %v2862
        %v2934 = vunpack.c.l.b16 %v2863
        %v2935 = vunpack.c.l.b16 %v2864
        %v2936 = vunpack.c.l.b16 %v2865
        %v2937 = vunpack.c.l.b16 %v2866
        %v2938 = vunpack.c.l.b16 %v2867
        %v2939 = vunpack.c.l.b16 %v2868
        %v2940 = vunpack.c.l.b16 %v2869
        %v2941 = vunpack.c.l.b16 %v2870
        %v2942 = vpack.c.b16 %v2911, %v2910
        %v2943 = vpack.c.b16 %v2913, %v2912
        %v2944 = vpack.c.b16 %v2915, %v2914
        %v2945 = vpack.c.b16 %v2917, %v2916
        %v2946 = vpack.c.b16 %v2919, %v2918
        %v2947 = vpack.c.b16 %v2921, %v2920
        %v2948 = vpack.c.b16 %v2923, %v2922
        %v2949 = vpack.c.b16 %v2925, %v2924
        %v2950 = vpack.c.b16 %v2927, %v2926
        %v2951 = vpack.c.b16 %v2929, %v2928
        %v2952 = vpack.c.b16 %v2931, %v2930
        %v2953 = vpack.c.b16 %v2933, %v2932
        %v2954 = vpack.c.b16 %v2935, %v2934
        %v2955 = vpack.c.b16 %v2937, %v2936
        %v2956 = vpack.c.b16 %v2939, %v2938
        %v2957 = vpack.c.b16 %v2941, %v2940
        %2974 = vmatprep.subr.bf16.mxu0 0
        %2975 = vmatpush1.bf16.msra.mxu0 %v2942
        %2976 = vmatprep.subr.bf16.mxu0 0
        %2977 = vmatpush1.bf16.msra.mxu0 %v2943
        %2978 = vmatprep.subr.bf16.mxu0 0
        %2979 = vmatpush1.bf16.msra.mxu0 %v2944
        %2980 = vmatprep.subr.bf16.mxu0 0
        %2981 = vmatpush1.bf16.msra.mxu0 %v2945
        %2982 = vmatprep.subr.bf16.mxu0 0
        %2983 = vmatpush1.bf16.msra.mxu0 %v2946
        %2984 = vmatprep.subr.bf16.mxu0 0
        %2985 = vmatpush1.bf16.msra.mxu0 %v2947
        %2986 = vmatprep.subr.bf16.mxu0 0
        %2987 = vmatpush1.bf16.msra.mxu0 %v2948
        %2988 = vmatprep.subr.bf16.mxu0 0
        %2989 = vmatpush1.bf16.msra.mxu0 %v2949
        %2990 = vmatprep.subr.bf16.mxu0 0
        %2991 = vmatpush1.bf16.msra.mxu0 %v2950
        %2992 = vmatprep.subr.bf16.mxu0 0
        %2993 = vmatpush1.bf16.msra.mxu0 %v2951
        %2994 = vmatprep.subr.bf16.mxu0 0
        %2995 = vmatpush1.bf16.msra.mxu0 %v2952
        %2996 = vmatprep.subr.bf16.mxu0 0
        %2997 = vmatpush1.bf16.msra.mxu0 %v2953
        %2998 = vmatprep.subr.bf16.mxu0 0
        %2999 = vmatpush1.bf16.msra.mxu0 %v2954
        %3000 = vmatprep.subr.bf16.mxu0 0
        %3001 = vmatpush1.bf16.msra.mxu0 %v2955
        %3002 = vmatprep.subr.bf16.mxu0 0
        %3003 = vmatpush1.bf16.msra.mxu0 %v2956
        %3004 = vmatprep.subr.bf16.mxu0 0
        %3005 = vmatpush1.bf16.msra.mxu0 %v2957
        %3006 = vmatprep.mubr.bf16.mxu0 %v2838
        %3007 = vmatmul.mubr.bf16.gmra.mrb[0].mxu0 %v2837
        %v3008 = vpop.f32.mrb[0].mxu0
        %v3009 = vadd.f32 %v2876, %v3008
        %v3010 = vpop.f32.mrb[0].mxu0
        %v3011 = vpop.f32.mrb[0].mxu0
        %v3012 = vpop.f32.mrb[0].mxu0
        %3013 = vdwg.mxu0
        %3014 = vmax.xlane.f32.xlu0 %v3009
        %v3015 = vpop.xlane.xlu0 %3014
        %v3016 = vsub.f32 %v3009, %v3015
        %v3017 = vmul.f32 %v3016, 1.442695
        %v3018 = vpow.pop %v3017
        %3019 = vadd.xlane.f32.xlu0 %v3018
        %v3020 = vpop.xlane.xlu0 %3019
        %v3021 = vrcp.pop %v3020
        %v3022 = vmul.f32 %v3018, %v3021
        %3023 = vst [vmem:[%s325] sm:$0xff] %v3022
        %s3024 = sand.u32 %s225, 1
        %s3025 = scalar_lea.sflag [#allocation3], %s3024
        %s3026 = sand.u32 %s225, 1
        %s3027 = smul.addr %s3026, 8
        %s3028 = scalar_lea.vmem [#allocation2], %s3027
        // Predicated region
        $region57: #{zhaopin_forward.1} parent=55 // pred_check
          %p3029 = pneg %p235
        $region58: #{zhaopin_forward.1} parent=55 // pred_check_branch
          %3031 = sbr.rel (%p3029) target = $region60
        $region59: #{zhaopin_forward.1} parent=55 // pred_region
          %s3033 = ssub.s32 128, 128
          %3034 = vsyncadd %s3025, %s3033
          %s3035 = smul.addr %s23, 128
          %s3036 = scalar_lea.hbm %s9, %s3035
          %s3038 = sshll.u32 %s3028, 4
          %s3039 = int_to_ptr.vmem [resolvable:$true] %s3038
          %3041 = dma.vmem_to_hbm [thread:$0]  %s3039, 128, %s3036, %s3025
        $region60: #{zhaopin_forward.1} parent=55 // pred_fallthru
          _
      $region56: #{zhaopin_forward.1} parent=5 // pred_fallthru
        _
      %p3042 = scmp.le.s32.totalorder 2, %s18
      // Predicated region
      $region61: #{zhaopin_forward.1} parent=5 // pred_check
        %p3043 = pneg %p3042
      $region62: #{zhaopin_forward.1} parent=5 // pred_check_branch
        %3045 = sbr.rel (%p3043) target = $region64
      $region63: #{zhaopin_forward.1} parent=5 // pred_region
        %s3046 = ssub.s32 %s18, 2
        // Predicated region
        $region65: #{zhaopin_forward.1} parent=63 // pred_check
          %p3047 = pneg %p241
        $region66: #{zhaopin_forward.1} parent=63 // pred_check_branch
          %3049 = sbr.rel (%p3047) target = $region68
        $region67: #{zhaopin_forward.1} parent=63 // pred_region
          %s3050 = sand.u32 %s226, 1
          %s3051 = scalar_lea.sflag [#allocation3], %s3050
          %s3052 = sand.u32 %s226, 1
          %s3053 = smul.addr %s3052, 8
          %s3054 = scalar_lea.vmem [#allocation2], %s3053
          %3055 = dma.done %s3051, 128
        $region68: #{zhaopin_forward.1} parent=63 // pred_fallthru
          _
      $region64: #{zhaopin_forward.1} parent=5 // pred_fallthru
        _
    $region6: #{zhaopin_forward.1} parent=1 // loop_footer
      %s22 = sadd.s32 1, %s18
    $region7: #{zhaopin_forward.1} parent=1 // loop_footer_branch
      %17 = sbr.rel target = $region3
    $region8: #{zhaopin_forward.1} parent=1 // loop_exit
      _
    %3056 = vsyncpa [#allocation3], 1
    %s3057 = scalar_lea.sflag [#allocation3], 1
    %3058 = vsyncpa %s3057, 1

</llo_original>
